<compile_context>
chip_gen: v7x
topology: tpu7x:2x2x1
jax: 0.10.0
libtpu: 0.0.40
codegen_flags: <defaults>
</compile_context>

<pallas_src>
import math

import jax
import jax.numpy as jnp
from jax.experimental import pallas as pl
from jax.experimental.pallas import tpu as pltpu


# ----------------------------------------------------------------------------
# Tiling / budget helpers
# ----------------------------------------------------------------------------
def _row_tiling(n, cap=512):
    """(padded_rows, block_rows): prefer a block dividing n exactly; cap tile rows at `cap`."""
    if n <= cap:
        n_pad = ((n + 7) // 8) * 8
        return n_pad, n_pad
    for bn in range(cap, 7, -8):            # largest multiple-of-8 divisor of n <= cap
        if n % bn == 0:
            return n, bn
    bn = cap
    return ((n + bn - 1) // bn) * bn, bn


def _time_chunk(T, B, E, H, budget_bytes=4 << 20):
    """Largest divisor of T whose per-chunk working set stays well inside VMEM (v7x: 64 MiB phys)."""
    best = 1
    for tc in range(1, T + 1):
        if T % tc:
            continue
        per = tc * B * (2 * E * 2          # two bf16 x chunks (fwd + bwd)
                        + 2 * 4 * H * 4    # two f32 gates_x scratch chunks
                        + 2 * H * 2)       # two bf16 output chunks
        if 2 * per <= budget_bytes:        # BlockSpec double-buffers the x/out chunks
            best = tc
    return best


def _vmem_limit(bytes_needed):
    return int(min(max(4 * bytes_needed, 16 << 20), 64 << 20))


# ----------------------------------------------------------------------------
# Kernel 1: fused bidirectional LSTM (input projection + recurrence), time-chunked.
# Gate order follows PyTorch: [i, f, g, o] along the 4H axis.
# Grid axis k walks fwd chunks ascending; the bwd direction reads/writes chunk (K-1-k).
# ----------------------------------------------------------------------------
def _bilstm_kernel(xf_ref, xb_ref, wf_ref, wb_ref, bf_ref, bb_ref, whh_ref,
                   outf_ref, outb_ref,
                   gxf_scr, gxb_scr, h_scr, cf_scr, cb_scr):
    tc, B, E = xf_ref.shape
    H = outf_ref.shape[2]
    G = 4 * H

    @pl.when(pl.program_id(0) == 0)
    def _():
        h_scr[...] = jnp.zeros_like(h_scr)
        cf_scr[...] = jnp.zeros_like(cf_scr)
        cb_scr[...] = jnp.zeros_like(cb_scr)

    # Input projection for the current fwd / bwd chunks: the parallel (non-recurrent) part of the
    # LSTM, one lane-dense MXU matmul per direction, gates_x stays in VMEM (never hits HBM).
    xf = xf_ref[...].reshape(tc * B, E)
    xb = xb_ref[...].reshape(tc * B, E)
    gxf_scr[...] = (jnp.dot(xf, wf_ref[...], preferred_element_type=jnp.float32)
                    + bf_ref[...]).reshape(tc, B, G)
    gxb_scr[...] = (jnp.dot(xb, wb_ref[...], preferred_element_type=jnp.float32)
                    + bb_ref[...]).reshape(tc, B, G)

    whh = whh_ref[...]                                       # (2H, 8H) block-diagonal, hoisted
    lane = jax.lax.broadcasted_iota(jnp.int32, (1, G), 1)
    g_mask = (lane >= 2 * H) & (lane < 3 * H)                # tanh ("g") gate lanes

    def gate_math(gates, c_old):
        # one full-width sigmoid + one tanh + a lane select, instead of 4 sub-128-lane activations
        act = jnp.where(g_mask, jnp.tanh(gates), jax.nn.sigmoid(gates))
        i_g = act[:, 0 * H:1 * H]
        f_g = act[:, 1 * H:2 * H]
        g_g = act[:, 2 * H:3 * H]
        o_g = act[:, 3 * H:4 * H]
        c_new = f_g * c_old + i_g * g_g
        h_new = o_g * jnp.tanh(c_new)
        return h_new, c_new

    def step(s, carry):
        sb = tc - 1 - s                                      # bwd walks its chunk reversed
        # Both directions' recurrent gates in a single MXU matmul via the block-diagonal Whh.
        g_hh = jnp.dot(h_scr[...].astype(jnp.bfloat16), whh,
                       preferred_element_type=jnp.float32)   # (B, 8H) f32
        h_f, c_f = gate_math(gxf_scr[s] + g_hh[:, :G], cf_scr[...])
        h_b, c_b = gate_math(gxb_scr[sb] + g_hh[:, G:], cb_scr[...])
        cf_scr[...] = c_f
        cb_scr[...] = c_b
        h_scr[...] = jnp.concatenate([h_f, h_b], axis=-1)    # (B, 2H)
        outf_ref[s] = h_f.astype(outf_ref.dtype)
        outb_ref[sb] = h_b.astype(outb_ref.dtype)
        return carry

    jax.lax.fori_loop(0, tc, step, 0, unroll=min(tc, 8))


def bidir_lstm(emb, wih_f, wih_b, bias_f, bias_b, whh_bd, H, *, tc):
    """emb: (T,B,E) bf16 -> (hf, hb) each (T,B,H) bf16."""
    T, B, E = emb.shape
    nkc = T // tc
    G = 4 * H

    blk_bytes = (2 * tc * B * E * 2 + 2 * E * G * 2 + 2 * G * 4
                 + 2 * H * 8 * H * 2 + 2 * tc * B * H * 2)
    scr_bytes = 2 * tc * B * G * 4 + B * 2 * H * 4 + 2 * B * H * 4
    out_sh = jax.ShapeDtypeStruct((T, B, H), jnp.bfloat16)

    return pl.pallas_call(
        _bilstm_kernel,
        out_shape=(out_sh, out_sh),
        grid=(nkc,),
        in_specs=[
            pl.BlockSpec((tc, B, E), lambda k: (k, 0, 0)),              # fwd x chunk
            pl.BlockSpec((tc, B, E), lambda k: (nkc - 1 - k, 0, 0)),    # bwd x chunk
            pl.BlockSpec((E, G), lambda k: (0, 0)),                     # Wih fwd
            pl.BlockSpec((E, G), lambda k: (0, 0)),                     # Wih bwd
            pl.BlockSpec((1, G), lambda k: (0, 0)),                     # bias fwd (b_ih + b_hh)
            pl.BlockSpec((1, G), lambda k: (0, 0)),                     # bias bwd
            pl.BlockSpec((2 * H, 8 * H), lambda k: (0, 0)),             # block-diag Whh
        ],
        out_specs=(
            pl.BlockSpec((tc, B, H), lambda k: (k, 0, 0)),
            pl.BlockSpec((tc, B, H), lambda k: (nkc - 1 - k, 0, 0)),
        ),
        scratch_shapes=[
            pltpu.VMEM((tc, B, G), jnp.float32),   # gates_x fwd chunk
            pltpu.VMEM((tc, B, G), jnp.float32),   # gates_x bwd chunk
            pltpu.VMEM((B, 2 * H), jnp.float32),   # h_cat (fwd | bwd)
            pltpu.VMEM((B, H), jnp.float32),       # c fwd
            pltpu.VMEM((B, H), jnp.float32),       # c bwd
        ],
        compiler_params=pltpu.CompilerParams(
            dimension_semantics=("arbitrary",),    # h/c carry across time chunks
            vmem_limit_bytes=_vmem_limit(2 * blk_bytes + scr_bytes)),
    )(emb, emb, wih_f, wih_b, bias_f, bias_b, whh_bd)


# ----------------------------------------------------------------------------
# Kernel 2: linear (split fwd/bwd weights -> no concat) + softmax, row-tiled,
# lane-dense padded output slab (padded logit lanes get probability 0).
# ----------------------------------------------------------------------------
def _linsoftmax_kernel(hf_ref, hb_ref, wt_ref, wb_ref, b_ref, out_ref):
    logits = (jnp.dot(hf_ref[...], wt_ref[...], preferred_element_type=jnp.float32)
              + jnp.dot(hb_ref[...], wb_ref[...], preferred_element_type=jnp.float32)
              + b_ref[...])
    m = jnp.max(logits, axis=-1, keepdims=True)
    e = jnp.exp(logits - m)
    s = jnp.sum(e, axis=-1, keepdims=True)
    out_ref[...] = e * pl.reciprocal(s, approx=True)


def linear_softmax(hf2, hb2, w_top_p, w_bot_p, b_p, *, bn):
    """hf2/hb2: (Np, H) bf16; w_*_p: (H, OP) bf16; b_p: (1, OP) f32 -> (Np, OP) f32."""
    n_pad, H = hf2.shape
    OP = w_top_p.shape[1]
    nb = n_pad // bn
    blk_bytes = 2 * bn * H * 2 + 2 * H * OP * 2 + OP * 4 + bn * OP * 4
    return pl.pallas_call(
        _linsoftmax_kernel,
        out_shape=jax.ShapeDtypeStruct((n_pad, OP), jnp.float32),
        grid=(nb,),
        in_specs=[
            pl.BlockSpec((bn, H), lambda i: (i, 0)),
            pl.BlockSpec((bn, H), lambda i: (i, 0)),
            pl.BlockSpec((H, OP), lambda i: (0, 0)),
            pl.BlockSpec((H, OP), lambda i: (0, 0)),
            pl.BlockSpec((1, OP), lambda i: (0, 0)),
        ],
        out_specs=pl.BlockSpec((bn, OP), lambda i: (i, 0)),
        compiler_params=pltpu.CompilerParams(
            dimension_semantics=("parallel",),
            vmem_limit_bytes=_vmem_limit(2 * blk_bytes)),
    )(hf2, hb2, w_top_p, w_bot_p, b_p)


# ----------------------------------------------------------------------------
# Full model forward (y=None inference path of LSTMModel.forward).
# ----------------------------------------------------------------------------
@jax.jit
def lstm_model_forward(x_ids, params):
    emb_table = params["embedding"]                    # (V, E) f32
    wih = params["wih"]                                # (2, E, 4H) bf16
    whh = params["whh"]                                # (2, H, 4H) bf16
    b_gates = params["b_gates"]                        # (2, 1, 4H) f32  (b_ih + b_hh)
    w_top = params["lin_w_top"]                        # (H, O) bf16
    w_bot = params["lin_w_bot"]                        # (H, O) bf16
    lin_b = params["lin_b"]                            # (1, O) f32

    B, T = x_ids.shape
    E = emb_table.shape[1]
    H = whh.shape[1]
    O = w_top.shape[1]
    N = T * B

    # Embedding lookup, produced directly time-major (gather left to XLA).
    emb = jnp.take(emb_table, x_ids.T, axis=0).astype(jnp.bfloat16)    # (T, B, E)

    # Block-diagonal recurrent weight: both directions' h@Whh in a single MXU matmul per step.
    whh_bd = jnp.zeros((2 * H, 8 * H), jnp.bfloat16)
    whh_bd = whh_bd.at[:H, :4 * H].set(whh[0]).at[H:, 4 * H:].set(whh[1])

    # 1) fused bidirectional LSTM (input projection + recurrence), time-chunked
    tc = _time_chunk(T, B, E, H)
    hf, hb = bidir_lstm(emb, wih[0], wih[1], b_gates[0], b_gates[1], whh_bd, H, tc=tc)

    # 2) linear + softmax with a lane-dense (>=128-wide) output slab
    OP = ((O + 127) // 128) * 128
    w_top_p = jnp.zeros((H, OP), jnp.bfloat16).at[:, :O].set(w_top)
    w_bot_p = jnp.zeros((H, OP), jnp.bfloat16).at[:, :O].set(w_bot)
    b_p = jnp.full((1, OP), -1e30, jnp.float32).at[:, :O].set(lin_b)   # padded lanes -> prob 0

    hf2 = hf.reshape(N, H)
    hb2 = hb.reshape(N, H)
    n_pad, bn = _row_tiling(N)
    if n_pad != N:
        hf2 = jnp.pad(hf2, ((0, n_pad - N), (0, 0)))
        hb2 = jnp.pad(hb2, ((0, n_pad - N), (0, 0)))

    probs = linear_softmax(hf2, hb2, w_top_p, w_bot_p, b_p, bn=bn)     # (n_pad, OP)
    probs = probs[:N, :O].reshape(T, B, O)
    return jnp.transpose(probs, (1, 0, 2))                             # (B, T, O), batch_first


# ----------------------------------------------------------------------------
# Pure-JAX reference (same bf16/f32 mixed precision) for a sanity check.
# NOTE: weights/matmul operands are bf16 (vs. PyTorch fp32 nn.LSTM); the tolerance below
# validates self-consistency of that precision contract, not bit-exactness with PyTorch.
# ----------------------------------------------------------------------------
def reference_forward(x_ids, params):
    emb = jnp.take(params["embedding"], x_ids.T, axis=0).astype(jnp.bfloat16)  # (T,B,E)
    T, B, E = emb.shape
    H = params["whh"].shape[1]

    def run_dir(d, reverse):
        wih = params["wih"][d]
        whh = params["whh"][d]
        bias = params["b_gates"][d]                      # (1, 4H)
        gx = jnp.dot(emb.reshape(T * B, E), wih,
                     preferred_element_type=jnp.float32).reshape(T, B, 4 * H) + bias
        xs = gx[::-1] if reverse else gx

        def step(carry, g_x):
            h, c = carry
            g = g_x + jnp.dot(h.astype(jnp.bfloat16), whh,
                              preferred_element_type=jnp.float32)
            i = jax.nn.sigmoid(g[:, :H])
            f = jax.nn.sigmoid(g[:, H:2 * H])
            gg = jnp.tanh(g[:, 2 * H:3 * H])
            o = jax.nn.sigmoid(g[:, 3 * H:])
            c = f * c + i * gg
            h = o * jnp.tanh(c)
            return (h, c), h

        zeros = jnp.zeros((B, H), jnp.float32)
        _, hs = jax.lax.scan(step, (zeros, zeros), xs)
        return hs[::-1] if reverse else hs               # (T, B, H)

    hf = run_dir(0, False)
    hb = run_dir(1, True)
    logits = (jnp.dot(hf.reshape(T * B, H).astype(jnp.bfloat16), params["lin_w_top"],
                      preferred_element_type=jnp.float32)
              + jnp.dot(hb.reshape(T * B, H).astype(jnp.bfloat16), params["lin_w_bot"],
                        preferred_element_type=jnp.float32)
              + params["lin_b"])
    probs = jax.nn.softmax(logits, axis=-1)
    return jnp.transpose(probs.reshape(T, B, -1), (1, 0, 2))


# ----------------------------------------------------------------------------
# Deterministic parameter init (mirrors nn.Embedding / nn.LSTM / nn.Linear shapes).
# ----------------------------------------------------------------------------
def init_params(key, num_embeddings, output_size, embedding_dim, hidden_size):
    E, H, O = embedding_dim, hidden_size, output_size
    ks = jax.random.split(key, 8)
    kH = 1.0 / math.sqrt(H)
    kL = 1.0 / math.sqrt(2 * H)

    def uni(kk, shape, bound):
        return jax.random.uniform(kk, shape, jnp.float32, -bound, bound)

    return {
        "embedding": jax.random.normal(ks[0], (num_embeddings, E), jnp.float32),
        # LSTM weights stored transposed & stacked over direction: [fwd, bwd]
        "wih": uni(ks[1], (2, E, 4 * H), kH).astype(jnp.bfloat16),
        "whh": uni(ks[2], (2, H, 4 * H), kH).astype(jnp.bfloat16),
        "b_gates": uni(ks[3], (2, 1, 4 * H), kH) + uni(ks[4], (2, 1, 4 * H), kH),  # b_ih + b_hh
        # Linear (O, 2H) stored transposed and pre-split into fwd / bwd halves.
        "lin_w_top": uni(ks[5], (H, O), kL).astype(jnp.bfloat16),
        "lin_w_bot": uni(ks[6], (H, O), kL).astype(jnp.bfloat16),
        "lin_b": uni(ks[7], (1, O), kL),
    }
    # TODO(synk): cross-entropy loss branch (y is not None) not implemented; inference path only.


if __name__ == "__main__":
    NUM_EMBEDDINGS = 50     # vocab size
    OUTPUT_SIZE = 8         # number of NER tags
    EMBEDDING_DIM = 32
    HIDDEN_SIZE = 32
    B, T = 2, 8

    key = jax.random.PRNGKey(0)
    k_param, k_x = jax.random.split(key)
    params = init_params(k_param, NUM_EMBEDDINGS, OUTPUT_SIZE, EMBEDDING_DIM, HIDDEN_SIZE)
    x_ids = jax.random.randint(k_x, (B, T), 0, NUM_EMBEDDINGS, dtype=jnp.int32)

    out = jax.block_until_ready(lstm_model_forward(x_ids, params))

    assert out.shape == (B, T, OUTPUT_SIZE)
    assert bool(jnp.all(jnp.isfinite(out)))
    # softmax rows sum to ~1 (approx reciprocal is used in-kernel)
    assert jnp.allclose(jnp.sum(out, axis=-1), 1.0, atol=5e-3)
    # match a pure-JAX reference with the same mixed precision
    ref = jax.block_until_ready(reference_forward(x_ids, params))
    assert jnp.allclose(out, ref, atol=2e-2), float(jnp.max(jnp.abs(out - ref)))

    print("KERNEL_OK")
</pallas_src>

<mosaic_0001>
module attributes {stable_mosaic.version = 11 : i64} {
  func.func @_linsoftmax_kernel(%arg0: i32, %arg1: memref<16x32xbf16, #tpu.memory_space<vmem>>, %arg2: memref<16x32xbf16, #tpu.memory_space<vmem>>, %arg3: memref<32x128xbf16, #tpu.memory_space<vmem>>, %arg4: memref<32x128xbf16, #tpu.memory_space<vmem>>, %arg5: memref<1x128xf32, #tpu.memory_space<vmem>>, %arg6: memref<16x128xf32, #tpu.memory_space<vmem>>) attributes {dimension_semantics = [#tpu.dimension_semantics<parallel>], iteration_bounds = array<i64: 1>, scalar_prefetch = 0 : i64, scratch_operands = 0 : i64, tpu.core_type = #tpu.core_type<tc>, window_params = [{transform_indices = @transform_0, window_bounds = array<i64: 16, 32>}, {transform_indices = @transform_1, window_bounds = array<i64: 16, 32>}, {pipeline_mode = #tpu.pipeline_mode<synchronous>, transform_indices = @transform_2, window_bounds = array<i64: 32, 128>}, {pipeline_mode = #tpu.pipeline_mode<synchronous>, transform_indices = @transform_3, window_bounds = array<i64: 32, 128>}, {pipeline_mode = #tpu.pipeline_mode<synchronous>, transform_indices = @transform_4, window_bounds = array<i64: 1, 128>}, {transform_indices = @transform_5, window_bounds = array<i64: 16, 128>}]} {
    %c0 = arith.constant 0 : index
    %c0_0 = arith.constant 0 : index
    %0 = vector.load %arg1[%c0, %c0_0] : memref<16x32xbf16, #tpu.memory_space<vmem>>, vector<16x32xbf16>
    %c0_1 = arith.constant 0 : index
    %c0_2 = arith.constant 0 : index
    %1 = vector.load %arg3[%c0_1, %c0_2] : memref<32x128xbf16, #tpu.memory_space<vmem>>, vector<32x128xbf16>
    %cst = arith.constant dense<0.000000e+00> : vector<16x128xf32>
    %2 = tpu.matmul %0, %1, %cst {dimension_numbers = #tpu.dot_dimension_numbers<[1], [0], [0], [1], [0, 0, 1, 1], [], []>} : vector<16x32xbf16>, vector<32x128xbf16>, vector<16x128xf32> -> vector<16x128xf32>
    %c0_3 = arith.constant 0 : index
    %c0_4 = arith.constant 0 : index
    %3 = vector.load %arg2[%c0_3, %c0_4] : memref<16x32xbf16, #tpu.memory_space<vmem>>, vector<16x32xbf16>
    %c0_5 = arith.constant 0 : index
    %c0_6 = arith.constant 0 : index
    %4 = vector.load %arg4[%c0_5, %c0_6] : memref<32x128xbf16, #tpu.memory_space<vmem>>, vector<32x128xbf16>
    %cst_7 = arith.constant dense<0.000000e+00> : vector<16x128xf32>
    %5 = tpu.matmul %3, %4, %cst_7 {dimension_numbers = #tpu.dot_dimension_numbers<[1], [0], [0], [1], [0, 0, 1, 1], [], []>} : vector<16x32xbf16>, vector<32x128xbf16>, vector<16x128xf32> -> vector<16x128xf32>
    %6 = arith.addf %2, %5 : vector<16x128xf32>
    %c0_8 = arith.constant 0 : index
    %c0_9 = arith.constant 0 : index
    %7 = vector.load %arg5[%c0_8, %c0_9] : memref<1x128xf32, #tpu.memory_space<vmem>>, vector<1x128xf32>
    %8 = vector.broadcast %7 : vector<1x128xf32> to vector<16x128xf32>
    %9 = arith.addf %6, %8 : vector<16x128xf32>
    %cst_10 = arith.constant dense<0xFF800000> : vector<16xf32>
    %10 = vector.multi_reduction <maximumf>, %9, %cst_10 [1] : vector<16x128xf32> to vector<16xf32>
    %11 = vector.shape_cast %10 : vector<16xf32> to vector<16x1xf32>
    %12 = vector.broadcast %11 : vector<16x1xf32> to vector<16x128xf32>
    %13 = arith.subf %9, %12 : vector<16x128xf32>
    %14 = math.exp %13 : vector<16x128xf32>
    %cst_11 = arith.constant dense<0.000000e+00> : vector<16xf32>
    %15 = vector.multi_reduction <add>, %14, %cst_11 [1] : vector<16x128xf32> to vector<16xf32>
    %16 = vector.shape_cast %15 : vector<16xf32> to vector<16x1xf32>
    %17 = tpu.reciprocal %16 {approx = true} : vector<16x1xf32> -> vector<16x1xf32>
    %18 = vector.broadcast %17 : vector<16x1xf32> to vector<16x128xf32>
    %19 = arith.mulf %14, %18 : vector<16x128xf32>
    %c0_12 = arith.constant 0 : index
    %c0_13 = arith.constant 0 : index
    %20 = vector.load %arg6[%c0_12, %c0_13] : memref<16x128xf32, #tpu.memory_space<vmem>>, vector<16x128xf32>
    tpu.vector_store %arg6[%c0_12, %c0_13], %19 {strides = array<i32>} : memref<16x128xf32, #tpu.memory_space<vmem>>, vector<16x128xf32>,
    return
  }
  func.func @transform_0(%arg0: i32) -> (i32, i32) {
    %c0_i32 = arith.constant 0 : i32
    %c0_i32_0 = arith.constant 0 : i32
    return %arg0, %c0_i32 : i32, i32
  }
  func.func @transform_1(%arg0: i32) -> (i32, i32) {
    %c0_i32 = arith.constant 0 : i32
    %c0_i32_0 = arith.constant 0 : i32
    return %arg0, %c0_i32 : i32, i32
  }
  func.func @transform_2(%arg0: i32) -> (i32, i32) {
    %c0_i32 = arith.constant 0 : i32
    %c0_i32_0 = arith.constant 0 : i32
    %c0_i32_1 = arith.constant 0 : i32
    return %c0_i32, %c0_i32_0 : i32, i32
  }
  func.func @transform_3(%arg0: i32) -> (i32, i32) {
    %c0_i32 = arith.constant 0 : i32
    %c0_i32_0 = arith.constant 0 : i32
    %c0_i32_1 = arith.constant 0 : i32
    return %c0_i32, %c0_i32_0 : i32, i32
  }
  func.func @transform_4(%arg0: i32) -> (i32, i32) {
    %c0_i32 = arith.constant 0 : i32
    %c0_i32_0 = arith.constant 0 : i32
    %c0_i32_1 = arith.constant 0 : i32
    return %c0_i32, %c0_i32_0 : i32, i32
  }
  func.func @transform_5(%arg0: i32) -> (i32, i32) {
    %c0_i32 = arith.constant 0 : i32
    %c0_i32_0 = arith.constant 0 : i32
    return %arg0, %c0_i32 : i32, i32
  }
}

module attributes {stable_mosaic.version = 11 : i64} {
  func.func @_bilstm_kernel(%arg0: i32, %arg1: memref<8x2x32xbf16, #tpu.memory_space<vmem>>, %arg2: memref<8x2x32xbf16, #tpu.memory_space<vmem>>, %arg3: memref<32x128xbf16, #tpu.memory_space<vmem>>, %arg4: memref<32x128xbf16, #tpu.memory_space<vmem>>, %arg5: memref<1x128xf32, #tpu.memory_space<vmem>>, %arg6: memref<1x128xf32, #tpu.memory_space<vmem>>, %arg7: memref<64x256xbf16, #tpu.memory_space<vmem>>, %arg8: memref<8x2x32xbf16, #tpu.memory_space<vmem>>, %arg9: memref<8x2x32xbf16, #tpu.memory_space<vmem>>, %arg10: memref<8x2x128xf32, #tpu.memory_space<vmem>>, %arg11: memref<8x2x128xf32, #tpu.memory_space<vmem>>, %arg12: memref<2x64xf32, #tpu.memory_space<vmem>>, %arg13: memref<2x32xf32, #tpu.memory_space<vmem>>, %arg14: memref<2x32xf32, #tpu.memory_space<vmem>>) attributes {dimension_semantics = [#tpu.dimension_semantics<arbitrary>], iteration_bounds = array<i64: 1>, scalar_prefetch = 0 : i64, scratch_operands = 5 : i64, tpu.core_type = #tpu.core_type<tc>, window_params = [{transform_indices = @transform_0, window_bounds = array<i64: 8, 2, 32>}, {transform_indices = @transform_1, window_bounds = array<i64: 8, 2, 32>}, {pipeline_mode = #tpu.pipeline_mode<synchronous>, transform_indices = @transform_2, window_bounds = array<i64: 32, 128>}, {pipeline_mode = #tpu.pipeline_mode<synchronous>, transform_indices = @transform_3, window_bounds = array<i64: 32, 128>}, {pipeline_mode = #tpu.pipeline_mode<synchronous>, transform_indices = @transform_4, window_bounds = array<i64: 1, 128>}, {pipeline_mode = #tpu.pipeline_mode<synchronous>, transform_indices = @transform_5, window_bounds = array<i64: 1, 128>}, {pipeline_mode = #tpu.pipeline_mode<synchronous>, transform_indices = @transform_6, window_bounds = array<i64: 64, 256>}, {transform_indices = @transform_7, window_bounds = array<i64: 8, 2, 32>}, {transform_indices = @transform_8, window_bounds = array<i64: 8, 2, 32>}]} {
    %c0_i32 = arith.constant 0 : i32
    %0 = arith.cmpi eq, %arg0, %c0_i32 : i32
    %1 = arith.extui %0 : i1 to i32
    %c0_i32_0 = arith.constant 0 : i32
    %2 = arith.cmpi ne, %1, %c0_i32_0 : i32
    scf.if %2 {
      %cst_216 = arith.constant 0.000000e+00 : f32
      %556 = vector.broadcast %cst_216 : f32 to vector<2x64xf32>
      %c0_217 = arith.constant 0 : index
      %c0_218 = arith.constant 0 : index
      %557 = vector.load %arg12[%c0_217, %c0_218] : memref<2x64xf32, #tpu.memory_space<vmem>>, vector<2x64xf32>
      tpu.vector_store %arg12[%c0_217, %c0_218], %556 {strides = array<i32>} : memref<2x64xf32, #tpu.memory_space<vmem>>, vector<2x64xf32>,
      %cst_219 = arith.constant 0.000000e+00 : f32
      %558 = vector.broadcast %cst_219 : f32 to vector<2x32xf32>
      %c0_220 = arith.constant 0 : index
      %c0_221 = arith.constant 0 : index
      %559 = vector.load %arg13[%c0_220, %c0_221] : memref<2x32xf32, #tpu.memory_space<vmem>>, vector<2x32xf32>
      tpu.vector_store %arg13[%c0_220, %c0_221], %558 {strides = array<i32>} : memref<2x32xf32, #tpu.memory_space<vmem>>, vector<2x32xf32>,
      %cst_222 = arith.constant 0.000000e+00 : f32
      %560 = vector.broadcast %cst_222 : f32 to vector<2x32xf32>
      %c0_223 = arith.constant 0 : index
      %c0_224 = arith.constant 0 : index
      %561 = vector.load %arg14[%c0_223, %c0_224] : memref<2x32xf32, #tpu.memory_space<vmem>>, vector<2x32xf32>
      tpu.vector_store %arg14[%c0_223, %c0_224], %560 {strides = array<i32>} : memref<2x32xf32, #tpu.memory_space<vmem>>, vector<2x32xf32>,
    } else {
    }
    %c0 = arith.constant 0 : index
    %c0_1 = arith.constant 0 : index
    %c0_2 = arith.constant 0 : index
    %3 = vector.load %arg1[%c0, %c0_1, %c0_2] : memref<8x2x32xbf16, #tpu.memory_space<vmem>>, vector<8x2x32xbf16>
    %4 = vector.shape_cast %3 : vector<8x2x32xbf16> to vector<16x32xbf16>
    %c0_3 = arith.constant 0 : index
    %c0_4 = arith.constant 0 : index
    %c0_5 = arith.constant 0 : index
    %5 = vector.load %arg2[%c0_3, %c0_4, %c0_5] : memref<8x2x32xbf16, #tpu.memory_space<vmem>>, vector<8x2x32xbf16>
    %6 = vector.shape_cast %5 : vector<8x2x32xbf16> to vector<16x32xbf16>
    %c0_6 = arith.constant 0 : index
    %c0_7 = arith.constant 0 : index
    %7 = vector.load %arg3[%c0_6, %c0_7] : memref<32x128xbf16, #tpu.memory_space<vmem>>, vector<32x128xbf16>
    %cst = arith.constant dense<0.000000e+00> : vector<16x128xf32>
    %8 = tpu.matmul %4, %7, %cst {dimension_numbers = #tpu.dot_dimension_numbers<[1], [0], [0], [1], [0, 0, 1, 1], [], []>} : vector<16x32xbf16>, vector<32x128xbf16>, vector<16x128xf32> -> vector<16x128xf32>
    %c0_8 = arith.constant 0 : index
    %c0_9 = arith.constant 0 : index
    %9 = vector.load %arg5[%c0_8, %c0_9] : memref<1x128xf32, #tpu.memory_space<vmem>>, vector<1x128xf32>
    %10 = vector.broadcast %9 : vector<1x128xf32> to vector<16x128xf32>
    %11 = arith.addf %8, %10 : vector<16x128xf32>
    %12 = vector.shape_cast %11 : vector<16x128xf32> to vector<8x2x128xf32>
    %c0_10 = arith.constant 0 : index
    %c0_11 = arith.constant 0 : index
    %c0_12 = arith.constant 0 : index
    %13 = vector.load %arg10[%c0_10, %c0_11, %c0_12] : memref<8x2x128xf32, #tpu.memory_space<vmem>>, vector<8x2x128xf32>
    tpu.vector_store %arg10[%c0_10, %c0_11, %c0_12], %12 {strides = array<i32>} : memref<8x2x128xf32, #tpu.memory_space<vmem>>, vector<8x2x128xf32>,
    %c0_13 = arith.constant 0 : index
    %c0_14 = arith.constant 0 : index
    %14 = vector.load %arg4[%c0_13, %c0_14] : memref<32x128xbf16, #tpu.memory_space<vmem>>, vector<32x128xbf16>
    %cst_15 = arith.constant dense<0.000000e+00> : vector<16x128xf32>
    %15 = tpu.matmul %6, %14, %cst_15 {dimension_numbers = #tpu.dot_dimension_numbers<[1], [0], [0], [1], [0, 0, 1, 1], [], []>} : vector<16x32xbf16>, vector<32x128xbf16>, vector<16x128xf32> -> vector<16x128xf32>
    %c0_16 = arith.constant 0 : index
    %c0_17 = arith.constant 0 : index
    %16 = vector.load %arg6[%c0_16, %c0_17] : memref<1x128xf32, #tpu.memory_space<vmem>>, vector<1x128xf32>
    %17 = vector.broadcast %16 : vector<1x128xf32> to vector<16x128xf32>
    %18 = arith.addf %15, %17 : vector<16x128xf32>
    %19 = vector.shape_cast %18 : vector<16x128xf32> to vector<8x2x128xf32>
    %c0_18 = arith.constant 0 : index
    %c0_19 = arith.constant 0 : index
    %c0_20 = arith.constant 0 : index
    %20 = vector.load %arg11[%c0_18, %c0_19, %c0_20] : memref<8x2x128xf32, #tpu.memory_space<vmem>>, vector<8x2x128xf32>
    tpu.vector_store %arg11[%c0_18, %c0_19, %c0_20], %19 {strides = array<i32>} : memref<8x2x128xf32, #tpu.memory_space<vmem>>, vector<8x2x128xf32>,
    %c0_21 = arith.constant 0 : index
    %c0_22 = arith.constant 0 : index
    %21 = vector.load %arg7[%c0_21, %c0_22] : memref<64x256xbf16, #tpu.memory_space<vmem>>, vector<64x256xbf16>
    %22 = tpu.iota {dimensions = array<i32: 1>} : vector<1x128xi32>
    %c64_i32 = arith.constant 64 : i32
    %23 = vector.broadcast %c64_i32 : i32 to vector<1x128xi32>
    %24 = arith.cmpi sge, %22, %23 : vector<1x128xi32>
    %c96_i32 = arith.constant 96 : i32
    %25 = vector.broadcast %c96_i32 : i32 to vector<1x128xi32>
    %26 = arith.cmpi slt, %22, %25 : vector<1x128xi32>
    %27 = arith.andi %24, %26 : vector<1x128xi1>
    %c0_i32_23 = arith.constant 0 : i32
    %c7_i32 = arith.constant 7 : i32
    %28 = arith.subi %c7_i32, %c0_i32_23 : i32
    %c0_24 = arith.constant 0 : index
    %c0_25 = arith.constant 0 : index
    %29 = vector.load %arg12[%c0_24, %c0_25] : memref<2x64xf32, #tpu.memory_space<vmem>>, vector<2x64xf32>
    %30 = arith.truncf %29 : vector<2x64xf32> to vector<2x64xbf16>
    %cst_26 = arith.constant dense<0.000000e+00> : vector<2x256xf32>
    %31 = tpu.matmul %30, %21, %cst_26 {dimension_numbers = #tpu.dot_dimension_numbers<[1], [0], [0], [1], [0, 0, 1, 1], [], []>} : vector<2x64xbf16>, vector<64x256xbf16>, vector<2x256xf32> -> vector<2x256xf32>
    %32 = arith.index_cast %c0_i32_23 : i32 to index
    %c0_27 = arith.constant 0 : index
    %c0_28 = arith.constant 0 : index
    %33 = vector.load %arg10[%32, %c0_27, %c0_28] : memref<8x2x128xf32, #tpu.memory_space<vmem>>, vector<1x2x128xf32>
    %34 = vector.shape_cast %33 : vector<1x2x128xf32> to vector<2x128xf32>
    %35 = vector.extract_strided_slice %31 {offsets = [0, 0], sizes = [2, 128], strides = [1, 1]} : vector<2x256xf32> to vector<2x128xf32>
    %36 = arith.addf %34, %35 : vector<2x128xf32>
    %c0_29 = arith.constant 0 : index
    %c0_30 = arith.constant 0 : index
    %37 = vector.load %arg13[%c0_29, %c0_30] : memref<2x32xf32, #tpu.memory_space<vmem>>, vector<2x32xf32>
    %38 = math.tanh %36 : vector<2x128xf32>
    %39 = arith.negf %36 : vector<2x128xf32>
    %40 = math.exp %39 : vector<2x128xf32>
    %cst_31 = arith.constant 1.000000e+00 : f32
    %41 = vector.broadcast %cst_31 : f32 to vector<2x128xf32>
    %42 = arith.addf %41, %40 : vector<2x128xf32>
    %43 = arith.divf %41, %42 : vector<2x128xf32>
    %44 = vector.shape_cast %27 : vector<1x128xi1> to vector<1x128xi1>
    %45 = vector.broadcast %44 : vector<1x128xi1> to vector<2x128xi1>
    %46 = arith.select %45, %38, %43 : vector<2x128xi1>, vector<2x128xf32>
    %47 = vector.extract_strided_slice %46 {offsets = [0, 0], sizes = [2, 32], strides = [1, 1]} : vector<2x128xf32> to vector<2x32xf32>
    %48 = vector.extract_strided_slice %46 {offsets = [0, 32], sizes = [2, 32], strides = [1, 1]} : vector<2x128xf32> to vector<2x32xf32>
    %49 = vector.extract_strided_slice %46 {offsets = [0, 64], sizes = [2, 32], strides = [1, 1]} : vector<2x128xf32> to vector<2x32xf32>
    %50 = vector.extract_strided_slice %46 {offsets = [0, 96], sizes = [2, 32], strides = [1, 1]} : vector<2x128xf32> to vector<2x32xf32>
    %51 = arith.mulf %48, %37 : vector<2x32xf32>
    %52 = arith.mulf %47, %49 : vector<2x32xf32>
    %53 = arith.addf %51, %52 : vector<2x32xf32>
    %54 = math.tanh %53 : vector<2x32xf32>
    %55 = arith.mulf %50, %54 : vector<2x32xf32>
    %56 = arith.index_cast %28 : i32 to index
    %c0_32 = arith.constant 0 : index
    %c0_33 = arith.constant 0 : index
    %57 = vector.load %arg11[%56, %c0_32, %c0_33] : memref<8x2x128xf32, #tpu.memory_space<vmem>>, vector<1x2x128xf32>
    %58 = vector.shape_cast %57 : vector<1x2x128xf32> to vector<2x128xf32>
    %59 = vector.extract_strided_slice %31 {offsets = [0, 128], sizes = [2, 128], strides = [1, 1]} : vector<2x256xf32> to vector<2x128xf32>
    %60 = arith.addf %58, %59 : vector<2x128xf32>
    %c0_34 = arith.constant 0 : index
    %c0_35 = arith.constant 0 : index
    %61 = vector.load %arg14[%c0_34, %c0_35] : memref<2x32xf32, #tpu.memory_space<vmem>>, vector<2x32xf32>
    %62 = math.tanh %60 : vector<2x128xf32>
    %63 = arith.negf %60 : vector<2x128xf32>
    %64 = math.exp %63 : vector<2x128xf32>
    %cst_36 = arith.constant 1.000000e+00 : f32
    %65 = vector.broadcast %cst_36 : f32 to vector<2x128xf32>
    %66 = arith.addf %65, %64 : vector<2x128xf32>
    %67 = arith.divf %65, %66 : vector<2x128xf32>
    %68 = vector.shape_cast %27 : vector<1x128xi1> to vector<1x128xi1>
    %69 = vector.broadcast %68 : vector<1x128xi1> to vector<2x128xi1>
    %70 = arith.select %69, %62, %67 : vector<2x128xi1>, vector<2x128xf32>
    %71 = vector.extract_strided_slice %70 {offsets = [0, 0], sizes = [2, 32], strides = [1, 1]} : vector<2x128xf32> to vector<2x32xf32>
    %72 = vector.extract_strided_slice %70 {offsets = [0, 32], sizes = [2, 32], strides = [1, 1]} : vector<2x128xf32> to vector<2x32xf32>
    %73 = vector.extract_strided_slice %70 {offsets = [0, 64], sizes = [2, 32], strides = [1, 1]} : vector<2x128xf32> to vector<2x32xf32>
    %74 = vector.extract_strided_slice %70 {offsets = [0, 96], sizes = [2, 32], strides = [1, 1]} : vector<2x128xf32> to vector<2x32xf32>
    %75 = arith.mulf %72, %61 : vector<2x32xf32>
    %76 = arith.mulf %71, %73 : vector<2x32xf32>
    %77 = arith.addf %75, %76 : vector<2x32xf32>
    %78 = math.tanh %77 : vector<2x32xf32>
    %79 = arith.mulf %74, %78 : vector<2x32xf32>
    %c0_37 = arith.constant 0 : index
    %c0_38 = arith.constant 0 : index
    %80 = vector.load %arg13[%c0_37, %c0_38] : memref<2x32xf32, #tpu.memory_space<vmem>>, vector<2x32xf32>
    tpu.vector_store %arg13[%c0_37, %c0_38], %53 {strides = array<i32>} : memref<2x32xf32, #tpu.memory_space<vmem>>, vector<2x32xf32>,
    %c0_39 = arith.constant 0 : index
    %c0_40 = arith.constant 0 : index
    %81 = vector.load %arg14[%c0_39, %c0_40] : memref<2x32xf32, #tpu.memory_space<vmem>>, vector<2x32xf32>
    tpu.vector_store %arg14[%c0_39, %c0_40], %77 {strides = array<i32>} : memref<2x32xf32, #tpu.memory_space<vmem>>, vector<2x32xf32>,
    %82 = tpu.concatenate %55, %79 in 1 : vector<2x32xf32>, vector<2x32xf32> -> vector<2x64xf32>
    %c0_41 = arith.constant 0 : index
    %c0_42 = arith.constant 0 : index
    %83 = vector.load %arg12[%c0_41, %c0_42] : memref<2x64xf32, #tpu.memory_space<vmem>>, vector<2x64xf32>
    tpu.vector_store %arg12[%c0_41, %c0_42], %82 {strides = array<i32>} : memref<2x64xf32, #tpu.memory_space<vmem>>, vector<2x64xf32>,
    %84 = arith.truncf %55 : vector<2x32xf32> to vector<2x32xbf16>
    %85 = arith.index_cast %c0_i32_23 : i32 to index
    %c0_43 = arith.constant 0 : index
    %c0_44 = arith.constant 0 : index
    %86 = vector.load %arg8[%85, %c0_43, %c0_44] : memref<8x2x32xbf16, #tpu.memory_space<vmem>>, vector<1x2x32xbf16>
    %87 = vector.shape_cast %86 : vector<1x2x32xbf16> to vector<2x32xbf16>
    %88 = vector.shape_cast %84 : vector<2x32xbf16> to vector<1x2x32xbf16>
    tpu.vector_store %arg8[%85, %c0_43, %c0_44], %88 {strides = array<i32>} : memref<8x2x32xbf16, #tpu.memory_space<vmem>>, vector<1x2x32xbf16>,
    %89 = arith.truncf %79 : vector<2x32xf32> to vector<2x32xbf16>
    %90 = arith.index_cast %28 : i32 to index
    %c0_45 = arith.constant 0 : index
    %c0_46 = arith.constant 0 : index
    %91 = vector.load %arg9[%90, %c0_45, %c0_46] : memref<8x2x32xbf16, #tpu.memory_space<vmem>>, vector<1x2x32xbf16>
    %92 = vector.shape_cast %91 : vector<1x2x32xbf16> to vector<2x32xbf16>
    %93 = vector.shape_cast %89 : vector<2x32xbf16> to vector<1x2x32xbf16>
    tpu.vector_store %arg9[%90, %c0_45, %c0_46], %93 {strides = array<i32>} : memref<8x2x32xbf16, #tpu.memory_space<vmem>>, vector<1x2x32xbf16>,
    %c1_i32 = arith.constant 1 : i32
    %c7_i32_47 = arith.constant 7 : i32
    %94 = arith.subi %c7_i32_47, %c1_i32 : i32
    %c0_48 = arith.constant 0 : index
    %c0_49 = arith.constant 0 : index
    %95 = vector.load %arg12[%c0_48, %c0_49] : memref<2x64xf32, #tpu.memory_space<vmem>>, vector<2x64xf32>
    %96 = arith.truncf %95 : vector<2x64xf32> to vector<2x64xbf16>
    %cst_50 = arith.constant dense<0.000000e+00> : vector<2x256xf32>
    %97 = tpu.matmul %96, %21, %cst_50 {dimension_numbers = #tpu.dot_dimension_numbers<[1], [0], [0], [1], [0, 0, 1, 1], [], []>} : vector<2x64xbf16>, vector<64x256xbf16>, vector<2x256xf32> -> vector<2x256xf32>
    %98 = arith.index_cast %c1_i32 : i32 to index
    %c0_51 = arith.constant 0 : index
    %c0_52 = arith.constant 0 : index
    %99 = vector.load %arg10[%98, %c0_51, %c0_52] : memref<8x2x128xf32, #tpu.memory_space<vmem>>, vector<1x2x128xf32>
    %100 = vector.shape_cast %99 : vector<1x2x128xf32> to vector<2x128xf32>
    %101 = vector.extract_strided_slice %97 {offsets = [0, 0], sizes = [2, 128], strides = [1, 1]} : vector<2x256xf32> to vector<2x128xf32>
    %102 = arith.addf %100, %101 : vector<2x128xf32>
    %c0_53 = arith.constant 0 : index
    %c0_54 = arith.constant 0 : index
    %103 = vector.load %arg13[%c0_53, %c0_54] : memref<2x32xf32, #tpu.memory_space<vmem>>, vector<2x32xf32>
    %104 = math.tanh %102 : vector<2x128xf32>
    %105 = arith.negf %102 : vector<2x128xf32>
    %106 = math.exp %105 : vector<2x128xf32>
    %cst_55 = arith.constant 1.000000e+00 : f32
    %107 = vector.broadcast %cst_55 : f32 to vector<2x128xf32>
    %108 = arith.addf %107, %106 : vector<2x128xf32>
    %109 = arith.divf %107, %108 : vector<2x128xf32>
    %110 = vector.shape_cast %27 : vector<1x128xi1> to vector<1x128xi1>
    %111 = vector.broadcast %110 : vector<1x128xi1> to vector<2x128xi1>
    %112 = arith.select %111, %104, %109 : vector<2x128xi1>, vector<2x128xf32>
    %113 = vector.extract_strided_slice %112 {offsets = [0, 0], sizes = [2, 32], strides = [1, 1]} : vector<2x128xf32> to vector<2x32xf32>
    %114 = vector.extract_strided_slice %112 {offsets = [0, 32], sizes = [2, 32], strides = [1, 1]} : vector<2x128xf32> to vector<2x32xf32>
    %115 = vector.extract_strided_slice %112 {offsets = [0, 64], sizes = [2, 32], strides = [1, 1]} : vector<2x128xf32> to vector<2x32xf32>
    %116 = vector.extract_strided_slice %112 {offsets = [0, 96], sizes = [2, 32], strides = [1, 1]} : vector<2x128xf32> to vector<2x32xf32>
    %117 = arith.mulf %114, %103 : vector<2x32xf32>
    %118 = arith.mulf %113, %115 : vector<2x32xf32>
    %119 = arith.addf %117, %118 : vector<2x32xf32>
    %120 = math.tanh %119 : vector<2x32xf32>
    %121 = arith.mulf %116, %120 : vector<2x32xf32>
    %122 = arith.index_cast %94 : i32 to index
    %c0_56 = arith.constant 0 : index
    %c0_57 = arith.constant 0 : index
    %123 = vector.load %arg11[%122, %c0_56, %c0_57] : memref<8x2x128xf32, #tpu.memory_space<vmem>>, vector<1x2x128xf32>
    %124 = vector.shape_cast %123 : vector<1x2x128xf32> to vector<2x128xf32>
    %125 = vector.extract_strided_slice %97 {offsets = [0, 128], sizes = [2, 128], strides = [1, 1]} : vector<2x256xf32> to vector<2x128xf32>
    %126 = arith.addf %124, %125 : vector<2x128xf32>
    %c0_58 = arith.constant 0 : index
    %c0_59 = arith.constant 0 : index
    %127 = vector.load %arg14[%c0_58, %c0_59] : memref<2x32xf32, #tpu.memory_space<vmem>>, vector<2x32xf32>
    %128 = math.tanh %126 : vector<2x128xf32>
    %129 = arith.negf %126 : vector<2x128xf32>
    %130 = math.exp %129 : vector<2x128xf32>
    %cst_60 = arith.constant 1.000000e+00 : f32
    %131 = vector.broadcast %cst_60 : f32 to vector<2x128xf32>
    %132 = arith.addf %131, %130 : vector<2x128xf32>
    %133 = arith.divf %131, %132 : vector<2x128xf32>
    %134 = vector.shape_cast %27 : vector<1x128xi1> to vector<1x128xi1>
    %135 = vector.broadcast %134 : vector<1x128xi1> to vector<2x128xi1>
    %136 = arith.select %135, %128, %133 : vector<2x128xi1>, vector<2x128xf32>
    %137 = vector.extract_strided_slice %136 {offsets = [0, 0], sizes = [2, 32], strides = [1, 1]} : vector<2x128xf32> to vector<2x32xf32>
    %138 = vector.extract_strided_slice %136 {offsets = [0, 32], sizes = [2, 32], strides = [1, 1]} : vector<2x128xf32> to vector<2x32xf32>
    %139 = vector.extract_strided_slice %136 {offsets = [0, 64], sizes = [2, 32], strides = [1, 1]} : vector<2x128xf32> to vector<2x32xf32>
    %140 = vector.extract_strided_slice %136 {offsets = [0, 96], sizes = [2, 32], strides = [1, 1]} : vector<2x128xf32> to vector<2x32xf32>
    %141 = arith.mulf %138, %127 : vector<2x32xf32>
    %142 = arith.mulf %137, %139 : vector<2x32xf32>
    %143 = arith.addf %141, %142 : vector<2x32xf32>
    %144 = math.tanh %143 : vector<2x32xf32>
    %145 = arith.mulf %140, %144 : vector<2x32xf32>
    %c0_61 = arith.constant 0 : index
    %c0_62 = arith.constant 0 : index
    %146 = vector.load %arg13[%c0_61, %c0_62] : memref<2x32xf32, #tpu.memory_space<vmem>>, vector<2x32xf32>
    tpu.vector_store %arg13[%c0_61, %c0_62], %119 {strides = array<i32>} : memref<2x32xf32, #tpu.memory_space<vmem>>, vector<2x32xf32>,
    %c0_63 = arith.constant 0 : index
    %c0_64 = arith.constant 0 : index
    %147 = vector.load %arg14[%c0_63, %c0_64] : memref<2x32xf32, #tpu.memory_space<vmem>>, vector<2x32xf32>
    tpu.vector_store %arg14[%c0_63, %c0_64], %143 {strides = array<i32>} : memref<2x32xf32, #tpu.memory_space<vmem>>, vector<2x32xf32>,
    %148 = tpu.concatenate %121, %145 in 1 : vector<2x32xf32>, vector<2x32xf32> -> vector<2x64xf32>
    %c0_65 = arith.constant 0 : index
    %c0_66 = arith.constant 0 : index
    %149 = vector.load %arg12[%c0_65, %c0_66] : memref<2x64xf32, #tpu.memory_space<vmem>>, vector<2x64xf32>
    tpu.vector_store %arg12[%c0_65, %c0_66], %148 {strides = array<i32>} : memref<2x64xf32, #tpu.memory_space<vmem>>, vector<2x64xf32>,
    %150 = arith.truncf %121 : vector<2x32xf32> to vector<2x32xbf16>
    %151 = arith.index_cast %c1_i32 : i32 to index
    %c0_67 = arith.constant 0 : index
    %c0_68 = arith.constant 0 : index
    %152 = vector.load %arg8[%151, %c0_67, %c0_68] : memref<8x2x32xbf16, #tpu.memory_space<vmem>>, vector<1x2x32xbf16>
    %153 = vector.shape_cast %152 : vector<1x2x32xbf16> to vector<2x32xbf16>
    %154 = vector.shape_cast %150 : vector<2x32xbf16> to vector<1x2x32xbf16>
    tpu.vector_store %arg8[%151, %c0_67, %c0_68], %154 {strides = array<i32>} : memref<8x2x32xbf16, #tpu.memory_space<vmem>>, vector<1x2x32xbf16>,
    %155 = arith.truncf %145 : vector<2x32xf32> to vector<2x32xbf16>
    %156 = arith.index_cast %94 : i32 to index
    %c0_69 = arith.constant 0 : index
    %c0_70 = arith.constant 0 : index
    %157 = vector.load %arg9[%156, %c0_69, %c0_70] : memref<8x2x32xbf16, #tpu.memory_space<vmem>>, vector<1x2x32xbf16>
    %158 = vector.shape_cast %157 : vector<1x2x32xbf16> to vector<2x32xbf16>
    %159 = vector.shape_cast %155 : vector<2x32xbf16> to vector<1x2x32xbf16>
    tpu.vector_store %arg9[%156, %c0_69, %c0_70], %159 {strides = array<i32>} : memref<8x2x32xbf16, #tpu.memory_space<vmem>>, vector<1x2x32xbf16>,
    %c2_i32 = arith.constant 2 : i32
    %c7_i32_71 = arith.constant 7 : i32
    %160 = arith.subi %c7_i32_71, %c2_i32 : i32
    %c0_72 = arith.constant 0 : index
    %c0_73 = arith.constant 0 : index
    %161 = vector.load %arg12[%c0_72, %c0_73] : memref<2x64xf32, #tpu.memory_space<vmem>>, vector<2x64xf32>
    %162 = arith.truncf %161 : vector<2x64xf32> to vector<2x64xbf16>
    %cst_74 = arith.constant dense<0.000000e+00> : vector<2x256xf32>
    %163 = tpu.matmul %162, %21, %cst_74 {dimension_numbers = #tpu.dot_dimension_numbers<[1], [0], [0], [1], [0, 0, 1, 1], [], []>} : vector<2x64xbf16>, vector<64x256xbf16>, vector<2x256xf32> -> vector<2x256xf32>
    %164 = arith.index_cast %c2_i32 : i32 to index
    %c0_75 = arith.constant 0 : index
    %c0_76 = arith.constant 0 : index
    %165 = vector.load %arg10[%164, %c0_75, %c0_76] : memref<8x2x128xf32, #tpu.memory_space<vmem>>, vector<1x2x128xf32>
    %166 = vector.shape_cast %165 : vector<1x2x128xf32> to vector<2x128xf32>
    %167 = vector.extract_strided_slice %163 {offsets = [0, 0], sizes = [2, 128], strides = [1, 1]} : vector<2x256xf32> to vector<2x128xf32>
    %168 = arith.addf %166, %167 : vector<2x128xf32>
    %c0_77 = arith.constant 0 : index
    %c0_78 = arith.constant 0 : index
    %169 = vector.load %arg13[%c0_77, %c0_78] : memref<2x32xf32, #tpu.memory_space<vmem>>, vector<2x32xf32>
    %170 = math.tanh %168 : vector<2x128xf32>
    %171 = arith.negf %168 : vector<2x128xf32>
    %172 = math.exp %171 : vector<2x128xf32>
    %cst_79 = arith.constant 1.000000e+00 : f32
    %173 = vector.broadcast %cst_79 : f32 to vector<2x128xf32>
    %174 = arith.addf %173, %172 : vector<2x128xf32>
    %175 = arith.divf %173, %174 : vector<2x128xf32>
    %176 = vector.shape_cast %27 : vector<1x128xi1> to vector<1x128xi1>
    %177 = vector.broadcast %176 : vector<1x128xi1> to vector<2x128xi1>
    %178 = arith.select %177, %170, %175 : vector<2x128xi1>, vector<2x128xf32>
    %179 = vector.extract_strided_slice %178 {offsets = [0, 0], sizes = [2, 32], strides = [1, 1]} : vector<2x128xf32> to vector<2x32xf32>
    %180 = vector.extract_strided_slice %178 {offsets = [0, 32], sizes = [2, 32], strides = [1, 1]} : vector<2x128xf32> to vector<2x32xf32>
    %181 = vector.extract_strided_slice %178 {offsets = [0, 64], sizes = [2, 32], strides = [1, 1]} : vector<2x128xf32> to vector<2x32xf32>
    %182 = vector.extract_strided_slice %178 {offsets = [0, 96], sizes = [2, 32], strides = [1, 1]} : vector<2x128xf32> to vector<2x32xf32>
    %183 = arith.mulf %180, %169 : vector<2x32xf32>
    %184 = arith.mulf %179, %181 : vector<2x32xf32>
    %185 = arith.addf %183, %184 : vector<2x32xf32>
    %186 = math.tanh %185 : vector<2x32xf32>
    %187 = arith.mulf %182, %186 : vector<2x32xf32>
    %188 = arith.index_cast %160 : i32 to index
    %c0_80 = arith.constant 0 : index
    %c0_81 = arith.constant 0 : index
    %189 = vector.load %arg11[%188, %c0_80, %c0_81] : memref<8x2x128xf32, #tpu.memory_space<vmem>>, vector<1x2x128xf32>
    %190 = vector.shape_cast %189 : vector<1x2x128xf32> to vector<2x128xf32>
    %191 = vector.extract_strided_slice %163 {offsets = [0, 128], sizes = [2, 128], strides = [1, 1]} : vector<2x256xf32> to vector<2x128xf32>
    %192 = arith.addf %190, %191 : vector<2x128xf32>
    %c0_82 = arith.constant 0 : index
    %c0_83 = arith.constant 0 : index
    %193 = vector.load %arg14[%c0_82, %c0_83] : memref<2x32xf32, #tpu.memory_space<vmem>>, vector<2x32xf32>
    %194 = math.tanh %192 : vector<2x128xf32>
    %195 = arith.negf %192 : vector<2x128xf32>
    %196 = math.exp %195 : vector<2x128xf32>
    %cst_84 = arith.constant 1.000000e+00 : f32
    %197 = vector.broadcast %cst_84 : f32 to vector<2x128xf32>
    %198 = arith.addf %197, %196 : vector<2x128xf32>
    %199 = arith.divf %197, %198 : vector<2x128xf32>
    %200 = vector.shape_cast %27 : vector<1x128xi1> to vector<1x128xi1>
    %201 = vector.broadcast %200 : vector<1x128xi1> to vector<2x128xi1>
    %202 = arith.select %201, %194, %199 : vector<2x128xi1>, vector<2x128xf32>
    %203 = vector.extract_strided_slice %202 {offsets = [0, 0], sizes = [2, 32], strides = [1, 1]} : vector<2x128xf32> to vector<2x32xf32>
    %204 = vector.extract_strided_slice %202 {offsets = [0, 32], sizes = [2, 32], strides = [1, 1]} : vector<2x128xf32> to vector<2x32xf32>
    %205 = vector.extract_strided_slice %202 {offsets = [0, 64], sizes = [2, 32], strides = [1, 1]} : vector<2x128xf32> to vector<2x32xf32>
    %206 = vector.extract_strided_slice %202 {offsets = [0, 96], sizes = [2, 32], strides = [1, 1]} : vector<2x128xf32> to vector<2x32xf32>
    %207 = arith.mulf %204, %193 : vector<2x32xf32>
    %208 = arith.mulf %203, %205 : vector<2x32xf32>
    %209 = arith.addf %207, %208 : vector<2x32xf32>
    %210 = math.tanh %209 : vector<2x32xf32>
    %211 = arith.mulf %206, %210 : vector<2x32xf32>
    %c0_85 = arith.constant 0 : index
    %c0_86 = arith.constant 0 : index
    %212 = vector.load %arg13[%c0_85, %c0_86] : memref<2x32xf32, #tpu.memory_space<vmem>>, vector<2x32xf32>
    tpu.vector_store %arg13[%c0_85, %c0_86], %185 {strides = array<i32>} : memref<2x32xf32, #tpu.memory_space<vmem>>, vector<2x32xf32>,
    %c0_87 = arith.constant 0 : index
    %c0_88 = arith.constant 0 : index
    %213 = vector.load %arg14[%c0_87, %c0_88] : memref<2x32xf32, #tpu.memory_space<vmem>>, vector<2x32xf32>
    tpu.vector_store %arg14[%c0_87, %c0_88], %209 {strides = array<i32>} : memref<2x32xf32, #tpu.memory_space<vmem>>, vector<2x32xf32>,
    %214 = tpu.concatenate %187, %211 in 1 : vector<2x32xf32>, vector<2x32xf32> -> vector<2x64xf32>
    %c0_89 = arith.constant 0 : index
    %c0_90 = arith.constant 0 : index
    %215 = vector.load %arg12[%c0_89, %c0_90] : memref<2x64xf32, #tpu.memory_space<vmem>>, vector<2x64xf32>
    tpu.vector_store %arg12[%c0_89, %c0_90], %214 {strides = array<i32>} : memref<2x64xf32, #tpu.memory_space<vmem>>, vector<2x64xf32>,
    %216 = arith.truncf %187 : vector<2x32xf32> to vector<2x32xbf16>
    %217 = arith.index_cast %c2_i32 : i32 to index
    %c0_91 = arith.constant 0 : index
    %c0_92 = arith.constant 0 : index
    %218 = vector.load %arg8[%217, %c0_91, %c0_92] : memref<8x2x32xbf16, #tpu.memory_space<vmem>>, vector<1x2x32xbf16>
    %219 = vector.shape_cast %218 : vector<1x2x32xbf16> to vector<2x32xbf16>
    %220 = vector.shape_cast %216 : vector<2x32xbf16> to vector<1x2x32xbf16>
    tpu.vector_store %arg8[%217, %c0_91, %c0_92], %220 {strides = array<i32>} : memref<8x2x32xbf16, #tpu.memory_space<vmem>>, vector<1x2x32xbf16>,
    %221 = arith.truncf %211 : vector<2x32xf32> to vector<2x32xbf16>
    %222 = arith.index_cast %160 : i32 to index
    %c0_93 = arith.constant 0 : index
    %c0_94 = arith.constant 0 : index
    %223 = vector.load %arg9[%222, %c0_93, %c0_94] : memref<8x2x32xbf16, #tpu.memory_space<vmem>>, vector<1x2x32xbf16>
    %224 = vector.shape_cast %223 : vector<1x2x32xbf16> to vector<2x32xbf16>
    %225 = vector.shape_cast %221 : vector<2x32xbf16> to vector<1x2x32xbf16>
    tpu.vector_store %arg9[%222, %c0_93, %c0_94], %225 {strides = array<i32>} : memref<8x2x32xbf16, #tpu.memory_space<vmem>>, vector<1x2x32xbf16>,
    %c3_i32 = arith.constant 3 : i32
    %c7_i32_95 = arith.constant 7 : i32
    %226 = arith.subi %c7_i32_95, %c3_i32 : i32
    %c0_96 = arith.constant 0 : index
    %c0_97 = arith.constant 0 : index
    %227 = vector.load %arg12[%c0_96, %c0_97] : memref<2x64xf32, #tpu.memory_space<vmem>>, vector<2x64xf32>
    %228 = arith.truncf %227 : vector<2x64xf32> to vector<2x64xbf16>
    %cst_98 = arith.constant dense<0.000000e+00> : vector<2x256xf32>
    %229 = tpu.matmul %228, %21, %cst_98 {dimension_numbers = #tpu.dot_dimension_numbers<[1], [0], [0], [1], [0, 0, 1, 1], [], []>} : vector<2x64xbf16>, vector<64x256xbf16>, vector<2x256xf32> -> vector<2x256xf32>
    %230 = arith.index_cast %c3_i32 : i32 to index
    %c0_99 = arith.constant 0 : index
    %c0_100 = arith.constant 0 : index
    %231 = vector.load %arg10[%230, %c0_99, %c0_100] : memref<8x2x128xf32, #tpu.memory_space<vmem>>, vector<1x2x128xf32>
    %232 = vector.shape_cast %231 : vector<1x2x128xf32> to vector<2x128xf32>
    %233 = vector.extract_strided_slice %229 {offsets = [0, 0], sizes = [2, 128], strides = [1, 1]} : vector<2x256xf32> to vector<2x128xf32>
    %234 = arith.addf %232, %233 : vector<2x128xf32>
    %c0_101 = arith.constant 0 : index
    %c0_102 = arith.constant 0 : index
    %235 = vector.load %arg13[%c0_101, %c0_102] : memref<2x32xf32, #tpu.memory_space<vmem>>, vector<2x32xf32>
    %236 = math.tanh %234 : vector<2x128xf32>
    %237 = arith.negf %234 : vector<2x128xf32>
    %238 = math.exp %237 : vector<2x128xf32>
    %cst_103 = arith.constant 1.000000e+00 : f32
    %239 = vector.broadcast %cst_103 : f32 to vector<2x128xf32>
    %240 = arith.addf %239, %238 : vector<2x128xf32>
    %241 = arith.divf %239, %240 : vector<2x128xf32>
    %242 = vector.shape_cast %27 : vector<1x128xi1> to vector<1x128xi1>
    %243 = vector.broadcast %242 : vector<1x128xi1> to vector<2x128xi1>
    %244 = arith.select %243, %236, %241 : vector<2x128xi1>, vector<2x128xf32>
    %245 = vector.extract_strided_slice %244 {offsets = [0, 0], sizes = [2, 32], strides = [1, 1]} : vector<2x128xf32> to vector<2x32xf32>
    %246 = vector.extract_strided_slice %244 {offsets = [0, 32], sizes = [2, 32], strides = [1, 1]} : vector<2x128xf32> to vector<2x32xf32>
    %247 = vector.extract_strided_slice %244 {offsets = [0, 64], sizes = [2, 32], strides = [1, 1]} : vector<2x128xf32> to vector<2x32xf32>
    %248 = vector.extract_strided_slice %244 {offsets = [0, 96], sizes = [2, 32], strides = [1, 1]} : vector<2x128xf32> to vector<2x32xf32>
    %249 = arith.mulf %246, %235 : vector<2x32xf32>
    %250 = arith.mulf %245, %247 : vector<2x32xf32>
    %251 = arith.addf %249, %250 : vector<2x32xf32>
    %252 = math.tanh %251 : vector<2x32xf32>
    %253 = arith.mulf %248, %252 : vector<2x32xf32>
    %254 = arith.index_cast %226 : i32 to index
    %c0_104 = arith.constant 0 : index
    %c0_105 = arith.constant 0 : index
    %255 = vector.load %arg11[%254, %c0_104, %c0_105] : memref<8x2x128xf32, #tpu.memory_space<vmem>>, vector<1x2x128xf32>
    %256 = vector.shape_cast %255 : vector<1x2x128xf32> to vector<2x128xf32>
    %257 = vector.extract_strided_slice %229 {offsets = [0, 128], sizes = [2, 128], strides = [1, 1]} : vector<2x256xf32> to vector<2x128xf32>
    %258 = arith.addf %256, %257 : vector<2x128xf32>
    %c0_106 = arith.constant 0 : index
    %c0_107 = arith.constant 0 : index
    %259 = vector.load %arg14[%c0_106, %c0_107] : memref<2x32xf32, #tpu.memory_space<vmem>>, vector<2x32xf32>
    %260 = math.tanh %258 : vector<2x128xf32>
    %261 = arith.negf %258 : vector<2x128xf32>
    %262 = math.exp %261 : vector<2x128xf32>
    %cst_108 = arith.constant 1.000000e+00 : f32
    %263 = vector.broadcast %cst_108 : f32 to vector<2x128xf32>
    %264 = arith.addf %263, %262 : vector<2x128xf32>
    %265 = arith.divf %263, %264 : vector<2x128xf32>
    %266 = vector.shape_cast %27 : vector<1x128xi1> to vector<1x128xi1>
    %267 = vector.broadcast %266 : vector<1x128xi1> to vector<2x128xi1>
    %268 = arith.select %267, %260, %265 : vector<2x128xi1>, vector<2x128xf32>
    %269 = vector.extract_strided_slice %268 {offsets = [0, 0], sizes = [2, 32], strides = [1, 1]} : vector<2x128xf32> to vector<2x32xf32>
    %270 = vector.extract_strided_slice %268 {offsets = [0, 32], sizes = [2, 32], strides = [1, 1]} : vector<2x128xf32> to vector<2x32xf32>
    %271 = vector.extract_strided_slice %268 {offsets = [0, 64], sizes = [2, 32], strides = [1, 1]} : vector<2x128xf32> to vector<2x32xf32>
    %272 = vector.extract_strided_slice %268 {offsets = [0, 96], sizes = [2, 32], strides = [1, 1]} : vector<2x128xf32> to vector<2x32xf32>
    %273 = arith.mulf %270, %259 : vector<2x32xf32>
    %274 = arith.mulf %269, %271 : vector<2x32xf32>
    %275 = arith.addf %273, %274 : vector<2x32xf32>
    %276 = math.tanh %275 : vector<2x32xf32>
    %277 = arith.mulf %272, %276 : vector<2x32xf32>
    %c0_109 = arith.constant 0 : index
    %c0_110 = arith.constant 0 : index
    %278 = vector.load %arg13[%c0_109, %c0_110] : memref<2x32xf32, #tpu.memory_space<vmem>>, vector<2x32xf32>
    tpu.vector_store %arg13[%c0_109, %c0_110], %251 {strides = array<i32>} : memref<2x32xf32, #tpu.memory_space<vmem>>, vector<2x32xf32>,
    %c0_111 = arith.constant 0 : index
    %c0_112 = arith.constant 0 : index
    %279 = vector.load %arg14[%c0_111, %c0_112] : memref<2x32xf32, #tpu.memory_space<vmem>>, vector<2x32xf32>
    tpu.vector_store %arg14[%c0_111, %c0_112], %275 {strides = array<i32>} : memref<2x32xf32, #tpu.memory_space<vmem>>, vector<2x32xf32>,
    %280 = tpu.concatenate %253, %277 in 1 : vector<2x32xf32>, vector<2x32xf32> -> vector<2x64xf32>
    %c0_113 = arith.constant 0 : index
    %c0_114 = arith.constant 0 : index
    %281 = vector.load %arg12[%c0_113, %c0_114] : memref<2x64xf32, #tpu.memory_space<vmem>>, vector<2x64xf32>
    tpu.vector_store %arg12[%c0_113, %c0_114], %280 {strides = array<i32>} : memref<2x64xf32, #tpu.memory_space<vmem>>, vector<2x64xf32>,
    %282 = arith.truncf %253 : vector<2x32xf32> to vector<2x32xbf16>
    %283 = arith.index_cast %c3_i32 : i32 to index
    %c0_115 = arith.constant 0 : index
    %c0_116 = arith.constant 0 : index
    %284 = vector.load %arg8[%283, %c0_115, %c0_116] : memref<8x2x32xbf16, #tpu.memory_space<vmem>>, vector<1x2x32xbf16>
    %285 = vector.shape_cast %284 : vector<1x2x32xbf16> to vector<2x32xbf16>
    %286 = vector.shape_cast %282 : vector<2x32xbf16> to vector<1x2x32xbf16>
    tpu.vector_store %arg8[%283, %c0_115, %c0_116], %286 {strides = array<i32>} : memref<8x2x32xbf16, #tpu.memory_space<vmem>>, vector<1x2x32xbf16>,
    %287 = arith.truncf %277 : vector<2x32xf32> to vector<2x32xbf16>
    %288 = arith.index_cast %226 : i32 to index
    %c0_117 = arith.constant 0 : index
    %c0_118 = arith.constant 0 : index
    %289 = vector.load %arg9[%288, %c0_117, %c0_118] : memref<8x2x32xbf16, #tpu.memory_space<vmem>>, vector<1x2x32xbf16>
    %290 = vector.shape_cast %289 : vector<1x2x32xbf16> to vector<2x32xbf16>
    %291 = vector.shape_cast %287 : vector<2x32xbf16> to vector<1x2x32xbf16>
    tpu.vector_store %arg9[%288, %c0_117, %c0_118], %291 {strides = array<i32>} : memref<8x2x32xbf16, #tpu.memory_space<vmem>>, vector<1x2x32xbf16>,
    %c4_i32 = arith.constant 4 : i32
    %c7_i32_119 = arith.constant 7 : i32
    %292 = arith.subi %c7_i32_119, %c4_i32 : i32
    %c0_120 = arith.constant 0 : index
    %c0_121 = arith.constant 0 : index
    %293 = vector.load %arg12[%c0_120, %c0_121] : memref<2x64xf32, #tpu.memory_space<vmem>>, vector<2x64xf32>
    %294 = arith.truncf %293 : vector<2x64xf32> to vector<2x64xbf16>
    %cst_122 = arith.constant dense<0.000000e+00> : vector<2x256xf32>
    %295 = tpu.matmul %294, %21, %cst_122 {dimension_numbers = #tpu.dot_dimension_numbers<[1], [0], [0], [1], [0, 0, 1, 1], [], []>} : vector<2x64xbf16>, vector<64x256xbf16>, vector<2x256xf32> -> vector<2x256xf32>
    %296 = arith.index_cast %c4_i32 : i32 to index
    %c0_123 = arith.constant 0 : index
    %c0_124 = arith.constant 0 : index
    %297 = vector.load %arg10[%296, %c0_123, %c0_124] : memref<8x2x128xf32, #tpu.memory_space<vmem>>, vector<1x2x128xf32>
    %298 = vector.shape_cast %297 : vector<1x2x128xf32> to vector<2x128xf32>
    %299 = vector.extract_strided_slice %295 {offsets = [0, 0], sizes = [2, 128], strides = [1, 1]} : vector<2x256xf32> to vector<2x128xf32>
    %300 = arith.addf %298, %299 : vector<2x128xf32>
    %c0_125 = arith.constant 0 : index
    %c0_126 = arith.constant 0 : index
    %301 = vector.load %arg13[%c0_125, %c0_126] : memref<2x32xf32, #tpu.memory_space<vmem>>, vector<2x32xf32>
    %302 = math.tanh %300 : vector<2x128xf32>
    %303 = arith.negf %300 : vector<2x128xf32>
    %304 = math.exp %303 : vector<2x128xf32>
    %cst_127 = arith.constant 1.000000e+00 : f32
    %305 = vector.broadcast %cst_127 : f32 to vector<2x128xf32>
    %306 = arith.addf %305, %304 : vector<2x128xf32>
    %307 = arith.divf %305, %306 : vector<2x128xf32>
    %308 = vector.shape_cast %27 : vector<1x128xi1> to vector<1x128xi1>
    %309 = vector.broadcast %308 : vector<1x128xi1> to vector<2x128xi1>
    %310 = arith.select %309, %302, %307 : vector<2x128xi1>, vector<2x128xf32>
    %311 = vector.extract_strided_slice %310 {offsets = [0, 0], sizes = [2, 32], strides = [1, 1]} : vector<2x128xf32> to vector<2x32xf32>
    %312 = vector.extract_strided_slice %310 {offsets = [0, 32], sizes = [2, 32], strides = [1, 1]} : vector<2x128xf32> to vector<2x32xf32>
    %313 = vector.extract_strided_slice %310 {offsets = [0, 64], sizes = [2, 32], strides = [1, 1]} : vector<2x128xf32> to vector<2x32xf32>
    %314 = vector.extract_strided_slice %310 {offsets = [0, 96], sizes = [2, 32], strides = [1, 1]} : vector<2x128xf32> to vector<2x32xf32>
    %315 = arith.mulf %312, %301 : vector<2x32xf32>
    %316 = arith.mulf %311, %313 : vector<2x32xf32>
    %317 = arith.addf %315, %316 : vector<2x32xf32>
    %318 = math.tanh %317 : vector<2x32xf32>
    %319 = arith.mulf %314, %318 : vector<2x32xf32>
    %320 = arith.index_cast %292 : i32 to index
    %c0_128 = arith.constant 0 : index
    %c0_129 = arith.constant 0 : index
    %321 = vector.load %arg11[%320, %c0_128, %c0_129] : memref<8x2x128xf32, #tpu.memory_space<vmem>>, vector<1x2x128xf32>
    %322 = vector.shape_cast %321 : vector<1x2x128xf32> to vector<2x128xf32>
    %323 = vector.extract_strided_slice %295 {offsets = [0, 128], sizes = [2, 128], strides = [1, 1]} : vector<2x256xf32> to vector<2x128xf32>
    %324 = arith.addf %322, %323 : vector<2x128xf32>
    %c0_130 = arith.constant 0 : index
    %c0_131 = arith.constant 0 : index
    %325 = vector.load %arg14[%c0_130, %c0_131] : memref<2x32xf32, #tpu.memory_space<vmem>>, vector<2x32xf32>
    %326 = math.tanh %324 : vector<2x128xf32>
    %327 = arith.negf %324 : vector<2x128xf32>
    %328 = math.exp %327 : vector<2x128xf32>
    %cst_132 = arith.constant 1.000000e+00 : f32
    %329 = vector.broadcast %cst_132 : f32 to vector<2x128xf32>
    %330 = arith.addf %329, %328 : vector<2x128xf32>
    %331 = arith.divf %329, %330 : vector<2x128xf32>
    %332 = vector.shape_cast %27 : vector<1x128xi1> to vector<1x128xi1>
    %333 = vector.broadcast %332 : vector<1x128xi1> to vector<2x128xi1>
    %334 = arith.select %333, %326, %331 : vector<2x128xi1>, vector<2x128xf32>
    %335 = vector.extract_strided_slice %334 {offsets = [0, 0], sizes = [2, 32], strides = [1, 1]} : vector<2x128xf32> to vector<2x32xf32>
    %336 = vector.extract_strided_slice %334 {offsets = [0, 32], sizes = [2, 32], strides = [1, 1]} : vector<2x128xf32> to vector<2x32xf32>
    %337 = vector.extract_strided_slice %334 {offsets = [0, 64], sizes = [2, 32], strides = [1, 1]} : vector<2x128xf32> to vector<2x32xf32>
    %338 = vector.extract_strided_slice %334 {offsets = [0, 96], sizes = [2, 32], strides = [1, 1]} : vector<2x128xf32> to vector<2x32xf32>
    %339 = arith.mulf %336, %325 : vector<2x32xf32>
    %340 = arith.mulf %335, %337 : vector<2x32xf32>
    %341 = arith.addf %339, %340 : vector<2x32xf32>
    %342 = math.tanh %341 : vector<2x32xf32>
    %343 = arith.mulf %338, %342 : vector<2x32xf32>
    %c0_133 = arith.constant 0 : index
    %c0_134 = arith.constant 0 : index
    %344 = vector.load %arg13[%c0_133, %c0_134] : memref<2x32xf32, #tpu.memory_space<vmem>>, vector<2x32xf32>
    tpu.vector_store %arg13[%c0_133, %c0_134], %317 {strides = array<i32>} : memref<2x32xf32, #tpu.memory_space<vmem>>, vector<2x32xf32>,
    %c0_135 = arith.constant 0 : index
    %c0_136 = arith.constant 0 : index
    %345 = vector.load %arg14[%c0_135, %c0_136] : memref<2x32xf32, #tpu.memory_space<vmem>>, vector<2x32xf32>
    tpu.vector_store %arg14[%c0_135, %c0_136], %341 {strides = array<i32>} : memref<2x32xf32, #tpu.memory_space<vmem>>, vector<2x32xf32>,
    %346 = tpu.concatenate %319, %343 in 1 : vector<2x32xf32>, vector<2x32xf32> -> vector<2x64xf32>
    %c0_137 = arith.constant 0 : index
    %c0_138 = arith.constant 0 : index
    %347 = vector.load %arg12[%c0_137, %c0_138] : memref<2x64xf32, #tpu.memory_space<vmem>>, vector<2x64xf32>
    tpu.vector_store %arg12[%c0_137, %c0_138], %346 {strides = array<i32>} : memref<2x64xf32, #tpu.memory_space<vmem>>, vector<2x64xf32>,
    %348 = arith.truncf %319 : vector<2x32xf32> to vector<2x32xbf16>
    %349 = arith.index_cast %c4_i32 : i32 to index
    %c0_139 = arith.constant 0 : index
    %c0_140 = arith.constant 0 : index
    %350 = vector.load %arg8[%349, %c0_139, %c0_140] : memref<8x2x32xbf16, #tpu.memory_space<vmem>>, vector<1x2x32xbf16>
    %351 = vector.shape_cast %350 : vector<1x2x32xbf16> to vector<2x32xbf16>
    %352 = vector.shape_cast %348 : vector<2x32xbf16> to vector<1x2x32xbf16>
    tpu.vector_store %arg8[%349, %c0_139, %c0_140], %352 {strides = array<i32>} : memref<8x2x32xbf16, #tpu.memory_space<vmem>>, vector<1x2x32xbf16>,
    %353 = arith.truncf %343 : vector<2x32xf32> to vector<2x32xbf16>
    %354 = arith.index_cast %292 : i32 to index
    %c0_141 = arith.constant 0 : index
    %c0_142 = arith.constant 0 : index
    %355 = vector.load %arg9[%354, %c0_141, %c0_142] : memref<8x2x32xbf16, #tpu.memory_space<vmem>>, vector<1x2x32xbf16>
    %356 = vector.shape_cast %355 : vector<1x2x32xbf16> to vector<2x32xbf16>
    %357 = vector.shape_cast %353 : vector<2x32xbf16> to vector<1x2x32xbf16>
    tpu.vector_store %arg9[%354, %c0_141, %c0_142], %357 {strides = array<i32>} : memref<8x2x32xbf16, #tpu.memory_space<vmem>>, vector<1x2x32xbf16>,
    %c5_i32 = arith.constant 5 : i32
    %c7_i32_143 = arith.constant 7 : i32
    %358 = arith.subi %c7_i32_143, %c5_i32 : i32
    %c0_144 = arith.constant 0 : index
    %c0_145 = arith.constant 0 : index
    %359 = vector.load %arg12[%c0_144, %c0_145] : memref<2x64xf32, #tpu.memory_space<vmem>>, vector<2x64xf32>
    %360 = arith.truncf %359 : vector<2x64xf32> to vector<2x64xbf16>
    %cst_146 = arith.constant dense<0.000000e+00> : vector<2x256xf32>
    %361 = tpu.matmul %360, %21, %cst_146 {dimension_numbers = #tpu.dot_dimension_numbers<[1], [0], [0], [1], [0, 0, 1, 1], [], []>} : vector<2x64xbf16>, vector<64x256xbf16>, vector<2x256xf32> -> vector<2x256xf32>
    %362 = arith.index_cast %c5_i32 : i32 to index
    %c0_147 = arith.constant 0 : index
    %c0_148 = arith.constant 0 : index
    %363 = vector.load %arg10[%362, %c0_147, %c0_148] : memref<8x2x128xf32, #tpu.memory_space<vmem>>, vector<1x2x128xf32>
    %364 = vector.shape_cast %363 : vector<1x2x128xf32> to vector<2x128xf32>
    %365 = vector.extract_strided_slice %361 {offsets = [0, 0], sizes = [2, 128], strides = [1, 1]} : vector<2x256xf32> to vector<2x128xf32>
    %366 = arith.addf %364, %365 : vector<2x128xf32>
    %c0_149 = arith.constant 0 : index
    %c0_150 = arith.constant 0 : index
    %367 = vector.load %arg13[%c0_149, %c0_150] : memref<2x32xf32, #tpu.memory_space<vmem>>, vector<2x32xf32>
    %368 = math.tanh %366 : vector<2x128xf32>
    %369 = arith.negf %366 : vector<2x128xf32>
    %370 = math.exp %369 : vector<2x128xf32>
    %cst_151 = arith.constant 1.000000e+00 : f32
    %371 = vector.broadcast %cst_151 : f32 to vector<2x128xf32>
    %372 = arith.addf %371, %370 : vector<2x128xf32>
    %373 = arith.divf %371, %372 : vector<2x128xf32>
    %374 = vector.shape_cast %27 : vector<1x128xi1> to vector<1x128xi1>
    %375 = vector.broadcast %374 : vector<1x128xi1> to vector<2x128xi1>
    %376 = arith.select %375, %368, %373 : vector<2x128xi1>, vector<2x128xf32>
    %377 = vector.extract_strided_slice %376 {offsets = [0, 0], sizes = [2, 32], strides = [1, 1]} : vector<2x128xf32> to vector<2x32xf32>
    %378 = vector.extract_strided_slice %376 {offsets = [0, 32], sizes = [2, 32], strides = [1, 1]} : vector<2x128xf32> to vector<2x32xf32>
    %379 = vector.extract_strided_slice %376 {offsets = [0, 64], sizes = [2, 32], strides = [1, 1]} : vector<2x128xf32> to vector<2x32xf32>
    %380 = vector.extract_strided_slice %376 {offsets = [0, 96], sizes = [2, 32], strides = [1, 1]} : vector<2x128xf32> to vector<2x32xf32>
    %381 = arith.mulf %378, %367 : vector<2x32xf32>
    %382 = arith.mulf %377, %379 : vector<2x32xf32>
    %383 = arith.addf %381, %382 : vector<2x32xf32>
    %384 = math.tanh %383 : vector<2x32xf32>
    %385 = arith.mulf %380, %384 : vector<2x32xf32>
    %386 = arith.index_cast %358 : i32 to index
    %c0_152 = arith.constant 0 : index
    %c0_153 = arith.constant 0 : index
    %387 = vector.load %arg11[%386, %c0_152, %c0_153] : memref<8x2x128xf32, #tpu.memory_space<vmem>>, vector<1x2x128xf32>
    %388 = vector.shape_cast %387 : vector<1x2x128xf32> to vector<2x128xf32>
    %389 = vector.extract_strided_slice %361 {offsets = [0, 128], sizes = [2, 128], strides = [1, 1]} : vector<2x256xf32> to vector<2x128xf32>
    %390 = arith.addf %388, %389 : vector<2x128xf32>
    %c0_154 = arith.constant 0 : index
    %c0_155 = arith.constant 0 : index
    %391 = vector.load %arg14[%c0_154, %c0_155] : memref<2x32xf32, #tpu.memory_space<vmem>>, vector<2x32xf32>
    %392 = math.tanh %390 : vector<2x128xf32>
    %393 = arith.negf %390 : vector<2x128xf32>
    %394 = math.exp %393 : vector<2x128xf32>
    %cst_156 = arith.constant 1.000000e+00 : f32
    %395 = vector.broadcast %cst_156 : f32 to vector<2x128xf32>
    %396 = arith.addf %395, %394 : vector<2x128xf32>
    %397 = arith.divf %395, %396 : vector<2x128xf32>
    %398 = vector.shape_cast %27 : vector<1x128xi1> to vector<1x128xi1>
    %399 = vector.broadcast %398 : vector<1x128xi1> to vector<2x128xi1>
    %400 = arith.select %399, %392, %397 : vector<2x128xi1>, vector<2x128xf32>
    %401 = vector.extract_strided_slice %400 {offsets = [0, 0], sizes = [2, 32], strides = [1, 1]} : vector<2x128xf32> to vector<2x32xf32>
    %402 = vector.extract_strided_slice %400 {offsets = [0, 32], sizes = [2, 32], strides = [1, 1]} : vector<2x128xf32> to vector<2x32xf32>
    %403 = vector.extract_strided_slice %400 {offsets = [0, 64], sizes = [2, 32], strides = [1, 1]} : vector<2x128xf32> to vector<2x32xf32>
    %404 = vector.extract_strided_slice %400 {offsets = [0, 96], sizes = [2, 32], strides = [1, 1]} : vector<2x128xf32> to vector<2x32xf32>
    %405 = arith.mulf %402, %391 : vector<2x32xf32>
    %406 = arith.mulf %401, %403 : vector<2x32xf32>
    %407 = arith.addf %405, %406 : vector<2x32xf32>
    %408 = math.tanh %407 : vector<2x32xf32>
    %409 = arith.mulf %404, %408 : vector<2x32xf32>
    %c0_157 = arith.constant 0 : index
    %c0_158 = arith.constant 0 : index
    %410 = vector.load %arg13[%c0_157, %c0_158] : memref<2x32xf32, #tpu.memory_space<vmem>>, vector<2x32xf32>
    tpu.vector_store %arg13[%c0_157, %c0_158], %383 {strides = array<i32>} : memref<2x32xf32, #tpu.memory_space<vmem>>, vector<2x32xf32>,
    %c0_159 = arith.constant 0 : index
    %c0_160 = arith.constant 0 : index
    %411 = vector.load %arg14[%c0_159, %c0_160] : memref<2x32xf32, #tpu.memory_space<vmem>>, vector<2x32xf32>
    tpu.vector_store %arg14[%c0_159, %c0_160], %407 {strides = array<i32>} : memref<2x32xf32, #tpu.memory_space<vmem>>, vector<2x32xf32>,
    %412 = tpu.concatenate %385, %409 in 1 : vector<2x32xf32>, vector<2x32xf32> -> vector<2x64xf32>
    %c0_161 = arith.constant 0 : index
    %c0_162 = arith.constant 0 : index
    %413 = vector.load %arg12[%c0_161, %c0_162] : memref<2x64xf32, #tpu.memory_space<vmem>>, vector<2x64xf32>
    tpu.vector_store %arg12[%c0_161, %c0_162], %412 {strides = array<i32>} : memref<2x64xf32, #tpu.memory_space<vmem>>, vector<2x64xf32>,
    %414 = arith.truncf %385 : vector<2x32xf32> to vector<2x32xbf16>
    %415 = arith.index_cast %c5_i32 : i32 to index
    %c0_163 = arith.constant 0 : index
    %c0_164 = arith.constant 0 : index
    %416 = vector.load %arg8[%415, %c0_163, %c0_164] : memref<8x2x32xbf16, #tpu.memory_space<vmem>>, vector<1x2x32xbf16>
    %417 = vector.shape_cast %416 : vector<1x2x32xbf16> to vector<2x32xbf16>
    %418 = vector.shape_cast %414 : vector<2x32xbf16> to vector<1x2x32xbf16>
    tpu.vector_store %arg8[%415, %c0_163, %c0_164], %418 {strides = array<i32>} : memref<8x2x32xbf16, #tpu.memory_space<vmem>>, vector<1x2x32xbf16>,
    %419 = arith.truncf %409 : vector<2x32xf32> to vector<2x32xbf16>
    %420 = arith.index_cast %358 : i32 to index
    %c0_165 = arith.constant 0 : index
    %c0_166 = arith.constant 0 : index
    %421 = vector.load %arg9[%420, %c0_165, %c0_166] : memref<8x2x32xbf16, #tpu.memory_space<vmem>>, vector<1x2x32xbf16>
    %422 = vector.shape_cast %421 : vector<1x2x32xbf16> to vector<2x32xbf16>
    %423 = vector.shape_cast %419 : vector<2x32xbf16> to vector<1x2x32xbf16>
    tpu.vector_store %arg9[%420, %c0_165, %c0_166], %423 {strides = array<i32>} : memref<8x2x32xbf16, #tpu.memory_space<vmem>>, vector<1x2x32xbf16>,
    %c6_i32 = arith.constant 6 : i32
    %c7_i32_167 = arith.constant 7 : i32
    %424 = arith.subi %c7_i32_167, %c6_i32 : i32
    %c0_168 = arith.constant 0 : index
    %c0_169 = arith.constant 0 : index
    %425 = vector.load %arg12[%c0_168, %c0_169] : memref<2x64xf32, #tpu.memory_space<vmem>>, vector<2x64xf32>
    %426 = arith.truncf %425 : vector<2x64xf32> to vector<2x64xbf16>
    %cst_170 = arith.constant dense<0.000000e+00> : vector<2x256xf32>
    %427 = tpu.matmul %426, %21, %cst_170 {dimension_numbers = #tpu.dot_dimension_numbers<[1], [0], [0], [1], [0, 0, 1, 1], [], []>} : vector<2x64xbf16>, vector<64x256xbf16>, vector<2x256xf32> -> vector<2x256xf32>
    %428 = arith.index_cast %c6_i32 : i32 to index
    %c0_171 = arith.constant 0 : index
    %c0_172 = arith.constant 0 : index
    %429 = vector.load %arg10[%428, %c0_171, %c0_172] : memref<8x2x128xf32, #tpu.memory_space<vmem>>, vector<1x2x128xf32>
    %430 = vector.shape_cast %429 : vector<1x2x128xf32> to vector<2x128xf32>
    %431 = vector.extract_strided_slice %427 {offsets = [0, 0], sizes = [2, 128], strides = [1, 1]} : vector<2x256xf32> to vector<2x128xf32>
    %432 = arith.addf %430, %431 : vector<2x128xf32>
    %c0_173 = arith.constant 0 : index
    %c0_174 = arith.constant 0 : index
    %433 = vector.load %arg13[%c0_173, %c0_174] : memref<2x32xf32, #tpu.memory_space<vmem>>, vector<2x32xf32>
    %434 = math.tanh %432 : vector<2x128xf32>
    %435 = arith.negf %432 : vector<2x128xf32>
    %436 = math.exp %435 : vector<2x128xf32>
    %cst_175 = arith.constant 1.000000e+00 : f32
    %437 = vector.broadcast %cst_175 : f32 to vector<2x128xf32>
    %438 = arith.addf %437, %436 : vector<2x128xf32>
    %439 = arith.divf %437, %438 : vector<2x128xf32>
    %440 = vector.shape_cast %27 : vector<1x128xi1> to vector<1x128xi1>
    %441 = vector.broadcast %440 : vector<1x128xi1> to vector<2x128xi1>
    %442 = arith.select %441, %434, %439 : vector<2x128xi1>, vector<2x128xf32>
    %443 = vector.extract_strided_slice %442 {offsets = [0, 0], sizes = [2, 32], strides = [1, 1]} : vector<2x128xf32> to vector<2x32xf32>
    %444 = vector.extract_strided_slice %442 {offsets = [0, 32], sizes = [2, 32], strides = [1, 1]} : vector<2x128xf32> to vector<2x32xf32>
    %445 = vector.extract_strided_slice %442 {offsets = [0, 64], sizes = [2, 32], strides = [1, 1]} : vector<2x128xf32> to vector<2x32xf32>
    %446 = vector.extract_strided_slice %442 {offsets = [0, 96], sizes = [2, 32], strides = [1, 1]} : vector<2x128xf32> to vector<2x32xf32>
    %447 = arith.mulf %444, %433 : vector<2x32xf32>
    %448 = arith.mulf %443, %445 : vector<2x32xf32>
    %449 = arith.addf %447, %448 : vector<2x32xf32>
    %450 = math.tanh %449 : vector<2x32xf32>
    %451 = arith.mulf %446, %450 : vector<2x32xf32>
    %452 = arith.index_cast %424 : i32 to index
    %c0_176 = arith.constant 0 : index
    %c0_177 = arith.constant 0 : index
    %453 = vector.load %arg11[%452, %c0_176, %c0_177] : memref<8x2x128xf32, #tpu.memory_space<vmem>>, vector<1x2x128xf32>
    %454 = vector.shape_cast %453 : vector<1x2x128xf32> to vector<2x128xf32>
    %455 = vector.extract_strided_slice %427 {offsets = [0, 128], sizes = [2, 128], strides = [1, 1]} : vector<2x256xf32> to vector<2x128xf32>
    %456 = arith.addf %454, %455 : vector<2x128xf32>
    %c0_178 = arith.constant 0 : index
    %c0_179 = arith.constant 0 : index
    %457 = vector.load %arg14[%c0_178, %c0_179] : memref<2x32xf32, #tpu.memory_space<vmem>>, vector<2x32xf32>
    %458 = math.tanh %456 : vector<2x128xf32>
    %459 = arith.negf %456 : vector<2x128xf32>
    %460 = math.exp %459 : vector<2x128xf32>
    %cst_180 = arith.constant 1.000000e+00 : f32
    %461 = vector.broadcast %cst_180 : f32 to vector<2x128xf32>
    %462 = arith.addf %461, %460 : vector<2x128xf32>
    %463 = arith.divf %461, %462 : vector<2x128xf32>
    %464 = vector.shape_cast %27 : vector<1x128xi1> to vector<1x128xi1>
    %465 = vector.broadcast %464 : vector<1x128xi1> to vector<2x128xi1>
    %466 = arith.select %465, %458, %463 : vector<2x128xi1>, vector<2x128xf32>
    %467 = vector.extract_strided_slice %466 {offsets = [0, 0], sizes = [2, 32], strides = [1, 1]} : vector<2x128xf32> to vector<2x32xf32>
    %468 = vector.extract_strided_slice %466 {offsets = [0, 32], sizes = [2, 32], strides = [1, 1]} : vector<2x128xf32> to vector<2x32xf32>
    %469 = vector.extract_strided_slice %466 {offsets = [0, 64], sizes = [2, 32], strides = [1, 1]} : vector<2x128xf32> to vector<2x32xf32>
    %470 = vector.extract_strided_slice %466 {offsets = [0, 96], sizes = [2, 32], strides = [1, 1]} : vector<2x128xf32> to vector<2x32xf32>
    %471 = arith.mulf %468, %457 : vector<2x32xf32>
    %472 = arith.mulf %467, %469 : vector<2x32xf32>
    %473 = arith.addf %471, %472 : vector<2x32xf32>
    %474 = math.tanh %473 : vector<2x32xf32>
    %475 = arith.mulf %470, %474 : vector<2x32xf32>
    %c0_181 = arith.constant 0 : index
    %c0_182 = arith.constant 0 : index
    %476 = vector.load %arg13[%c0_181, %c0_182] : memref<2x32xf32, #tpu.memory_space<vmem>>, vector<2x32xf32>
    tpu.vector_store %arg13[%c0_181, %c0_182], %449 {strides = array<i32>} : memref<2x32xf32, #tpu.memory_space<vmem>>, vector<2x32xf32>,
    %c0_183 = arith.constant 0 : index
    %c0_184 = arith.constant 0 : index
    %477 = vector.load %arg14[%c0_183, %c0_184] : memref<2x32xf32, #tpu.memory_space<vmem>>, vector<2x32xf32>
    tpu.vector_store %arg14[%c0_183, %c0_184], %473 {strides = array<i32>} : memref<2x32xf32, #tpu.memory_space<vmem>>, vector<2x32xf32>,
    %478 = tpu.concatenate %451, %475 in 1 : vector<2x32xf32>, vector<2x32xf32> -> vector<2x64xf32>
    %c0_185 = arith.constant 0 : index
    %c0_186 = arith.constant 0 : index
    %479 = vector.load %arg12[%c0_185, %c0_186] : memref<2x64xf32, #tpu.memory_space<vmem>>, vector<2x64xf32>
    tpu.vector_store %arg12[%c0_185, %c0_186], %478 {strides = array<i32>} : memref<2x64xf32, #tpu.memory_space<vmem>>, vector<2x64xf32>,
    %480 = arith.truncf %451 : vector<2x32xf32> to vector<2x32xbf16>
    %481 = arith.index_cast %c6_i32 : i32 to index
    %c0_187 = arith.constant 0 : index
    %c0_188 = arith.constant 0 : index
    %482 = vector.load %arg8[%481, %c0_187, %c0_188] : memref<8x2x32xbf16, #tpu.memory_space<vmem>>, vector<1x2x32xbf16>
    %483 = vector.shape_cast %482 : vector<1x2x32xbf16> to vector<2x32xbf16>
    %484 = vector.shape_cast %480 : vector<2x32xbf16> to vector<1x2x32xbf16>
    tpu.vector_store %arg8[%481, %c0_187, %c0_188], %484 {strides = array<i32>} : memref<8x2x32xbf16, #tpu.memory_space<vmem>>, vector<1x2x32xbf16>,
    %485 = arith.truncf %475 : vector<2x32xf32> to vector<2x32xbf16>
    %486 = arith.index_cast %424 : i32 to index
    %c0_189 = arith.constant 0 : index
    %c0_190 = arith.constant 0 : index
    %487 = vector.load %arg9[%486, %c0_189, %c0_190] : memref<8x2x32xbf16, #tpu.memory_space<vmem>>, vector<1x2x32xbf16>
    %488 = vector.shape_cast %487 : vector<1x2x32xbf16> to vector<2x32xbf16>
    %489 = vector.shape_cast %485 : vector<2x32xbf16> to vector<1x2x32xbf16>
    tpu.vector_store %arg9[%486, %c0_189, %c0_190], %489 {strides = array<i32>} : memref<8x2x32xbf16, #tpu.memory_space<vmem>>, vector<1x2x32xbf16>,
    %c7_i32_191 = arith.constant 7 : i32
    %c7_i32_192 = arith.constant 7 : i32
    %490 = arith.subi %c7_i32_192, %c7_i32_191 : i32
    %c0_193 = arith.constant 0 : index
    %c0_194 = arith.constant 0 : index
    %491 = vector.load %arg12[%c0_193, %c0_194] : memref<2x64xf32, #tpu.memory_space<vmem>>, vector<2x64xf32>
    %492 = arith.truncf %491 : vector<2x64xf32> to vector<2x64xbf16>
    %cst_195 = arith.constant dense<0.000000e+00> : vector<2x256xf32>
    %493 = tpu.matmul %492, %21, %cst_195 {dimension_numbers = #tpu.dot_dimension_numbers<[1], [0], [0], [1], [0, 0, 1, 1], [], []>} : vector<2x64xbf16>, vector<64x256xbf16>, vector<2x256xf32> -> vector<2x256xf32>
    %494 = arith.index_cast %c7_i32_191 : i32 to index
    %c0_196 = arith.constant 0 : index
    %c0_197 = arith.constant 0 : index
    %495 = vector.load %arg10[%494, %c0_196, %c0_197] : memref<8x2x128xf32, #tpu.memory_space<vmem>>, vector<1x2x128xf32>
    %496 = vector.shape_cast %495 : vector<1x2x128xf32> to vector<2x128xf32>
    %497 = vector.extract_strided_slice %493 {offsets = [0, 0], sizes = [2, 128], strides = [1, 1]} : vector<2x256xf32> to vector<2x128xf32>
    %498 = arith.addf %496, %497 : vector<2x128xf32>
    %c0_198 = arith.constant 0 : index
    %c0_199 = arith.constant 0 : index
    %499 = vector.load %arg13[%c0_198, %c0_199] : memref<2x32xf32, #tpu.memory_space<vmem>>, vector<2x32xf32>
    %500 = math.tanh %498 : vector<2x128xf32>
    %501 = arith.negf %498 : vector<2x128xf32>
    %502 = math.exp %501 : vector<2x128xf32>
    %cst_200 = arith.constant 1.000000e+00 : f32
    %503 = vector.broadcast %cst_200 : f32 to vector<2x128xf32>
    %504 = arith.addf %503, %502 : vector<2x128xf32>
    %505 = arith.divf %503, %504 : vector<2x128xf32>
    %506 = vector.shape_cast %27 : vector<1x128xi1> to vector<1x128xi1>
    %507 = vector.broadcast %506 : vector<1x128xi1> to vector<2x128xi1>
    %508 = arith.select %507, %500, %505 : vector<2x128xi1>, vector<2x128xf32>
    %509 = vector.extract_strided_slice %508 {offsets = [0, 0], sizes = [2, 32], strides = [1, 1]} : vector<2x128xf32> to vector<2x32xf32>
    %510 = vector.extract_strided_slice %508 {offsets = [0, 32], sizes = [2, 32], strides = [1, 1]} : vector<2x128xf32> to vector<2x32xf32>
    %511 = vector.extract_strided_slice %508 {offsets = [0, 64], sizes = [2, 32], strides = [1, 1]} : vector<2x128xf32> to vector<2x32xf32>
    %512 = vector.extract_strided_slice %508 {offsets = [0, 96], sizes = [2, 32], strides = [1, 1]} : vector<2x128xf32> to vector<2x32xf32>
    %513 = arith.mulf %510, %499 : vector<2x32xf32>
    %514 = arith.mulf %509, %511 : vector<2x32xf32>
    %515 = arith.addf %513, %514 : vector<2x32xf32>
    %516 = math.tanh %515 : vector<2x32xf32>
    %517 = arith.mulf %512, %516 : vector<2x32xf32>
    %518 = arith.index_cast %490 : i32 to index
    %c0_201 = arith.constant 0 : index
    %c0_202 = arith.constant 0 : index
    %519 = vector.load %arg11[%518, %c0_201, %c0_202] : memref<8x2x128xf32, #tpu.memory_space<vmem>>, vector<1x2x128xf32>
    %520 = vector.shape_cast %519 : vector<1x2x128xf32> to vector<2x128xf32>
    %521 = vector.extract_strided_slice %493 {offsets = [0, 128], sizes = [2, 128], strides = [1, 1]} : vector<2x256xf32> to vector<2x128xf32>
    %522 = arith.addf %520, %521 : vector<2x128xf32>
    %c0_203 = arith.constant 0 : index
    %c0_204 = arith.constant 0 : index
    %523 = vector.load %arg14[%c0_203, %c0_204] : memref<2x32xf32, #tpu.memory_space<vmem>>, vector<2x32xf32>
    %524 = math.tanh %522 : vector<2x128xf32>
    %525 = arith.negf %522 : vector<2x128xf32>
    %526 = math.exp %525 : vector<2x128xf32>
    %cst_205 = arith.constant 1.000000e+00 : f32
    %527 = vector.broadcast %cst_205 : f32 to vector<2x128xf32>
    %528 = arith.addf %527, %526 : vector<2x128xf32>
    %529 = arith.divf %527, %528 : vector<2x128xf32>
    %530 = vector.shape_cast %27 : vector<1x128xi1> to vector<1x128xi1>
    %531 = vector.broadcast %530 : vector<1x128xi1> to vector<2x128xi1>
    %532 = arith.select %531, %524, %529 : vector<2x128xi1>, vector<2x128xf32>
    %533 = vector.extract_strided_slice %532 {offsets = [0, 0], sizes = [2, 32], strides = [1, 1]} : vector<2x128xf32> to vector<2x32xf32>
    %534 = vector.extract_strided_slice %532 {offsets = [0, 32], sizes = [2, 32], strides = [1, 1]} : vector<2x128xf32> to vector<2x32xf32>
    %535 = vector.extract_strided_slice %532 {offsets = [0, 64], sizes = [2, 32], strides = [1, 1]} : vector<2x128xf32> to vector<2x32xf32>
    %536 = vector.extract_strided_slice %532 {offsets = [0, 96], sizes = [2, 32], strides = [1, 1]} : vector<2x128xf32> to vector<2x32xf32>
    %537 = arith.mulf %534, %523 : vector<2x32xf32>
    %538 = arith.mulf %533, %535 : vector<2x32xf32>
    %539 = arith.addf %537, %538 : vector<2x32xf32>
    %540 = math.tanh %539 : vector<2x32xf32>
    %541 = arith.mulf %536, %540 : vector<2x32xf32>
    %c0_206 = arith.constant 0 : index
    %c0_207 = arith.constant 0 : index
    %542 = vector.load %arg13[%c0_206, %c0_207] : memref<2x32xf32, #tpu.memory_space<vmem>>, vector<2x32xf32>
    tpu.vector_store %arg13[%c0_206, %c0_207], %515 {strides = array<i32>} : memref<2x32xf32, #tpu.memory_space<vmem>>, vector<2x32xf32>,
    %c0_208 = arith.constant 0 : index
    %c0_209 = arith.constant 0 : index
    %543 = vector.load %arg14[%c0_208, %c0_209] : memref<2x32xf32, #tpu.memory_space<vmem>>, vector<2x32xf32>
    tpu.vector_store %arg14[%c0_208, %c0_209], %539 {strides = array<i32>} : memref<2x32xf32, #tpu.memory_space<vmem>>, vector<2x32xf32>,
    %544 = tpu.concatenate %517, %541 in 1 : vector<2x32xf32>, vector<2x32xf32> -> vector<2x64xf32>
    %c0_210 = arith.constant 0 : index
    %c0_211 = arith.constant 0 : index
    %545 = vector.load %arg12[%c0_210, %c0_211] : memref<2x64xf32, #tpu.memory_space<vmem>>, vector<2x64xf32>
    tpu.vector_store %arg12[%c0_210, %c0_211], %544 {strides = array<i32>} : memref<2x64xf32, #tpu.memory_space<vmem>>, vector<2x64xf32>,
    %546 = arith.truncf %517 : vector<2x32xf32> to vector<2x32xbf16>
    %547 = arith.index_cast %c7_i32_191 : i32 to index
    %c0_212 = arith.constant 0 : index
    %c0_213 = arith.constant 0 : index
    %548 = vector.load %arg8[%547, %c0_212, %c0_213] : memref<8x2x32xbf16, #tpu.memory_space<vmem>>, vector<1x2x32xbf16>
    %549 = vector.shape_cast %548 : vector<1x2x32xbf16> to vector<2x32xbf16>
    %550 = vector.shape_cast %546 : vector<2x32xbf16> to vector<1x2x32xbf16>
    tpu.vector_store %arg8[%547, %c0_212, %c0_213], %550 {strides = array<i32>} : memref<8x2x32xbf16, #tpu.memory_space<vmem>>, vector<1x2x32xbf16>,
    %551 = arith.truncf %541 : vector<2x32xf32> to vector<2x32xbf16>
    %552 = arith.index_cast %490 : i32 to index
    %c0_214 = arith.constant 0 : index
    %c0_215 = arith.constant 0 : index
    %553 = vector.load %arg9[%552, %c0_214, %c0_215] : memref<8x2x32xbf16, #tpu.memory_space<vmem>>, vector<1x2x32xbf16>
    %554 = vector.shape_cast %553 : vector<1x2x32xbf16> to vector<2x32xbf16>
    %555 = vector.shape_cast %551 : vector<2x32xbf16> to vector<1x2x32xbf16>
    tpu.vector_store %arg9[%552, %c0_214, %c0_215], %555 {strides = array<i32>} : memref<8x2x32xbf16, #tpu.memory_space<vmem>>, vector<1x2x32xbf16>,
    %c8_i32 = arith.constant 8 : i32
    return
  }
  func.func @transform_0(%arg0: i32) -> (i32, i32, i32) {
    %c0_i32 = arith.constant 0 : i32
    %c0_i32_0 = arith.constant 0 : i32
    %c0_i32_1 = arith.constant 0 : i32
    return %arg0, %c0_i32, %c0_i32_0 : i32, i32, i32
  }
  func.func @transform_1(%arg0: i32) -> (i32, i32, i32) {
    %c0_i32 = arith.constant 0 : i32
    %0 = arith.subi %c0_i32, %arg0 : i32
    %c0_i32_0 = arith.constant 0 : i32
    %c0_i32_1 = arith.constant 0 : i32
    %c0_i32_2 = arith.constant 0 : i32
    return %0, %c0_i32_0, %c0_i32_1 : i32, i32, i32
  }
  func.func @transform_2(%arg0: i32) -> (i32, i32) {
    %c0_i32 = arith.constant 0 : i32
    %c0_i32_0 = arith.constant 0 : i32
    %c0_i32_1 = arith.constant 0 : i32
    return %c0_i32, %c0_i32_0 : i32, i32
  }
  func.func @transform_3(%arg0: i32) -> (i32, i32) {
    %c0_i32 = arith.constant 0 : i32
    %c0_i32_0 = arith.constant 0 : i32
    %c0_i32_1 = arith.constant 0 : i32
    return %c0_i32, %c0_i32_0 : i32, i32
  }
  func.func @transform_4(%arg0: i32) -> (i32, i32) {
    %c0_i32 = arith.constant 0 : i32
    %c0_i32_0 = arith.constant 0 : i32
    %c0_i32_1 = arith.constant 0 : i32
    return %c0_i32, %c0_i32_0 : i32, i32
  }
  func.func @transform_5(%arg0: i32) -> (i32, i32) {
    %c0_i32 = arith.constant 0 : i32
    %c0_i32_0 = arith.constant 0 : i32
    %c0_i32_1 = arith.constant 0 : i32
    return %c0_i32, %c0_i32_0 : i32, i32
  }
  func.func @transform_6(%arg0: i32) -> (i32, i32) {
    %c0_i32 = arith.constant 0 : i32
    %c0_i32_0 = arith.constant 0 : i32
    %c0_i32_1 = arith.constant 0 : i32
    return %c0_i32, %c0_i32_0 : i32, i32
  }
  func.func @transform_7(%arg0: i32) -> (i32, i32, i32) {
    %c0_i32 = arith.constant 0 : i32
    %c0_i32_0 = arith.constant 0 : i32
    %c0_i32_1 = arith.constant 0 : i32
    return %arg0, %c0_i32, %c0_i32_0 : i32, i32, i32
  }
  func.func @transform_8(%arg0: i32) -> (i32, i32, i32) {
    %c0_i32 = arith.constant 0 : i32
    %0 = arith.subi %c0_i32, %arg0 : i32
    %c0_i32_0 = arith.constant 0 : i32
    %c0_i32_1 = arith.constant 0 : i32
    %c0_i32_2 = arith.constant 0 : i32
    return %0, %c0_i32_0, %c0_i32_1 : i32, i32, i32
  }
}

</mosaic_0001>

<llo_original>
// kernel: lstm_model_forward.3
$region0: #{lstm_model_forward.3}
  #allocation0 [shape = 'u32[]', space=smem, size = 0x4, offset = 0x4, fixed_abs, tag = 'smem constant byte address 0x4 - core index']
  #allocation1 [shape = 'u32[144,128]{1,0:T(1,128)}', space=vmem, size = 0x12000, scoped, tag = 'internal scratch']
  %s0 = inlined_call_operand.vmem [shape: bf16[16,32], index: 0, kind: input, shape index: {}]
  %s1 = inlined_call_operand.vmem [shape: bf16[16,32], index: 1, kind: input, shape index: {}]
  %s2 = inlined_call_operand.vmem [shape: bf16[32,128], index: 2, kind: input, shape index: {}]
  %s3 = inlined_call_operand.vmem [shape: bf16[32,128], index: 3, kind: input, shape index: {}]
  %s4 = inlined_call_operand.vmem [shape: f32[1,128], index: 4, kind: input, shape index: {}]
  %s5 = inlined_call_operand.vmem [shape: f32[16,128], index: 5, kind: output, shape index: {}]
  %s6 = sld [smem:[#allocation0]]
  $region30: #{lstm_model_forward.3} parent=0
    _
  %s8 = ssub.s32 1, %s6
  %s9 = scalar_select 0, %s8, %s6
  // Predicated region
  $region2: #{lstm_model_forward.3} parent=0 // pred_check
    _
  $region3: #{lstm_model_forward.3} parent=0 // pred_check_branch
    %11 = sbr.rel (0) target = $region5
  $region4: #{lstm_model_forward.3} parent=0 // pred_region
    _
  $region5: #{lstm_model_forward.3} parent=0 // pred_fallthru
    _
  // Predicated region
  $region6: #{lstm_model_forward.3} parent=0 // pred_check
    _
  $region7: #{lstm_model_forward.3} parent=0 // pred_check_branch
    %13 = sbr.rel (0) target = $region9
  $region8: #{lstm_model_forward.3} parent=0 // pred_region
    _
  $region9: #{lstm_model_forward.3} parent=0 // pred_fallthru
    _
  // Predicated region
  $region10: #{lstm_model_forward.3} parent=0 // pred_check
    _
  $region11: #{lstm_model_forward.3} parent=0 // pred_check_branch
    %15 = sbr.rel (0) target = $region13
  $region12: #{lstm_model_forward.3} parent=0 // pred_region
    _
  $region13: #{lstm_model_forward.3} parent=0 // pred_fallthru
    _
  // Predicated region
  $region14: #{lstm_model_forward.3} parent=0 // pred_check
    _
  $region15: #{lstm_model_forward.3} parent=0 // pred_check_branch
    %17 = sbr.rel (0) target = $region17
  $region16: #{lstm_model_forward.3} parent=0 // pred_region
    _
  $region17: #{lstm_model_forward.3} parent=0 // pred_fallthru
    _
  // Predicated region
  $region18: #{lstm_model_forward.3} parent=0 // pred_check
    _
  $region19: #{lstm_model_forward.3} parent=0 // pred_check_branch
    %19 = sbr.rel (0) target = $region21
  $region20: #{lstm_model_forward.3} parent=0 // pred_region
    _
  $region21: #{lstm_model_forward.3} parent=0 // pred_fallthru
    _
  %v21 = vld [vmem:[%s0] sm:$0xf]
  %v22 = vld [vmem:[%s0 + $0x4] sm:$0xf]
  %v23 = vld [vmem:[%s2] sm:$0xf]
  %v24 = vld [vmem:[%s2 + $0x4] sm:$0xf]
  %v25 = vld [vmem:[%s2 + $0x8] sm:$0xf]
  %v26 = vld [vmem:[%s2 + $0xc] sm:$0xf]
  %v27 = vld [vmem:[%s1] sm:$0xf]
  %v28 = vld [vmem:[%s1 + $0x4] sm:$0xf]
  %v29 = vld [vmem:[%s3] sm:$0xf]
  %v30 = vld [vmem:[%s3 + $0x4] sm:$0xf]
  %v31 = vld [vmem:[%s3 + $0x8] sm:$0xf]
  %v32 = vld [vmem:[%s3 + $0xc] sm:$0xf]
  %v35 = vunpack.c.l.b16 %v27
  %v36 = vunpack.c.l.b16 %v28
  %v37 = vpack.c.b16 %v36, %v35
  %v42 = vunpack.c.l.b16 %v29
  %v43 = vunpack.c.l.b16 %v30
  %v44 = vunpack.c.l.b16 %v31
  %v45 = vunpack.c.l.b16 %v32
  %v46 = vpack.c.b16 %v43, %v42
  %v47 = vpack.c.b16 %v45, %v44
  %vm50 = vcmask 261120
  %v52 = vsel %vm50, %v37, 0
  %54 = vmatprep.subr.bf16.mxu0 0
  %55 = vmatpush1.bf16.msra.mxu0 %v46
  %56 = vmatprep.subr.bf16.mxu0 0
  %57 = vmatpush1.bf16.msra.mxu0 %v47
  %58 = vmatprep.subr.bf16.mxu0 0
  %59 = vmatpush1.bf16.msra.mxu0 0
  %60 = vmatprep.subr.bf16.mxu0 0
  %61 = vmatpush1.bf16.msra.mxu0 0
  %62 = vmatprep.subr.bf16.mxu0 0
  %63 = vmatpush1.bf16.msra.mxu0 0
  %64 = vmatprep.subr.bf16.mxu0 0
  %65 = vmatpush1.bf16.msra.mxu0 0
  %66 = vmatprep.subr.bf16.mxu0 0
  %67 = vmatpush1.bf16.msra.mxu0 0
  %68 = vmatprep.subr.bf16.mxu0 0
  %69 = vmatpush1.bf16.msra.mxu0 0
  %70 = vmatprep.subr.bf16.mxu0 0
  %71 = vmatpush1.bf16.msra.mxu0 0
  %72 = vmatprep.subr.bf16.mxu0 0
  %73 = vmatpush1.bf16.msra.mxu0 0
  %74 = vmatprep.subr.bf16.mxu0 0
  %75 = vmatpush1.bf16.msra.mxu0 0
  %76 = vmatprep.subr.bf16.mxu0 0
  %77 = vmatpush1.bf16.msra.mxu0 0
  %78 = vmatprep.subr.bf16.mxu0 0
  %79 = vmatpush1.bf16.msra.mxu0 0
  %80 = vmatprep.subr.bf16.mxu0 0
  %81 = vmatpush1.bf16.msra.mxu0 0
  %82 = vmatprep.subr.bf16.mxu0 0
  %83 = vmatpush1.bf16.msra.mxu0 0
  %84 = vmatprep.subr.bf16.mxu0 0
  %85 = vmatpush1.bf16.msra.mxu0 0
  %86 = vmatprep.mubr.bf16.mxu0 0
  %87 = vmatmul.mubr.bf16.gmra.mrb[0].mxu0 %v52
  %v88 = vpop.f32.mrb[0].mxu0
  %v89 = vadd.f32 0.0, %v88
  %v90 = vpop.f32.mrb[0].mxu0
  %v91 = vpop.f32.mrb[0].mxu0
  %v92 = vadd.f32 0.0, %v91
  %v93 = vpop.f32.mrb[0].mxu0
  %94 = vdwg.mxu0
  %v97 = vunpack.c.l.b16 %v21
  %v98 = vunpack.c.l.b16 %v22
  %v99 = vpack.c.b16 %v98, %v97
  %v104 = vunpack.c.l.b16 %v23
  %v105 = vunpack.c.l.b16 %v24
  %v106 = vunpack.c.l.b16 %v25
  %v107 = vunpack.c.l.b16 %v26
  %v108 = vpack.c.b16 %v105, %v104
  %v109 = vpack.c.b16 %v107, %v106
  %v113 = vsel %vm50, %v99, 0
  %115 = vmatprep.subr.bf16.mxu0 0
  %116 = vmatpush1.bf16.msra.mxu0 %v108
  %117 = vmatprep.subr.bf16.mxu0 0
  %118 = vmatpush1.bf16.msra.mxu0 %v109
  %119 = vmatprep.subr.bf16.mxu0 0
  %120 = vmatpush1.bf16.msra.mxu0 0
  %121 = vmatprep.subr.bf16.mxu0 0
  %122 = vmatpush1.bf16.msra.mxu0 0
  %123 = vmatprep.subr.bf16.mxu0 0
  %124 = vmatpush1.bf16.msra.mxu0 0
  %125 = vmatprep.subr.bf16.mxu0 0
  %126 = vmatpush1.bf16.msra.mxu0 0
  %127 = vmatprep.subr.bf16.mxu0 0
  %128 = vmatpush1.bf16.msra.mxu0 0
  %129 = vmatprep.subr.bf16.mxu0 0
  %130 = vmatpush1.bf16.msra.mxu0 0
  %131 = vmatprep.subr.bf16.mxu0 0
  %132 = vmatpush1.bf16.msra.mxu0 0
  %133 = vmatprep.subr.bf16.mxu0 0
  %134 = vmatpush1.bf16.msra.mxu0 0
  %135 = vmatprep.subr.bf16.mxu0 0
  %136 = vmatpush1.bf16.msra.mxu0 0
  %137 = vmatprep.subr.bf16.mxu0 0
  %138 = vmatpush1.bf16.msra.mxu0 0
  %139 = vmatprep.subr.bf16.mxu0 0
  %140 = vmatpush1.bf16.msra.mxu0 0
  %141 = vmatprep.subr.bf16.mxu0 0
  %142 = vmatpush1.bf16.msra.mxu0 0
  %143 = vmatprep.subr.bf16.mxu0 0
  %144 = vmatpush1.bf16.msra.mxu0 0
  %145 = vmatprep.subr.bf16.mxu0 0
  %146 = vmatpush1.bf16.msra.mxu0 0
  %147 = vmatprep.mubr.bf16.mxu0 0
  %148 = vmatmul.mubr.bf16.gmra.mrb[0].mxu0 %v113
  %v149 = vpop.f32.mrb[0].mxu0
  %v150 = vadd.f32 %v89, %v149
  %v151 = vpop.f32.mrb[0].mxu0
  %v152 = vpop.f32.mrb[0].mxu0
  %v153 = vadd.f32 %v92, %v152
  %v154 = vpop.f32.mrb[0].mxu0
  %155 = vdwg.mxu0
  %v156 = vld [vmem:[%s4] sm:$0x1]
  %v158 = vlaneseq
  %v159 = vshrl.u32 %v158, 7
  %v160 = vsub.s32 0, %v159
  %v161 = vrot.slane %v156, %v160
  %v163 = vadd.f32 %v150, %v161
  %v164 = vadd.f32 %v153, %v161
  %165 = vmax.xlane.f32.xlu0 %v163
  %v166 = vpop.xlane.xlu0 %165
  %167 = vmax.xlane.f32.xlu0 %v164
  %v168 = vpop.xlane.xlu0 %167
  %v169 = vsub.f32 %v163, %v166
  %v170 = vsub.f32 %v164, %v168
  %v171 = vmul.f32 %v169, 1.442695
  %v172 = vpow.pop %v171
  %v173 = vmul.f32 %v170, 1.442695
  %v174 = vpow.pop %v173
  %175 = vadd.xlane.f32.xlu0 %v172
  %v176 = vpop.xlane.xlu0 %175
  %177 = vadd.xlane.f32.xlu0 %v174
  %v178 = vpop.xlane.xlu0 %177
  %v179 = vrcp.pop %v176
  %v180 = vrcp.pop %v178
  %v181 = vmul.f32 %v172, %v179
  %v182 = vmul.f32 %v174, %v180
  %183 = vst [vmem:[%s5] sm:$0xff] %v181
  %184 = vst [vmem:[%s5 + $0x8] sm:$0xff] %v182
  // Predicated region
  $region22: #{lstm_model_forward.3} parent=0 // pred_check
    _
  $region23: #{lstm_model_forward.3} parent=0 // pred_check_branch
    %186 = sbr.rel (0) target = $region25
  $region24: #{lstm_model_forward.3} parent=0 // pred_region
    _
  $region25: #{lstm_model_forward.3} parent=0 // pred_fallthru
    _
  // Predicated region
  $region26: #{lstm_model_forward.3} parent=0 // pred_check
    _
  $region27: #{lstm_model_forward.3} parent=0 // pred_check_branch
    %188 = sbr.rel (0) target = $region29
  $region28: #{lstm_model_forward.3} parent=0 // pred_region
    _
  $region29: #{lstm_model_forward.3} parent=0 // pred_fallthru
    _

// kernel: lstm_model_forward.2
$region0: #{lstm_model_forward.2}
  #allocation0 [shape = 'u32[]', space=smem, size = 0x4, offset = 0x4, fixed_abs, tag = 'smem constant byte address 0x4 - core index']
  #allocation1 [shape = 'u32[144,128]{1,0:T(1,128)}', space=vmem, size = 0x12000, scoped, tag = 'internal scratch']
  #allocation2 [shape = 'f32[8,2,128]{2,1,0:T(2,128)}', space=vmem, size = 0x2000, scoped, tag = 'scratch operand']
  #allocation3 [shape = 'f32[8,2,128]{2,1,0:T(2,128)}', space=vmem, size = 0x2000, scoped, tag = 'scratch operand']
  #allocation4 [shape = 'f32[2,64]{1,0:T(2,128)}', space=vmem, size = 0x400, scoped, tag = 'scratch operand']
  #allocation5 [shape = 'f32[2,32]{1,0:T(2,128)}', space=vmem, size = 0x400, scoped, tag = 'scratch operand']
  #allocation6 [shape = 'f32[2,32]{1,0:T(2,128)}', space=vmem, size = 0x400, scoped, tag = 'scratch operand']
  %s0 = inlined_call_operand.vmem [shape: bf16[8,2,32], index: 0, kind: input, shape index: {}, may-alias: {0,1}]
  %s1 = inlined_call_operand.vmem [shape: bf16[8,2,32], index: 1, kind: input, shape index: {}, may-alias: {0,1}]
  %s2 = inlined_call_operand.vmem [shape: bf16[32,128], index: 2, kind: input, shape index: {}]
  %s3 = inlined_call_operand.vmem [shape: bf16[32,128], index: 3, kind: input, shape index: {}]
  %s4 = inlined_call_operand.vmem [shape: f32[1,128], index: 4, kind: input, shape index: {}]
  %s5 = inlined_call_operand.vmem [shape: f32[1,128], index: 5, kind: input, shape index: {}]
  %s6 = inlined_call_operand.vmem [shape: bf16[64,256], index: 6, kind: input, shape index: {}]
  %s7 = inlined_call_operand.vmem [shape: bf16[8,2,32], index: 7, kind: output, shape index: {0}]
  %s8 = inlined_call_operand.vmem [shape: bf16[8,2,32], index: 8, kind: output, shape index: {1}]
  %9 = xla_tuple %s7, %s8
  %s10 = sld [smem:[#allocation0]]
  $region50: #{lstm_model_forward.2} parent=0
    _
  %s12 = ssub.s32 1, %s10
  %s13 = scalar_select 0, %s12, %s10
  // Predicated region
  $region2: #{lstm_model_forward.2} parent=0 // pred_check
    _
  $region3: #{lstm_model_forward.2} parent=0 // pred_check_branch
    %15 = sbr.rel (0) target = $region5
  $region4: #{lstm_model_forward.2} parent=0 // pred_region
    _
  $region5: #{lstm_model_forward.2} parent=0 // pred_fallthru
    _
  // Predicated region
  $region6: #{lstm_model_forward.2} parent=0 // pred_check
    _
  $region7: #{lstm_model_forward.2} parent=0 // pred_check_branch
    %17 = sbr.rel (0) target = $region9
  $region8: #{lstm_model_forward.2} parent=0 // pred_region
    %s18 = ssub.s32 0, 0
    %s19 = smul.u32 8, %s18
    %p20 = scmp.lt.s32.totalorder %s19, 7
    %s21 = scalar_select %p20, %s19, 7
    %s22 = scalar_lea.vmem %s1, %s21
    %s23 = ssub.s32 0, 0
    %s24 = smul.u32 8, %s23
  $region9: #{lstm_model_forward.2} parent=0 // pred_fallthru
    _
  // Predicated region
  $region10: #{lstm_model_forward.2} parent=0 // pred_check
    _
  $region11: #{lstm_model_forward.2} parent=0 // pred_check_branch
    %26 = sbr.rel (0) target = $region13
  $region12: #{lstm_model_forward.2} parent=0 // pred_region
    _
  $region13: #{lstm_model_forward.2} parent=0 // pred_fallthru
    _
  // Predicated region
  $region14: #{lstm_model_forward.2} parent=0 // pred_check
    _
  $region15: #{lstm_model_forward.2} parent=0 // pred_check_branch
    %28 = sbr.rel (0) target = $region17
  $region16: #{lstm_model_forward.2} parent=0 // pred_region
    _
  $region17: #{lstm_model_forward.2} parent=0 // pred_fallthru
    _
  // Predicated region
  $region18: #{lstm_model_forward.2} parent=0 // pred_check
    _
  $region19: #{lstm_model_forward.2} parent=0 // pred_check_branch
    %30 = sbr.rel (0) target = $region21
  $region20: #{lstm_model_forward.2} parent=0 // pred_region
    _
  $region21: #{lstm_model_forward.2} parent=0 // pred_fallthru
    _
  // Predicated region
  $region22: #{lstm_model_forward.2} parent=0 // pred_check
    _
  $region23: #{lstm_model_forward.2} parent=0 // pred_check_branch
    %32 = sbr.rel (0) target = $region25
  $region24: #{lstm_model_forward.2} parent=0 // pred_region
    _
  $region25: #{lstm_model_forward.2} parent=0 // pred_fallthru
    _
  // Predicated region
  $region26: #{lstm_model_forward.2} parent=0 // pred_check
    _
  $region27: #{lstm_model_forward.2} parent=0 // pred_check_branch
    %34 = sbr.rel (0) target = $region29
  $region28: #{lstm_model_forward.2} parent=0 // pred_region
    _
  $region29: #{lstm_model_forward.2} parent=0 // pred_fallthru
    _
  %s35 = ssub.s32 0, 0
  %s36 = smul.u32 8, %s35
  %p37 = scmp.lt.s32.totalorder %s36, 7
  %s38 = scalar_select %p37, %s36, 7
  %s39 = scalar_lea.vmem %s1, %s38
  %s40 = ssub.s32 0, 0
  %s41 = smul.u32 8, %s40
  %p42 = scmp.lt.s32.totalorder %s41, 7
  %s43 = scalar_select %p42, %s41, 7
  %s44 = scalar_lea.vmem %s8, %s43
  %s45 = ssub.s32 0, 0
  %s46 = smul.u32 8, %s45
  %p47 = scmp.lt.s32.totalorder %s46, 7
  %s48 = scalar_select %p47, %s46, 7
  %s49 = scalar_lea.vmem %s1, %s48
  %s50 = ssub.s32 0, 0
  %s51 = smul.u32 8, %s50
  %s52 = ssub.s32 0, 0
  %s53 = smul.u32 8, %s52
  %p54 = scmp.lt.s32.totalorder %s53, 7
  %s55 = scalar_select %p54, %s53, 7
  %s56 = scalar_lea.vmem %s8, %s55
  %s57 = ssub.s32 0, 0
  %s58 = smul.u32 8, %s57
  %p60 = scmp.eq.s32.totalorder 0, 0
  // Predicated region
  $region30: #{lstm_model_forward.2} parent=0 // pred_check
    %p61 = pneg %p60
  $region31: #{lstm_model_forward.2} parent=0 // pred_check_branch
    %63 = sbr.rel (%p61) target = $region33
  $region32: #{lstm_model_forward.2} parent=0 // pred_region
    %vm64 = vcmask 517120
    %65 = vst.msk [vmem:[#allocation4] sm:$0x3] %vm64, 0.0
    %vm66 = vcmask 254976
    %67 = vst.msk [vmem:[#allocation5] sm:$0x3] %vm66, 0.0
    %68 = vst.msk [vmem:[#allocation6] sm:$0x3] %vm66, 0.0
  $region33: #{lstm_model_forward.2} parent=0 // pred_fallthru
    _
  %v69 = vld [vmem:[%s0] sm:$0x1]
  %v70 = vld [vmem:[%s0 + $0x1] sm:$0x1]
  %v71 = vld [vmem:[%s0 + $0x2] sm:$0x1]
  %v72 = vld [vmem:[%s0 + $0x3] sm:$0x1]
  %v73 = vld [vmem:[%s0 + $0x4] sm:$0x1]
  %v74 = vld [vmem:[%s0 + $0x5] sm:$0x1]
  %v75 = vld [vmem:[%s0 + $0x6] sm:$0x1]
  %v76 = vld [vmem:[%s0 + $0x7] sm:$0x1]
  %v77 = vld [vmem:[%s49] sm:$0x1]
  %v78 = vld [vmem:[%s49 + $0x1] sm:$0x1]
  %v79 = vld [vmem:[%s49 + $0x2] sm:$0x1]
  %v80 = vld [vmem:[%s49 + $0x3] sm:$0x1]
  %v81 = vld [vmem:[%s49 + $0x4] sm:$0x1]
  %v82 = vld [vmem:[%s49 + $0x5] sm:$0x1]
  %v83 = vld [vmem:[%s49 + $0x6] sm:$0x1]
  %v84 = vld [vmem:[%s49 + $0x7] sm:$0x1]
  %v85 = vld [vmem:[%s2] sm:$0xf]
  %v86 = vld [vmem:[%s2 + $0x4] sm:$0xf]
  %v87 = vld [vmem:[%s2 + $0x8] sm:$0xf]
  %v88 = vld [vmem:[%s2 + $0xc] sm:$0xf]
  %v89 = vld [vmem:[%s4] sm:$0x1]
  %v91 = vlaneseq
  %v92 = vshrl.u32 %v91, 7
  %v93 = vsub.s32 0, %v92
  %v94 = vrot.slane %v89, %v93
  %v104 = vcombine.low %v69, %v70
  %v105 = vcombine.low %v71, %v72
  %v106 = vcombine.low %v73, %v74
  %v107 = vcombine.low %v75, %v76
  %v109 = vunpack.c.l.s4 1966171168
  %v110 = vunpack.c.0.s8 %v109
  %v111 = vlaneseq
  %v112 = vshrl.u32 %v111, 7
  %v113 = vsub.s32 %v110, %v112
  %v114 = vrot.slane %v104, %v113
  %v116 = vunpack.c.l.s4 1966171168
  %v117 = vunpack.c.0.s8 %v116
  %v118 = vlaneseq
  %v119 = vshrl.u32 %v118, 7
  %v120 = vsub.s32 %v117, %v119
  %v121 = vrot.slane %v105, %v120
  %v123 = vunpack.c.l.s4 1966171168
  %v124 = vunpack.c.0.s8 %v123
  %v125 = vlaneseq
  %v126 = vshrl.u32 %v125, 7
  %v127 = vsub.s32 %v124, %v126
  %v128 = vrot.slane %v106, %v127
  %v130 = vunpack.c.l.s4 1966171168
  %v131 = vunpack.c.0.s8 %v130
  %v132 = vlaneseq
  %v133 = vshrl.u32 %v132, 7
  %v134 = vsub.s32 %v131, %v133
  %v135 = vrot.slane %v107, %v134
  %v136 = vcombine.low %v114, %v121
  %v137 = vcombine.low %v128, %v135
  %v139 = vunpack.c.l.s4 1966171168
  %v140 = vunpack.c.0.s8 %v139
  %v141 = vlaneseq
  %v142 = vshrl.u32 %v141, 7
  %v143 = vsub.s32 %v140, %v142
  %v144 = vrot.slane %v136, %v143
  %v146 = vunpack.c.l.s4 1966171168
  %v147 = vunpack.c.0.s8 %v146
  %v148 = vlaneseq
  %v149 = vshrl.u32 %v148, 7
  %v150 = vsub.s32 %v147, %v149
  %v151 = vrot.slane %v137, %v150
  %v152 = vcombine.low %v144, %v151
  %v157 = vunpack.c.l.b16 %v85
  %v158 = vunpack.c.l.b16 %v86
  %v159 = vunpack.c.l.b16 %v87
  %v160 = vunpack.c.l.b16 %v88
  %v161 = vpack.c.b16 %v158, %v157
  %v162 = vpack.c.b16 %v160, %v159
  %vm165 = vcmask 261120
  %v167 = vsel %vm165, %v152, 0
  %169 = vmatprep.subr.bf16.mxu0 0
  %170 = vmatpush1.bf16.msra.mxu0 %v161
  %171 = vmatprep.subr.bf16.mxu0 0
  %172 = vmatpush1.bf16.msra.mxu0 %v162
  %173 = vmatprep.subr.bf16.mxu0 0
  %174 = vmatpush1.bf16.msra.mxu0 0
  %175 = vmatprep.subr.bf16.mxu0 0
  %176 = vmatpush1.bf16.msra.mxu0 0
  %177 = vmatprep.subr.bf16.mxu0 0
  %178 = vmatpush1.bf16.msra.mxu0 0
  %179 = vmatprep.subr.bf16.mxu0 0
  %180 = vmatpush1.bf16.msra.mxu0 0
  %181 = vmatprep.subr.bf16.mxu0 0
  %182 = vmatpush1.bf16.msra.mxu0 0
  %183 = vmatprep.subr.bf16.mxu0 0
  %184 = vmatpush1.bf16.msra.mxu0 0
  %185 = vmatprep.subr.bf16.mxu0 0
  %186 = vmatpush1.bf16.msra.mxu0 0
  %187 = vmatprep.subr.bf16.mxu0 0
  %188 = vmatpush1.bf16.msra.mxu0 0
  %189 = vmatprep.subr.bf16.mxu0 0
  %190 = vmatpush1.bf16.msra.mxu0 0
  %191 = vmatprep.subr.bf16.mxu0 0
  %192 = vmatpush1.bf16.msra.mxu0 0
  %193 = vmatprep.subr.bf16.mxu0 0
  %194 = vmatpush1.bf16.msra.mxu0 0
  %195 = vmatprep.subr.bf16.mxu0 0
  %196 = vmatpush1.bf16.msra.mxu0 0
  %197 = vmatprep.subr.bf16.mxu0 0
  %198 = vmatpush1.bf16.msra.mxu0 0
  %199 = vmatprep.subr.bf16.mxu0 0
  %200 = vmatpush1.bf16.msra.mxu0 0
  %201 = vmatprep.mubr.bf16.mxu0 0
  %202 = vmatmul.mubr.bf16.gmra.mrb[0].mxu0 %v167
  %v203 = vpop.f32.mrb[0].mxu0
  %v204 = vadd.f32 %v94, %v203
  %v205 = vpop.f32.mrb[0].mxu0
  %v206 = vpop.f32.mrb[0].mxu0
  %v207 = vadd.f32 %v94, %v206
  %v208 = vpop.f32.mrb[0].mxu0
  %209 = vdwg.mxu0
  %v212 = vcombine.high %v204, %v204
  %v214 = vunpack.c.l.s4 1983009808
  %v215 = vunpack.c.0.s8 %v214
  %v216 = vlaneseq
  %v217 = vshrl.u32 %v216, 7
  %v218 = vsub.s32 %v215, %v217
  %v219 = vrot.slane %v204, %v218
  %v221 = vunpack.c.l.s4 1983009808
  %v222 = vunpack.c.0.s8 %v221
  %v223 = vlaneseq
  %v224 = vshrl.u32 %v223, 7
  %v225 = vsub.s32 %v222, %v224
  %v226 = vrot.slane %v212, %v225
  %v227 = vcombine.high %v219, %v219
  %v228 = vcombine.high %v226, %v226
  %v229 = vcombine.high %v207, %v207
  %v231 = vunpack.c.l.s4 1983009808
  %v232 = vunpack.c.0.s8 %v231
  %v233 = vlaneseq
  %v234 = vshrl.u32 %v233, 7
  %v235 = vsub.s32 %v232, %v234
  %v236 = vrot.slane %v207, %v235
  %v238 = vunpack.c.l.s4 1983009808
  %v239 = vunpack.c.0.s8 %v238
  %v240 = vlaneseq
  %v241 = vshrl.u32 %v240, 7
  %v242 = vsub.s32 %v239, %v241
  %v243 = vrot.slane %v229, %v242
  %v244 = vcombine.high %v236, %v236
  %v245 = vcombine.high %v243, %v243
  %254 = vst [vmem:[#allocation2] sm:$0x3] %v219
  %255 = vst [vmem:[#allocation2 + $0x2] sm:$0x3] %v227
  %256 = vst [vmem:[#allocation2 + $0x4] sm:$0x3] %v226
  %257 = vst [vmem:[#allocation2 + $0x6] sm:$0x3] %v228
  %258 = vst [vmem:[#allocation2 + $0x8] sm:$0x3] %v236
  %259 = vst [vmem:[#allocation2 + $0xa] sm:$0x3] %v244
  %260 = vst [vmem:[#allocation2 + $0xc] sm:$0x3] %v243
  %261 = vst [vmem:[#allocation2 + $0xe] sm:$0x3] %v245
  %v262 = vld [vmem:[%s3] sm:$0xf]
  %v263 = vld [vmem:[%s3 + $0x4] sm:$0xf]
  %v264 = vld [vmem:[%s3 + $0x8] sm:$0xf]
  %v265 = vld [vmem:[%s3 + $0xc] sm:$0xf]
  %v266 = vld [vmem:[%s5] sm:$0x1]
  %v268 = vlaneseq
  %v269 = vshrl.u32 %v268, 7
  %v270 = vsub.s32 0, %v269
  %v271 = vrot.slane %v266, %v270
  %v281 = vcombine.low %v77, %v78
  %v282 = vcombine.low %v79, %v80
  %v283 = vcombine.low %v81, %v82
  %v284 = vcombine.low %v83, %v84
  %v286 = vunpack.c.l.s4 1966171168
  %v287 = vunpack.c.0.s8 %v286
  %v288 = vlaneseq
  %v289 = vshrl.u32 %v288, 7
  %v290 = vsub.s32 %v287, %v289
  %v291 = vrot.slane %v281, %v290
  %v293 = vunpack.c.l.s4 1966171168
  %v294 = vunpack.c.0.s8 %v293
  %v295 = vlaneseq
  %v296 = vshrl.u32 %v295, 7
  %v297 = vsub.s32 %v294, %v296
  %v298 = vrot.slane %v282, %v297
  %v300 = vunpack.c.l.s4 1966171168
  %v301 = vunpack.c.0.s8 %v300
  %v302 = vlaneseq
  %v303 = vshrl.u32 %v302, 7
  %v304 = vsub.s32 %v301, %v303
  %v305 = vrot.slane %v283, %v304
  %v307 = vunpack.c.l.s4 1966171168
  %v308 = vunpack.c.0.s8 %v307
  %v309 = vlaneseq
  %v310 = vshrl.u32 %v309, 7
  %v311 = vsub.s32 %v308, %v310
  %v312 = vrot.slane %v284, %v311
  %v313 = vcombine.low %v291, %v298
  %v314 = vcombine.low %v305, %v312
  %v316 = vunpack.c.l.s4 1966171168
  %v317 = vunpack.c.0.s8 %v316
  %v318 = vlaneseq
  %v319 = vshrl.u32 %v318, 7
  %v320 = vsub.s32 %v317, %v319
  %v321 = vrot.slane %v313, %v320
  %v323 = vunpack.c.l.s4 1966171168
  %v324 = vunpack.c.0.s8 %v323
  %v325 = vlaneseq
  %v326 = vshrl.u32 %v325, 7
  %v327 = vsub.s32 %v324, %v326
  %v328 = vrot.slane %v314, %v327
  %v329 = vcombine.low %v321, %v328
  %v334 = vunpack.c.l.b16 %v262
  %v335 = vunpack.c.l.b16 %v263
  %v336 = vunpack.c.l.b16 %v264
  %v337 = vunpack.c.l.b16 %v265
  %v338 = vpack.c.b16 %v335, %v334
  %v339 = vpack.c.b16 %v337, %v336
  %v343 = vsel %vm165, %v329, 0
  %345 = vmatprep.subr.bf16.mxu0 0
  %346 = vmatpush1.bf16.msra.mxu0 %v338
  %347 = vmatprep.subr.bf16.mxu0 0
  %348 = vmatpush1.bf16.msra.mxu0 %v339
  %349 = vmatprep.subr.bf16.mxu0 0
  %350 = vmatpush1.bf16.msra.mxu0 0
  %351 = vmatprep.subr.bf16.mxu0 0
  %352 = vmatpush1.bf16.msra.mxu0 0
  %353 = vmatprep.subr.bf16.mxu0 0
  %354 = vmatpush1.bf16.msra.mxu0 0
  %355 = vmatprep.subr.bf16.mxu0 0
  %356 = vmatpush1.bf16.msra.mxu0 0
  %357 = vmatprep.subr.bf16.mxu0 0
  %358 = vmatpush1.bf16.msra.mxu0 0
  %359 = vmatprep.subr.bf16.mxu0 0
  %360 = vmatpush1.bf16.msra.mxu0 0
  %361 = vmatprep.subr.bf16.mxu0 0
  %362 = vmatpush1.bf16.msra.mxu0 0
  %363 = vmatprep.subr.bf16.mxu0 0
  %364 = vmatpush1.bf16.msra.mxu0 0
  %365 = vmatprep.subr.bf16.mxu0 0
  %366 = vmatpush1.bf16.msra.mxu0 0
  %367 = vmatprep.subr.bf16.mxu0 0
  %368 = vmatpush1.bf16.msra.mxu0 0
  %369 = vmatprep.subr.bf16.mxu0 0
  %370 = vmatpush1.bf16.msra.mxu0 0
  %371 = vmatprep.subr.bf16.mxu0 0
  %372 = vmatpush1.bf16.msra.mxu0 0
  %373 = vmatprep.subr.bf16.mxu0 0
  %374 = vmatpush1.bf16.msra.mxu0 0
  %375 = vmatprep.subr.bf16.mxu0 0
  %376 = vmatpush1.bf16.msra.mxu0 0
  %377 = vmatprep.mubr.bf16.mxu0 0
  %378 = vmatmul.mubr.bf16.gmra.mrb[0].mxu0 %v343
  %v379 = vpop.f32.mrb[0].mxu0
  %v380 = vadd.f32 %v271, %v379
  %v381 = vpop.f32.mrb[0].mxu0
  %v382 = vpop.f32.mrb[0].mxu0
  %v383 = vadd.f32 %v271, %v382
  %v384 = vpop.f32.mrb[0].mxu0
  %385 = vdwg.mxu0
  %v388 = vcombine.high %v380, %v380
  %v390 = vunpack.c.l.s4 1983009808
  %v391 = vunpack.c.0.s8 %v390
  %v392 = vlaneseq
  %v393 = vshrl.u32 %v392, 7
  %v394 = vsub.s32 %v391, %v393
  %v395 = vrot.slane %v380, %v394
  %v397 = vunpack.c.l.s4 1983009808
  %v398 = vunpack.c.0.s8 %v397
  %v399 = vlaneseq
  %v400 = vshrl.u32 %v399, 7
  %v401 = vsub.s32 %v398, %v400
  %v402 = vrot.slane %v388, %v401
  %v403 = vcombine.high %v395, %v395
  %v404 = vcombine.high %v402, %v402
  %v405 = vcombine.high %v383, %v383
  %v407 = vunpack.c.l.s4 1983009808
  %v408 = vunpack.c.0.s8 %v407
  %v409 = vlaneseq
  %v410 = vshrl.u32 %v409, 7
  %v411 = vsub.s32 %v408, %v410
  %v412 = vrot.slane %v383, %v411
  %v414 = vunpack.c.l.s4 1983009808
  %v415 = vunpack.c.0.s8 %v414
  %v416 = vlaneseq
  %v417 = vshrl.u32 %v416, 7
  %v418 = vsub.s32 %v415, %v417
  %v419 = vrot.slane %v405, %v418
  %v420 = vcombine.high %v412, %v412
  %v421 = vcombine.high %v419, %v419
  %430 = vst [vmem:[#allocation3] sm:$0x3] %v395
  %431 = vst [vmem:[#allocation3 + $0x2] sm:$0x3] %v403
  %432 = vst [vmem:[#allocation3 + $0x4] sm:$0x3] %v402
  %433 = vst [vmem:[#allocation3 + $0x6] sm:$0x3] %v404
  %434 = vst [vmem:[#allocation3 + $0x8] sm:$0x3] %v412
  %435 = vst [vmem:[#allocation3 + $0xa] sm:$0x3] %v420
  %436 = vst [vmem:[#allocation3 + $0xc] sm:$0x3] %v419
  %437 = vst [vmem:[#allocation3 + $0xe] sm:$0x3] %v421
  %v438 = vld [vmem:[%s6] sm:$0xff]
  %v439 = vld [vmem:[%s6 + $0x8] sm:$0xff]
  %v440 = vld [vmem:[%s6 + $0x10] sm:$0xff]
  %v441 = vld [vmem:[%s6 + $0x18] sm:$0xff]
  %v442 = vld [vmem:[%s6 + $0x20] sm:$0xff]
  %v443 = vld [vmem:[%s6 + $0x28] sm:$0xff]
  %v444 = vld [vmem:[%s6 + $0x30] sm:$0xff]
  %v445 = vld [vmem:[%s6 + $0x38] sm:$0xff]
  %v446 = vlaneseq
  %v447 = vand.u32 %v446, 127
  %vm448 = vcmp.ge.s32.totalorder %v447, 64
  %vm449 = vcmp.lt.s32.totalorder %v447, 96
  %vm450 = vmand %vm448, %vm449
  %v451 = vld [vmem:[#allocation4] sm:$0x3]
  %v452 = vpack.c.bf16 %v451, %v451
  %v461 = vunpack.c.l.b16 %v438
  %v462 = vunpack.c.h.b16 %v438
  %v463 = vunpack.c.l.b16 %v439
  %v464 = vunpack.c.h.b16 %v439
  %v465 = vunpack.c.l.b16 %v440
  %v466 = vunpack.c.h.b16 %v440
  %v467 = vunpack.c.l.b16 %v441
  %v468 = vunpack.c.h.b16 %v441
  %v469 = vunpack.c.l.b16 %v442
  %v470 = vunpack.c.h.b16 %v442
  %v471 = vunpack.c.l.b16 %v443
  %v472 = vunpack.c.h.b16 %v443
  %v473 = vunpack.c.l.b16 %v444
  %v474 = vunpack.c.h.b16 %v444
  %v475 = vunpack.c.l.b16 %v445
  %v476 = vunpack.c.h.b16 %v445
  %v477 = vpack.c.b16 %v463, %v461
  %v478 = vpack.c.b16 %v464, %v462
  %v479 = vpack.c.b16 %v467, %v465
  %v480 = vpack.c.b16 %v468, %v466
  %v481 = vpack.c.b16 %v471, %v469
  %v482 = vpack.c.b16 %v472, %v470
  %v483 = vpack.c.b16 %v475, %v473
  %v484 = vpack.c.b16 %v476, %v474
  %vm493 = vcmask 523264
  %v495 = vsel %vm493, %v452, 0
  %497 = vmatprep.subr.bf16.mxu0 %v478
  %498 = vmatpush1.bf16.msra.mxu0 %v477
  %499 = vmatprep.subr.bf16.mxu0 %v480
  %500 = vmatpush1.bf16.msra.mxu0 %v479
  %501 = vmatprep.subr.bf16.mxu0 %v482
  %502 = vmatpush1.bf16.msra.mxu0 %v481
  %503 = vmatprep.subr.bf16.mxu0 %v484
  %504 = vmatpush1.bf16.msra.mxu0 %v483
  %505 = vmatprep.subr.bf16.mxu0 0
  %506 = vmatpush1.bf16.msra.mxu0 0
  %507 = vmatprep.subr.bf16.mxu0 0
  %508 = vmatpush1.bf16.msra.mxu0 0
  %509 = vmatprep.subr.bf16.mxu0 0
  %510 = vmatpush1.bf16.msra.mxu0 0
  %511 = vmatprep.subr.bf16.mxu0 0
  %512 = vmatpush1.bf16.msra.mxu0 0
  %513 = vmatprep.subr.bf16.mxu0 0
  %514 = vmatpush1.bf16.msra.mxu0 0
  %515 = vmatprep.subr.bf16.mxu0 0
  %516 = vmatpush1.bf16.msra.mxu0 0
  %517 = vmatprep.subr.bf16.mxu0 0
  %518 = vmatpush1.bf16.msra.mxu0 0
  %519 = vmatprep.subr.bf16.mxu0 0
  %520 = vmatpush1.bf16.msra.mxu0 0
  %521 = vmatprep.subr.bf16.mxu0 0
  %522 = vmatpush1.bf16.msra.mxu0 0
  %523 = vmatprep.subr.bf16.mxu0 0
  %524 = vmatpush1.bf16.msra.mxu0 0
  %525 = vmatprep.subr.bf16.mxu0 0
  %526 = vmatpush1.bf16.msra.mxu0 0
  %527 = vmatprep.subr.bf16.mxu0 0
  %528 = vmatpush1.bf16.msra.mxu0 0
  %529 = vmatprep.mubr.bf16.mxu0 0
  %530 = vmatmul.mubr.bf16.gmra.mrb[0].mxu0 %v495
  %v531 = vpop.f32.mrb[0].mxu0
  %v532 = vadd.f32 0.0, %v531
  %v533 = vpop.f32.mrb[0].mxu0
  %v534 = vadd.f32 0.0, %v533
  %v535 = vpop.f32.mrb[0].mxu0
  %v536 = vpop.f32.mrb[0].mxu0
  %537 = vdwg.mxu0
  %v538 = vld [vmem:[#allocation2] sm:$0x3]
  %v539 = vadd.f32 %v538, %v532
  %v540 = vld [vmem:[#allocation5] sm:$0x3]
  %v541 = vtanh.pop %v539
  %v542 = vxor.u32 %v539, 2147483648
  %v543 = vmul.f32 %v542, 1.442695
  %v544 = vpow.pop %v543
  %v545 = vadd.f32 %v544, 1.0
  %v546 = vrcp.pop %v545
  %v547 = vmul.f32 1.0, %v546
  %v548 = vsel %vm450, 1, 0
  %vm549 = vcmp.eq.s32.totalorder %v548, 1
  %v550 = vsel %vm549, %v541, %v547
  %552 = vrot.lane.b32.xlu0 %v540, 32
  %v553 = vpop.permute.xlu0 %552
  %v555 = vmul.f32 %v550, %v553
  %557 = vrot.lane.b32.xlu0 %v550, 64
  %v558 = vpop.permute.xlu0 %557
  %v560 = vmul.f32 %v550, %v558
  %562 = vrot.lane.b32.xlu0 %v560, 32
  %v563 = vpop.permute.xlu0 %562
  %v565 = vadd.f32 %v555, %v563
  %v566 = vtanh.pop %v565
  %568 = vrot.lane.b32.xlu0 %v566, 64
  %v569 = vpop.permute.xlu0 %568
  %v571 = vmul.f32 %v550, %v569
  %s572 = scalar_lea.vmem [#allocation3], 14
  %v573 = vld [vmem:[%s572] sm:$0x3]
  %v574 = vadd.f32 %v573, %v534
  %v575 = vld [vmem:[#allocation6] sm:$0x3]
  %v576 = vtanh.pop %v574
  %v577 = vxor.u32 %v574, 2147483648
  %v578 = vmul.f32 %v577, 1.442695
  %v579 = vpow.pop %v578
  %v580 = vadd.f32 %v579, 1.0
  %v581 = vrcp.pop %v580
  %v582 = vmul.f32 1.0, %v581
  %v583 = vsel %vm549, %v576, %v582
  %585 = vrot.lane.b32.xlu0 %v575, 32
  %v586 = vpop.permute.xlu0 %585
  %v588 = vmul.f32 %v583, %v586
  %590 = vrot.lane.b32.xlu0 %v583, 64
  %v591 = vpop.permute.xlu0 %590
  %v593 = vmul.f32 %v583, %v591
  %595 = vrot.lane.b32.xlu0 %v593, 32
  %v596 = vpop.permute.xlu0 %595
  %v598 = vadd.f32 %v588, %v596
  %v599 = vtanh.pop %v598
  %601 = vrot.lane.b32.xlu0 %v599, 64
  %v602 = vpop.permute.xlu0 %601
  %v604 = vmul.f32 %v583, %v602
  %606 = vrot.lane.b32.xlu0 %v565, 96
  %v607 = vpop.permute.xlu0 %606
  %vm609 = vcmask 254976
  %610 = vst.msk [vmem:[#allocation5] sm:$0x3] %vm609, %v607
  %612 = vrot.lane.b32.xlu0 %v598, 96
  %v613 = vpop.permute.xlu0 %612
  %615 = vst.msk [vmem:[#allocation6] sm:$0x3] %vm609, %v613
  %617 = vrot.lane.b32.xlu0 %v571, 32
  %v618 = vpop.permute.xlu0 %617
  %621 = vrot.lane.b32.xlu0 %v604, 64
  %v622 = vpop.permute.xlu0 %621
  %v624 = vsel %vm165, %v618, %v622
  %vm625 = vcmask 517120
  %626 = vst.msk [vmem:[#allocation4] sm:$0x3] %vm625, %v624
  %v627 = vpack.c.bf16 %v571, %v571
  %v630 = vunpack.c.l.s4 1966171168
  %v631 = vunpack.c.0.s8 %v630
  %v632 = vlaneseq
  %v633 = vshrl.u32 %v632, 7
  %v634 = vsub.s32 %v631, %v633
  %v635 = vrot.slane %v627, %v634
  %v637 = vunpack.c.l.s4 1966171168
  %v638 = vunpack.c.0.s8 %v637
  %v639 = vlaneseq
  %v640 = vshrl.u32 %v639, 7
  %v641 = vsub.s32 %v638, %v640
  %v642 = vrot.slane %v635, %v641
  %643 = vrot.lane.b32.xlu0 %v642, 32
  %v644 = vpop.permute.xlu0 %643
  %vm646 = vcmask 253952
  %647 = vst.msk [vmem:[%s7] sm:$0x1] %vm646, %v644
  %v648 = vpack.c.bf16 %v604, %v604
  %v651 = vunpack.c.l.s4 1966171168
  %v652 = vunpack.c.0.s8 %v651
  %v653 = vlaneseq
  %v654 = vshrl.u32 %v653, 7
  %v655 = vsub.s32 %v652, %v654
  %v656 = vrot.slane %v648, %v655
  %v658 = vunpack.c.l.s4 1966171168
  %v659 = vunpack.c.0.s8 %v658
  %v660 = vlaneseq
  %v661 = vshrl.u32 %v660, 7
  %v662 = vsub.s32 %v659, %v661
  %v663 = vrot.slane %v656, %v662
  %664 = vrot.lane.b32.xlu0 %v663, 32
  %v665 = vpop.permute.xlu0 %664
  %s667 = scalar_lea.vmem %s56, 7
  %668 = vst.msk [vmem:[%s667] sm:$0x1] %vm646, %v665
  %v669 = vld [vmem:[#allocation4] sm:$0x3]
  %v670 = vpack.c.bf16 %v669, %v669
  %v672 = vsel %vm493, %v670, 0
  %674 = vmatprep.subr.bf16.mxu0 %v478
  %675 = vmatpush1.bf16.msra.mxu0 %v477
  %676 = vmatprep.subr.bf16.mxu0 %v480
  %677 = vmatpush1.bf16.msra.mxu0 %v479
  %678 = vmatprep.subr.bf16.mxu0 %v482
  %679 = vmatpush1.bf16.msra.mxu0 %v481
  %680 = vmatprep.subr.bf16.mxu0 %v484
  %681 = vmatpush1.bf16.msra.mxu0 %v483
  %682 = vmatprep.subr.bf16.mxu0 0
  %683 = vmatpush1.bf16.msra.mxu0 0
  %684 = vmatprep.subr.bf16.mxu0 0
  %685 = vmatpush1.bf16.msra.mxu0 0
  %686 = vmatprep.subr.bf16.mxu0 0
  %687 = vmatpush1.bf16.msra.mxu0 0
  %688 = vmatprep.subr.bf16.mxu0 0
  %689 = vmatpush1.bf16.msra.mxu0 0
  %690 = vmatprep.subr.bf16.mxu0 0
  %691 = vmatpush1.bf16.msra.mxu0 0
  %692 = vmatprep.subr.bf16.mxu0 0
  %693 = vmatpush1.bf16.msra.mxu0 0
  %694 = vmatprep.subr.bf16.mxu0 0
  %695 = vmatpush1.bf16.msra.mxu0 0
  %696 = vmatprep.subr.bf16.mxu0 0
  %697 = vmatpush1.bf16.msra.mxu0 0
  %698 = vmatprep.subr.bf16.mxu0 0
  %699 = vmatpush1.bf16.msra.mxu0 0
  %700 = vmatprep.subr.bf16.mxu0 0
  %701 = vmatpush1.bf16.msra.mxu0 0
  %702 = vmatprep.subr.bf16.mxu0 0
  %703 = vmatpush1.bf16.msra.mxu0 0
  %704 = vmatprep.subr.bf16.mxu0 0
  %705 = vmatpush1.bf16.msra.mxu0 0
  %706 = vmatprep.mubr.bf16.mxu0 0
  %707 = vmatmul.mubr.bf16.gmra.mrb[0].mxu0 %v672
  %v708 = vpop.f32.mrb[0].mxu0
  %v709 = vadd.f32 0.0, %v708
  %v710 = vpop.f32.mrb[0].mxu0
  %v711 = vadd.f32 0.0, %v710
  %v712 = vpop.f32.mrb[0].mxu0
  %v713 = vpop.f32.mrb[0].mxu0
  %714 = vdwg.mxu0
  %s715 = scalar_lea.vmem [#allocation2], 2
  %v716 = vld [vmem:[%s715] sm:$0x3]
  %v717 = vadd.f32 %v716, %v709
  %v718 = vld [vmem:[#allocation5] sm:$0x3]
  %v719 = vtanh.pop %v717
  %v720 = vxor.u32 %v717, 2147483648
  %v721 = vmul.f32 %v720, 1.442695
  %v722 = vpow.pop %v721
  %v723 = vadd.f32 %v722, 1.0
  %v724 = vrcp.pop %v723
  %v725 = vmul.f32 1.0, %v724
  %v726 = vsel %vm549, %v719, %v725
  %728 = vrot.lane.b32.xlu0 %v718, 32
  %v729 = vpop.permute.xlu0 %728
  %v731 = vmul.f32 %v726, %v729
  %733 = vrot.lane.b32.xlu0 %v726, 64
  %v734 = vpop.permute.xlu0 %733
  %v736 = vmul.f32 %v726, %v734
  %738 = vrot.lane.b32.xlu0 %v736, 32
  %v739 = vpop.permute.xlu0 %738
  %v741 = vadd.f32 %v731, %v739
  %v742 = vtanh.pop %v741
  %744 = vrot.lane.b32.xlu0 %v742, 64
  %v745 = vpop.permute.xlu0 %744
  %v747 = vmul.f32 %v726, %v745
  %s748 = scalar_lea.vmem [#allocation3], 12
  %v749 = vld [vmem:[%s748] sm:$0x3]
  %v750 = vadd.f32 %v749, %v711
  %v751 = vld [vmem:[#allocation6] sm:$0x3]
  %v752 = vtanh.pop %v750
  %v753 = vxor.u32 %v750, 2147483648
  %v754 = vmul.f32 %v753, 1.442695
  %v755 = vpow.pop %v754
  %v756 = vadd.f32 %v755, 1.0
  %v757 = vrcp.pop %v756
  %v758 = vmul.f32 1.0, %v757
  %v759 = vsel %vm549, %v752, %v758
  %761 = vrot.lane.b32.xlu0 %v751, 32
  %v762 = vpop.permute.xlu0 %761
  %v764 = vmul.f32 %v759, %v762
  %766 = vrot.lane.b32.xlu0 %v759, 64
  %v767 = vpop.permute.xlu0 %766
  %v769 = vmul.f32 %v759, %v767
  %771 = vrot.lane.b32.xlu0 %v769, 32
  %v772 = vpop.permute.xlu0 %771
  %v774 = vadd.f32 %v764, %v772
  %v775 = vtanh.pop %v774
  %777 = vrot.lane.b32.xlu0 %v775, 64
  %v778 = vpop.permute.xlu0 %777
  %v780 = vmul.f32 %v759, %v778
  %782 = vrot.lane.b32.xlu0 %v741, 96
  %v783 = vpop.permute.xlu0 %782
  %785 = vst.msk [vmem:[#allocation5] sm:$0x3] %vm609, %v783
  %787 = vrot.lane.b32.xlu0 %v774, 96
  %v788 = vpop.permute.xlu0 %787
  %790 = vst.msk [vmem:[#allocation6] sm:$0x3] %vm609, %v788
  %792 = vrot.lane.b32.xlu0 %v747, 32
  %v793 = vpop.permute.xlu0 %792
  %796 = vrot.lane.b32.xlu0 %v780, 64
  %v797 = vpop.permute.xlu0 %796
  %v799 = vsel %vm165, %v793, %v797
  %800 = vst.msk [vmem:[#allocation4] sm:$0x3] %vm625, %v799
  %v801 = vpack.c.bf16 %v747, %v747
  %v804 = vunpack.c.l.s4 1966171168
  %v805 = vunpack.c.0.s8 %v804
  %v806 = vlaneseq
  %v807 = vshrl.u32 %v806, 7
  %v808 = vsub.s32 %v805, %v807
  %v809 = vrot.slane %v801, %v808
  %v811 = vunpack.c.l.s4 1966171168
  %v812 = vunpack.c.0.s8 %v811
  %v813 = vlaneseq
  %v814 = vshrl.u32 %v813, 7
  %v815 = vsub.s32 %v812, %v814
  %v816 = vrot.slane %v809, %v815
  %817 = vrot.lane.b32.xlu0 %v816, 32
  %v818 = vpop.permute.xlu0 %817
  %s820 = scalar_lea.vmem %s7, 1
  %821 = vst.msk [vmem:[%s820] sm:$0x1] %vm646, %v818
  %v822 = vpack.c.bf16 %v780, %v780
  %v825 = vunpack.c.l.s4 1966171168
  %v826 = vunpack.c.0.s8 %v825
  %v827 = vlaneseq
  %v828 = vshrl.u32 %v827, 7
  %v829 = vsub.s32 %v826, %v828
  %v830 = vrot.slane %v822, %v829
  %v832 = vunpack.c.l.s4 1966171168
  %v833 = vunpack.c.0.s8 %v832
  %v834 = vlaneseq
  %v835 = vshrl.u32 %v834, 7
  %v836 = vsub.s32 %v833, %v835
  %v837 = vrot.slane %v830, %v836
  %838 = vrot.lane.b32.xlu0 %v837, 32
  %v839 = vpop.permute.xlu0 %838
  %s841 = scalar_lea.vmem %s56, 6
  %842 = vst.msk [vmem:[%s841] sm:$0x1] %vm646, %v839
  %v843 = vld [vmem:[#allocation4] sm:$0x3]
  %v844 = vpack.c.bf16 %v843, %v843
  %v846 = vsel %vm493, %v844, 0
  %848 = vmatprep.subr.bf16.mxu0 %v478
  %849 = vmatpush1.bf16.msra.mxu0 %v477
  %850 = vmatprep.subr.bf16.mxu0 %v480
  %851 = vmatpush1.bf16.msra.mxu0 %v479
  %852 = vmatprep.subr.bf16.mxu0 %v482
  %853 = vmatpush1.bf16.msra.mxu0 %v481
  %854 = vmatprep.subr.bf16.mxu0 %v484
  %855 = vmatpush1.bf16.msra.mxu0 %v483
  %856 = vmatprep.subr.bf16.mxu0 0
  %857 = vmatpush1.bf16.msra.mxu0 0
  %858 = vmatprep.subr.bf16.mxu0 0
  %859 = vmatpush1.bf16.msra.mxu0 0
  %860 = vmatprep.subr.bf16.mxu0 0
  %861 = vmatpush1.bf16.msra.mxu0 0
  %862 = vmatprep.subr.bf16.mxu0 0
  %863 = vmatpush1.bf16.msra.mxu0 0
  %864 = vmatprep.subr.bf16.mxu0 0
  %865 = vmatpush1.bf16.msra.mxu0 0
  %866 = vmatprep.subr.bf16.mxu0 0
  %867 = vmatpush1.bf16.msra.mxu0 0
  %868 = vmatprep.subr.bf16.mxu0 0
  %869 = vmatpush1.bf16.msra.mxu0 0
  %870 = vmatprep.subr.bf16.mxu0 0
  %871 = vmatpush1.bf16.msra.mxu0 0
  %872 = vmatprep.subr.bf16.mxu0 0
  %873 = vmatpush1.bf16.msra.mxu0 0
  %874 = vmatprep.subr.bf16.mxu0 0
  %875 = vmatpush1.bf16.msra.mxu0 0
  %876 = vmatprep.subr.bf16.mxu0 0
  %877 = vmatpush1.bf16.msra.mxu0 0
  %878 = vmatprep.subr.bf16.mxu0 0
  %879 = vmatpush1.bf16.msra.mxu0 0
  %880 = vmatprep.mubr.bf16.mxu0 0
  %881 = vmatmul.mubr.bf16.gmra.mrb[0].mxu0 %v846
  %v882 = vpop.f32.mrb[0].mxu0
  %v883 = vadd.f32 0.0, %v882
  %v884 = vpop.f32.mrb[0].mxu0
  %v885 = vadd.f32 0.0, %v884
  %v886 = vpop.f32.mrb[0].mxu0
  %v887 = vpop.f32.mrb[0].mxu0
  %888 = vdwg.mxu0
  %s889 = scalar_lea.vmem [#allocation2], 4
  %v890 = vld [vmem:[%s889] sm:$0x3]
  %v891 = vadd.f32 %v890, %v883
  %v892 = vld [vmem:[#allocation5] sm:$0x3]
  %v893 = vtanh.pop %v891
  %v894 = vxor.u32 %v891, 2147483648
  %v895 = vmul.f32 %v894, 1.442695
  %v896 = vpow.pop %v895
  %v897 = vadd.f32 %v896, 1.0
  %v898 = vrcp.pop %v897
  %v899 = vmul.f32 1.0, %v898
  %v900 = vsel %vm549, %v893, %v899
  %902 = vrot.lane.b32.xlu0 %v892, 32
  %v903 = vpop.permute.xlu0 %902
  %v905 = vmul.f32 %v900, %v903
  %907 = vrot.lane.b32.xlu0 %v900, 64
  %v908 = vpop.permute.xlu0 %907
  %v910 = vmul.f32 %v900, %v908
  %912 = vrot.lane.b32.xlu0 %v910, 32
  %v913 = vpop.permute.xlu0 %912
  %v915 = vadd.f32 %v905, %v913
  %v916 = vtanh.pop %v915
  %918 = vrot.lane.b32.xlu0 %v916, 64
  %v919 = vpop.permute.xlu0 %918
  %v921 = vmul.f32 %v900, %v919
  %s922 = scalar_lea.vmem [#allocation3], 10
  %v923 = vld [vmem:[%s922] sm:$0x3]
  %v924 = vadd.f32 %v923, %v885
  %v925 = vld [vmem:[#allocation6] sm:$0x3]
  %v926 = vtanh.pop %v924
  %v927 = vxor.u32 %v924, 2147483648
  %v928 = vmul.f32 %v927, 1.442695
  %v929 = vpow.pop %v928
  %v930 = vadd.f32 %v929, 1.0
  %v931 = vrcp.pop %v930
  %v932 = vmul.f32 1.0, %v931
  %v933 = vsel %vm549, %v926, %v932
  %935 = vrot.lane.b32.xlu0 %v925, 32
  %v936 = vpop.permute.xlu0 %935
  %v938 = vmul.f32 %v933, %v936
  %940 = vrot.lane.b32.xlu0 %v933, 64
  %v941 = vpop.permute.xlu0 %940
  %v943 = vmul.f32 %v933, %v941
  %945 = vrot.lane.b32.xlu0 %v943, 32
  %v946 = vpop.permute.xlu0 %945
  %v948 = vadd.f32 %v938, %v946
  %v949 = vtanh.pop %v948
  %951 = vrot.lane.b32.xlu0 %v949, 64
  %v952 = vpop.permute.xlu0 %951
  %v954 = vmul.f32 %v933, %v952
  %956 = vrot.lane.b32.xlu0 %v915, 96
  %v957 = vpop.permute.xlu0 %956
  %959 = vst.msk [vmem:[#allocation5] sm:$0x3] %vm609, %v957
  %961 = vrot.lane.b32.xlu0 %v948, 96
  %v962 = vpop.permute.xlu0 %961
  %964 = vst.msk [vmem:[#allocation6] sm:$0x3] %vm609, %v962
  %966 = vrot.lane.b32.xlu0 %v921, 32
  %v967 = vpop.permute.xlu0 %966
  %970 = vrot.lane.b32.xlu0 %v954, 64
  %v971 = vpop.permute.xlu0 %970
  %v973 = vsel %vm165, %v967, %v971
  %974 = vst.msk [vmem:[#allocation4] sm:$0x3] %vm625, %v973
  %v975 = vpack.c.bf16 %v921, %v921
  %v978 = vunpack.c.l.s4 1966171168
  %v979 = vunpack.c.0.s8 %v978
  %v980 = vlaneseq
  %v981 = vshrl.u32 %v980, 7
  %v982 = vsub.s32 %v979, %v981
  %v983 = vrot.slane %v975, %v982
  %v985 = vunpack.c.l.s4 1966171168
  %v986 = vunpack.c.0.s8 %v985
  %v987 = vlaneseq
  %v988 = vshrl.u32 %v987, 7
  %v989 = vsub.s32 %v986, %v988
  %v990 = vrot.slane %v983, %v989
  %991 = vrot.lane.b32.xlu0 %v990, 32
  %v992 = vpop.permute.xlu0 %991
  %s994 = scalar_lea.vmem %s7, 2
  %995 = vst.msk [vmem:[%s994] sm:$0x1] %vm646, %v992
  %v996 = vpack.c.bf16 %v954, %v954
  %v999 = vunpack.c.l.s4 1966171168
  %v1000 = vunpack.c.0.s8 %v999
  %v1001 = vlaneseq
  %v1002 = vshrl.u32 %v1001, 7
  %v1003 = vsub.s32 %v1000, %v1002
  %v1004 = vrot.slane %v996, %v1003
  %v1006 = vunpack.c.l.s4 1966171168
  %v1007 = vunpack.c.0.s8 %v1006
  %v1008 = vlaneseq
  %v1009 = vshrl.u32 %v1008, 7
  %v1010 = vsub.s32 %v1007, %v1009
  %v1011 = vrot.slane %v1004, %v1010
  %1012 = vrot.lane.b32.xlu0 %v1011, 32
  %v1013 = vpop.permute.xlu0 %1012
  %s1015 = scalar_lea.vmem %s56, 5
  %1016 = vst.msk [vmem:[%s1015] sm:$0x1] %vm646, %v1013
  %v1017 = vld [vmem:[#allocation4] sm:$0x3]
  %v1018 = vpack.c.bf16 %v1017, %v1017
  %v1020 = vsel %vm493, %v1018, 0
  %1022 = vmatprep.subr.bf16.mxu0 %v478
  %1023 = vmatpush1.bf16.msra.mxu0 %v477
  %1024 = vmatprep.subr.bf16.mxu0 %v480
  %1025 = vmatpush1.bf16.msra.mxu0 %v479
  %1026 = vmatprep.subr.bf16.mxu0 %v482
  %1027 = vmatpush1.bf16.msra.mxu0 %v481
  %1028 = vmatprep.subr.bf16.mxu0 %v484
  %1029 = vmatpush1.bf16.msra.mxu0 %v483
  %1030 = vmatprep.subr.bf16.mxu0 0
  %1031 = vmatpush1.bf16.msra.mxu0 0
  %1032 = vmatprep.subr.bf16.mxu0 0
  %1033 = vmatpush1.bf16.msra.mxu0 0
  %1034 = vmatprep.subr.bf16.mxu0 0
  %1035 = vmatpush1.bf16.msra.mxu0 0
  %1036 = vmatprep.subr.bf16.mxu0 0
  %1037 = vmatpush1.bf16.msra.mxu0 0
  %1038 = vmatprep.subr.bf16.mxu0 0
  %1039 = vmatpush1.bf16.msra.mxu0 0
  %1040 = vmatprep.subr.bf16.mxu0 0
  %1041 = vmatpush1.bf16.msra.mxu0 0
  %1042 = vmatprep.subr.bf16.mxu0 0
  %1043 = vmatpush1.bf16.msra.mxu0 0
  %1044 = vmatprep.subr.bf16.mxu0 0
  %1045 = vmatpush1.bf16.msra.mxu0 0
  %1046 = vmatprep.subr.bf16.mxu0 0
  %1047 = vmatpush1.bf16.msra.mxu0 0
  %1048 = vmatprep.subr.bf16.mxu0 0
  %1049 = vmatpush1.bf16.msra.mxu0 0
  %1050 = vmatprep.subr.bf16.mxu0 0
  %1051 = vmatpush1.bf16.msra.mxu0 0
  %1052 = vmatprep.subr.bf16.mxu0 0
  %1053 = vmatpush1.bf16.msra.mxu0 0
  %1054 = vmatprep.mubr.bf16.mxu0 0
  %1055 = vmatmul.mubr.bf16.gmra.mrb[0].mxu0 %v1020
  %v1056 = vpop.f32.mrb[0].mxu0
  %v1057 = vadd.f32 0.0, %v1056
  %v1058 = vpop.f32.mrb[0].mxu0
  %v1059 = vadd.f32 0.0, %v1058
  %v1060 = vpop.f32.mrb[0].mxu0
  %v1061 = vpop.f32.mrb[0].mxu0
  %1062 = vdwg.mxu0
  %s1063 = scalar_lea.vmem [#allocation2], 6
  %v1064 = vld [vmem:[%s1063] sm:$0x3]
  %v1065 = vadd.f32 %v1064, %v1057
  %v1066 = vld [vmem:[#allocation5] sm:$0x3]
  %v1067 = vtanh.pop %v1065
  %v1068 = vxor.u32 %v1065, 2147483648
  %v1069 = vmul.f32 %v1068, 1.442695
  %v1070 = vpow.pop %v1069
  %v1071 = vadd.f32 %v1070, 1.0
  %v1072 = vrcp.pop %v1071
  %v1073 = vmul.f32 1.0, %v1072
  %v1074 = vsel %vm549, %v1067, %v1073
  %1076 = vrot.lane.b32.xlu0 %v1066, 32
  %v1077 = vpop.permute.xlu0 %1076
  %v1079 = vmul.f32 %v1074, %v1077
  %1081 = vrot.lane.b32.xlu0 %v1074, 64
  %v1082 = vpop.permute.xlu0 %1081
  %v1084 = vmul.f32 %v1074, %v1082
  %1086 = vrot.lane.b32.xlu0 %v1084, 32
  %v1087 = vpop.permute.xlu0 %1086
  %v1089 = vadd.f32 %v1079, %v1087
  %v1090 = vtanh.pop %v1089
  %1092 = vrot.lane.b32.xlu0 %v1090, 64
  %v1093 = vpop.permute.xlu0 %1092
  %v1095 = vmul.f32 %v1074, %v1093
  %s1096 = scalar_lea.vmem [#allocation3], 8
  %v1097 = vld [vmem:[%s1096] sm:$0x3]
  %v1098 = vadd.f32 %v1097, %v1059
  %v1099 = vld [vmem:[#allocation6] sm:$0x3]
  %v1100 = vtanh.pop %v1098
  %v1101 = vxor.u32 %v1098, 2147483648
  %v1102 = vmul.f32 %v1101, 1.442695
  %v1103 = vpow.pop %v1102
  %v1104 = vadd.f32 %v1103, 1.0
  %v1105 = vrcp.pop %v1104
  %v1106 = vmul.f32 1.0, %v1105
  %v1107 = vsel %vm549, %v1100, %v1106
  %1109 = vrot.lane.b32.xlu0 %v1099, 32
  %v1110 = vpop.permute.xlu0 %1109
  %v1112 = vmul.f32 %v1107, %v1110
  %1114 = vrot.lane.b32.xlu0 %v1107, 64
  %v1115 = vpop.permute.xlu0 %1114
  %v1117 = vmul.f32 %v1107, %v1115
  %1119 = vrot.lane.b32.xlu0 %v1117, 32
  %v1120 = vpop.permute.xlu0 %1119
  %v1122 = vadd.f32 %v1112, %v1120
  %v1123 = vtanh.pop %v1122
  %1125 = vrot.lane.b32.xlu0 %v1123, 64
  %v1126 = vpop.permute.xlu0 %1125
  %v1128 = vmul.f32 %v1107, %v1126
  %1130 = vrot.lane.b32.xlu0 %v1089, 96
  %v1131 = vpop.permute.xlu0 %1130
  %1133 = vst.msk [vmem:[#allocation5] sm:$0x3] %vm609, %v1131
  %1135 = vrot.lane.b32.xlu0 %v1122, 96
  %v1136 = vpop.permute.xlu0 %1135
  %1138 = vst.msk [vmem:[#allocation6] sm:$0x3] %vm609, %v1136
  %1140 = vrot.lane.b32.xlu0 %v1095, 32
  %v1141 = vpop.permute.xlu0 %1140
  %1144 = vrot.lane.b32.xlu0 %v1128, 64
  %v1145 = vpop.permute.xlu0 %1144
  %v1147 = vsel %vm165, %v1141, %v1145
  %1148 = vst.msk [vmem:[#allocation4] sm:$0x3] %vm625, %v1147
  %v1149 = vpack.c.bf16 %v1095, %v1095
  %v1152 = vunpack.c.l.s4 1966171168
  %v1153 = vunpack.c.0.s8 %v1152
  %v1154 = vlaneseq
  %v1155 = vshrl.u32 %v1154, 7
  %v1156 = vsub.s32 %v1153, %v1155
  %v1157 = vrot.slane %v1149, %v1156
  %v1159 = vunpack.c.l.s4 1966171168
  %v1160 = vunpack.c.0.s8 %v1159
  %v1161 = vlaneseq
  %v1162 = vshrl.u32 %v1161, 7
  %v1163 = vsub.s32 %v1160, %v1162
  %v1164 = vrot.slane %v1157, %v1163
  %1165 = vrot.lane.b32.xlu0 %v1164, 32
  %v1166 = vpop.permute.xlu0 %1165
  %s1168 = scalar_lea.vmem %s7, 3
  %1169 = vst.msk [vmem:[%s1168] sm:$0x1] %vm646, %v1166
  %v1170 = vpack.c.bf16 %v1128, %v1128
  %v1173 = vunpack.c.l.s4 1966171168
  %v1174 = vunpack.c.0.s8 %v1173
  %v1175 = vlaneseq
  %v1176 = vshrl.u32 %v1175, 7
  %v1177 = vsub.s32 %v1174, %v1176
  %v1178 = vrot.slane %v1170, %v1177
  %v1180 = vunpack.c.l.s4 1966171168
  %v1181 = vunpack.c.0.s8 %v1180
  %v1182 = vlaneseq
  %v1183 = vshrl.u32 %v1182, 7
  %v1184 = vsub.s32 %v1181, %v1183
  %v1185 = vrot.slane %v1178, %v1184
  %1186 = vrot.lane.b32.xlu0 %v1185, 32
  %v1187 = vpop.permute.xlu0 %1186
  %s1189 = scalar_lea.vmem %s56, 4
  %1190 = vst.msk [vmem:[%s1189] sm:$0x1] %vm646, %v1187
  %v1191 = vld [vmem:[#allocation4] sm:$0x3]
  %v1192 = vpack.c.bf16 %v1191, %v1191
  %v1194 = vsel %vm493, %v1192, 0
  %1196 = vmatprep.subr.bf16.mxu0 %v478
  %1197 = vmatpush1.bf16.msra.mxu0 %v477
  %1198 = vmatprep.subr.bf16.mxu0 %v480
  %1199 = vmatpush1.bf16.msra.mxu0 %v479
  %1200 = vmatprep.subr.bf16.mxu0 %v482
  %1201 = vmatpush1.bf16.msra.mxu0 %v481
  %1202 = vmatprep.subr.bf16.mxu0 %v484
  %1203 = vmatpush1.bf16.msra.mxu0 %v483
  %1204 = vmatprep.subr.bf16.mxu0 0
  %1205 = vmatpush1.bf16.msra.mxu0 0
  %1206 = vmatprep.subr.bf16.mxu0 0
  %1207 = vmatpush1.bf16.msra.mxu0 0
  %1208 = vmatprep.subr.bf16.mxu0 0
  %1209 = vmatpush1.bf16.msra.mxu0 0
  %1210 = vmatprep.subr.bf16.mxu0 0
  %1211 = vmatpush1.bf16.msra.mxu0 0
  %1212 = vmatprep.subr.bf16.mxu0 0
  %1213 = vmatpush1.bf16.msra.mxu0 0
  %1214 = vmatprep.subr.bf16.mxu0 0
  %1215 = vmatpush1.bf16.msra.mxu0 0
  %1216 = vmatprep.subr.bf16.mxu0 0
  %1217 = vmatpush1.bf16.msra.mxu0 0
  %1218 = vmatprep.subr.bf16.mxu0 0
  %1219 = vmatpush1.bf16.msra.mxu0 0
  %1220 = vmatprep.subr.bf16.mxu0 0
  %1221 = vmatpush1.bf16.msra.mxu0 0
  %1222 = vmatprep.subr.bf16.mxu0 0
  %1223 = vmatpush1.bf16.msra.mxu0 0
  %1224 = vmatprep.subr.bf16.mxu0 0
  %1225 = vmatpush1.bf16.msra.mxu0 0
  %1226 = vmatprep.subr.bf16.mxu0 0
  %1227 = vmatpush1.bf16.msra.mxu0 0
  %1228 = vmatprep.mubr.bf16.mxu0 0
  %1229 = vmatmul.mubr.bf16.gmra.mrb[0].mxu0 %v1194
  %v1230 = vpop.f32.mrb[0].mxu0
  %v1231 = vadd.f32 0.0, %v1230
  %v1232 = vpop.f32.mrb[0].mxu0
  %v1233 = vadd.f32 0.0, %v1232
  %v1234 = vpop.f32.mrb[0].mxu0
  %v1235 = vpop.f32.mrb[0].mxu0
  %1236 = vdwg.mxu0
  %s1237 = scalar_lea.vmem [#allocation2], 8
  %v1238 = vld [vmem:[%s1237] sm:$0x3]
  %v1239 = vadd.f32 %v1238, %v1231
  %v1240 = vld [vmem:[#allocation5] sm:$0x3]
  %v1241 = vtanh.pop %v1239
  %v1242 = vxor.u32 %v1239, 2147483648
  %v1243 = vmul.f32 %v1242, 1.442695
  %v1244 = vpow.pop %v1243
  %v1245 = vadd.f32 %v1244, 1.0
  %v1246 = vrcp.pop %v1245
  %v1247 = vmul.f32 1.0, %v1246
  %v1248 = vsel %vm549, %v1241, %v1247
  %1250 = vrot.lane.b32.xlu0 %v1240, 32
  %v1251 = vpop.permute.xlu0 %1250
  %v1253 = vmul.f32 %v1248, %v1251
  %1255 = vrot.lane.b32.xlu0 %v1248, 64
  %v1256 = vpop.permute.xlu0 %1255
  %v1258 = vmul.f32 %v1248, %v1256
  %1260 = vrot.lane.b32.xlu0 %v1258, 32
  %v1261 = vpop.permute.xlu0 %1260
  %v1263 = vadd.f32 %v1253, %v1261
  %v1264 = vtanh.pop %v1263
  %1266 = vrot.lane.b32.xlu0 %v1264, 64
  %v1267 = vpop.permute.xlu0 %1266
  %v1269 = vmul.f32 %v1248, %v1267
  %s1270 = scalar_lea.vmem [#allocation3], 6
  %v1271 = vld [vmem:[%s1270] sm:$0x3]
  %v1272 = vadd.f32 %v1271, %v1233
  %v1273 = vld [vmem:[#allocation6] sm:$0x3]
  %v1274 = vtanh.pop %v1272
  %v1275 = vxor.u32 %v1272, 2147483648
  %v1276 = vmul.f32 %v1275, 1.442695
  %v1277 = vpow.pop %v1276
  %v1278 = vadd.f32 %v1277, 1.0
  %v1279 = vrcp.pop %v1278
  %v1280 = vmul.f32 1.0, %v1279
  %v1281 = vsel %vm549, %v1274, %v1280
  %1283 = vrot.lane.b32.xlu0 %v1273, 32
  %v1284 = vpop.permute.xlu0 %1283
  %v1286 = vmul.f32 %v1281, %v1284
  %1288 = vrot.lane.b32.xlu0 %v1281, 64
  %v1289 = vpop.permute.xlu0 %1288
  %v1291 = vmul.f32 %v1281, %v1289
  %1293 = vrot.lane.b32.xlu0 %v1291, 32
  %v1294 = vpop.permute.xlu0 %1293
  %v1296 = vadd.f32 %v1286, %v1294
  %v1297 = vtanh.pop %v1296
  %1299 = vrot.lane.b32.xlu0 %v1297, 64
  %v1300 = vpop.permute.xlu0 %1299
  %v1302 = vmul.f32 %v1281, %v1300
  %1304 = vrot.lane.b32.xlu0 %v1263, 96
  %v1305 = vpop.permute.xlu0 %1304
  %1307 = vst.msk [vmem:[#allocation5] sm:$0x3] %vm609, %v1305
  %1309 = vrot.lane.b32.xlu0 %v1296, 96
  %v1310 = vpop.permute.xlu0 %1309
  %1312 = vst.msk [vmem:[#allocation6] sm:$0x3] %vm609, %v1310
  %1314 = vrot.lane.b32.xlu0 %v1269, 32
  %v1315 = vpop.permute.xlu0 %1314
  %1318 = vrot.lane.b32.xlu0 %v1302, 64
  %v1319 = vpop.permute.xlu0 %1318
  %v1321 = vsel %vm165, %v1315, %v1319
  %1322 = vst.msk [vmem:[#allocation4] sm:$0x3] %vm625, %v1321
  %v1323 = vpack.c.bf16 %v1269, %v1269
  %v1326 = vunpack.c.l.s4 1966171168
  %v1327 = vunpack.c.0.s8 %v1326
  %v1328 = vlaneseq
  %v1329 = vshrl.u32 %v1328, 7
  %v1330 = vsub.s32 %v1327, %v1329
  %v1331 = vrot.slane %v1323, %v1330
  %v1333 = vunpack.c.l.s4 1966171168
  %v1334 = vunpack.c.0.s8 %v1333
  %v1335 = vlaneseq
  %v1336 = vshrl.u32 %v1335, 7
  %v1337 = vsub.s32 %v1334, %v1336
  %v1338 = vrot.slane %v1331, %v1337
  %1339 = vrot.lane.b32.xlu0 %v1338, 32
  %v1340 = vpop.permute.xlu0 %1339
  %s1342 = scalar_lea.vmem %s7, 4
  %1343 = vst.msk [vmem:[%s1342] sm:$0x1] %vm646, %v1340
  %v1344 = vpack.c.bf16 %v1302, %v1302
  %v1347 = vunpack.c.l.s4 1966171168
  %v1348 = vunpack.c.0.s8 %v1347
  %v1349 = vlaneseq
  %v1350 = vshrl.u32 %v1349, 7
  %v1351 = vsub.s32 %v1348, %v1350
  %v1352 = vrot.slane %v1344, %v1351
  %v1354 = vunpack.c.l.s4 1966171168
  %v1355 = vunpack.c.0.s8 %v1354
  %v1356 = vlaneseq
  %v1357 = vshrl.u32 %v1356, 7
  %v1358 = vsub.s32 %v1355, %v1357
  %v1359 = vrot.slane %v1352, %v1358
  %1360 = vrot.lane.b32.xlu0 %v1359, 32
  %v1361 = vpop.permute.xlu0 %1360
  %s1363 = scalar_lea.vmem %s56, 3
  %1364 = vst.msk [vmem:[%s1363] sm:$0x1] %vm646, %v1361
  %v1365 = vld [vmem:[#allocation4] sm:$0x3]
  %v1366 = vpack.c.bf16 %v1365, %v1365
  %v1368 = vsel %vm493, %v1366, 0
  %1370 = vmatprep.subr.bf16.mxu0 %v478
  %1371 = vmatpush1.bf16.msra.mxu0 %v477
  %1372 = vmatprep.subr.bf16.mxu0 %v480
  %1373 = vmatpush1.bf16.msra.mxu0 %v479
  %1374 = vmatprep.subr.bf16.mxu0 %v482
  %1375 = vmatpush1.bf16.msra.mxu0 %v481
  %1376 = vmatprep.subr.bf16.mxu0 %v484
  %1377 = vmatpush1.bf16.msra.mxu0 %v483
  %1378 = vmatprep.subr.bf16.mxu0 0
  %1379 = vmatpush1.bf16.msra.mxu0 0
  %1380 = vmatprep.subr.bf16.mxu0 0
  %1381 = vmatpush1.bf16.msra.mxu0 0
  %1382 = vmatprep.subr.bf16.mxu0 0
  %1383 = vmatpush1.bf16.msra.mxu0 0
  %1384 = vmatprep.subr.bf16.mxu0 0
  %1385 = vmatpush1.bf16.msra.mxu0 0
  %1386 = vmatprep.subr.bf16.mxu0 0
  %1387 = vmatpush1.bf16.msra.mxu0 0
  %1388 = vmatprep.subr.bf16.mxu0 0
  %1389 = vmatpush1.bf16.msra.mxu0 0
  %1390 = vmatprep.subr.bf16.mxu0 0
  %1391 = vmatpush1.bf16.msra.mxu0 0
  %1392 = vmatprep.subr.bf16.mxu0 0
  %1393 = vmatpush1.bf16.msra.mxu0 0
  %1394 = vmatprep.subr.bf16.mxu0 0
  %1395 = vmatpush1.bf16.msra.mxu0 0
  %1396 = vmatprep.subr.bf16.mxu0 0
  %1397 = vmatpush1.bf16.msra.mxu0 0
  %1398 = vmatprep.subr.bf16.mxu0 0
  %1399 = vmatpush1.bf16.msra.mxu0 0
  %1400 = vmatprep.subr.bf16.mxu0 0
  %1401 = vmatpush1.bf16.msra.mxu0 0
  %1402 = vmatprep.mubr.bf16.mxu0 0
  %1403 = vmatmul.mubr.bf16.gmra.mrb[0].mxu0 %v1368
  %v1404 = vpop.f32.mrb[0].mxu0
  %v1405 = vadd.f32 0.0, %v1404
  %v1406 = vpop.f32.mrb[0].mxu0
  %v1407 = vadd.f32 0.0, %v1406
  %v1408 = vpop.f32.mrb[0].mxu0
  %v1409 = vpop.f32.mrb[0].mxu0
  %1410 = vdwg.mxu0
  %s1411 = scalar_lea.vmem [#allocation2], 10
  %v1412 = vld [vmem:[%s1411] sm:$0x3]
  %v1413 = vadd.f32 %v1412, %v1405
  %v1414 = vld [vmem:[#allocation5] sm:$0x3]
  %v1415 = vtanh.pop %v1413
  %v1416 = vxor.u32 %v1413, 2147483648
  %v1417 = vmul.f32 %v1416, 1.442695
  %v1418 = vpow.pop %v1417
  %v1419 = vadd.f32 %v1418, 1.0
  %v1420 = vrcp.pop %v1419
  %v1421 = vmul.f32 1.0, %v1420
  %v1422 = vsel %vm549, %v1415, %v1421
  %1424 = vrot.lane.b32.xlu0 %v1414, 32
  %v1425 = vpop.permute.xlu0 %1424
  %v1427 = vmul.f32 %v1422, %v1425
  %1429 = vrot.lane.b32.xlu0 %v1422, 64
  %v1430 = vpop.permute.xlu0 %1429
  %v1432 = vmul.f32 %v1422, %v1430
  %1434 = vrot.lane.b32.xlu0 %v1432, 32
  %v1435 = vpop.permute.xlu0 %1434
  %v1437 = vadd.f32 %v1427, %v1435
  %v1438 = vtanh.pop %v1437
  %1440 = vrot.lane.b32.xlu0 %v1438, 64
  %v1441 = vpop.permute.xlu0 %1440
  %v1443 = vmul.f32 %v1422, %v1441
  %s1444 = scalar_lea.vmem [#allocation3], 4
  %v1445 = vld [vmem:[%s1444] sm:$0x3]
  %v1446 = vadd.f32 %v1445, %v1407
  %v1447 = vld [vmem:[#allocation6] sm:$0x3]
  %v1448 = vtanh.pop %v1446
  %v1449 = vxor.u32 %v1446, 2147483648
  %v1450 = vmul.f32 %v1449, 1.442695
  %v1451 = vpow.pop %v1450
  %v1452 = vadd.f32 %v1451, 1.0
  %v1453 = vrcp.pop %v1452
  %v1454 = vmul.f32 1.0, %v1453
  %v1455 = vsel %vm549, %v1448, %v1454
  %1457 = vrot.lane.b32.xlu0 %v1447, 32
  %v1458 = vpop.permute.xlu0 %1457
  %v1460 = vmul.f32 %v1455, %v1458
  %1462 = vrot.lane.b32.xlu0 %v1455, 64
  %v1463 = vpop.permute.xlu0 %1462
  %v1465 = vmul.f32 %v1455, %v1463
  %1467 = vrot.lane.b32.xlu0 %v1465, 32
  %v1468 = vpop.permute.xlu0 %1467
  %v1470 = vadd.f32 %v1460, %v1468
  %v1471 = vtanh.pop %v1470
  %1473 = vrot.lane.b32.xlu0 %v1471, 64
  %v1474 = vpop.permute.xlu0 %1473
  %v1476 = vmul.f32 %v1455, %v1474
  %1478 = vrot.lane.b32.xlu0 %v1437, 96
  %v1479 = vpop.permute.xlu0 %1478
  %1481 = vst.msk [vmem:[#allocation5] sm:$0x3] %vm609, %v1479
  %1483 = vrot.lane.b32.xlu0 %v1470, 96
  %v1484 = vpop.permute.xlu0 %1483
  %1486 = vst.msk [vmem:[#allocation6] sm:$0x3] %vm609, %v1484
  %1488 = vrot.lane.b32.xlu0 %v1443, 32
  %v1489 = vpop.permute.xlu0 %1488
  %1492 = vrot.lane.b32.xlu0 %v1476, 64
  %v1493 = vpop.permute.xlu0 %1492
  %v1495 = vsel %vm165, %v1489, %v1493
  %1496 = vst.msk [vmem:[#allocation4] sm:$0x3] %vm625, %v1495
  %v1497 = vpack.c.bf16 %v1443, %v1443
  %v1500 = vunpack.c.l.s4 1966171168
  %v1501 = vunpack.c.0.s8 %v1500
  %v1502 = vlaneseq
  %v1503 = vshrl.u32 %v1502, 7
  %v1504 = vsub.s32 %v1501, %v1503
  %v1505 = vrot.slane %v1497, %v1504
  %v1507 = vunpack.c.l.s4 1966171168
  %v1508 = vunpack.c.0.s8 %v1507
  %v1509 = vlaneseq
  %v1510 = vshrl.u32 %v1509, 7
  %v1511 = vsub.s32 %v1508, %v1510
  %v1512 = vrot.slane %v1505, %v1511
  %1513 = vrot.lane.b32.xlu0 %v1512, 32
  %v1514 = vpop.permute.xlu0 %1513
  %s1516 = scalar_lea.vmem %s7, 5
  %1517 = vst.msk [vmem:[%s1516] sm:$0x1] %vm646, %v1514
  %v1518 = vpack.c.bf16 %v1476, %v1476
  %v1521 = vunpack.c.l.s4 1966171168
  %v1522 = vunpack.c.0.s8 %v1521
  %v1523 = vlaneseq
  %v1524 = vshrl.u32 %v1523, 7
  %v1525 = vsub.s32 %v1522, %v1524
  %v1526 = vrot.slane %v1518, %v1525
  %v1528 = vunpack.c.l.s4 1966171168
  %v1529 = vunpack.c.0.s8 %v1528
  %v1530 = vlaneseq
  %v1531 = vshrl.u32 %v1530, 7
  %v1532 = vsub.s32 %v1529, %v1531
  %v1533 = vrot.slane %v1526, %v1532
  %1534 = vrot.lane.b32.xlu0 %v1533, 32
  %v1535 = vpop.permute.xlu0 %1534
  %s1537 = scalar_lea.vmem %s56, 2
  %1538 = vst.msk [vmem:[%s1537] sm:$0x1] %vm646, %v1535
  %v1539 = vld [vmem:[#allocation4] sm:$0x3]
  %v1540 = vpack.c.bf16 %v1539, %v1539
  %v1542 = vsel %vm493, %v1540, 0
  %1544 = vmatprep.subr.bf16.mxu0 %v478
  %1545 = vmatpush1.bf16.msra.mxu0 %v477
  %1546 = vmatprep.subr.bf16.mxu0 %v480
  %1547 = vmatpush1.bf16.msra.mxu0 %v479
  %1548 = vmatprep.subr.bf16.mxu0 %v482
  %1549 = vmatpush1.bf16.msra.mxu0 %v481
  %1550 = vmatprep.subr.bf16.mxu0 %v484
  %1551 = vmatpush1.bf16.msra.mxu0 %v483
  %1552 = vmatprep.subr.bf16.mxu0 0
  %1553 = vmatpush1.bf16.msra.mxu0 0
  %1554 = vmatprep.subr.bf16.mxu0 0
  %1555 = vmatpush1.bf16.msra.mxu0 0
  %1556 = vmatprep.subr.bf16.mxu0 0
  %1557 = vmatpush1.bf16.msra.mxu0 0
  %1558 = vmatprep.subr.bf16.mxu0 0
  %1559 = vmatpush1.bf16.msra.mxu0 0
  %1560 = vmatprep.subr.bf16.mxu0 0
  %1561 = vmatpush1.bf16.msra.mxu0 0
  %1562 = vmatprep.subr.bf16.mxu0 0
  %1563 = vmatpush1.bf16.msra.mxu0 0
  %1564 = vmatprep.subr.bf16.mxu0 0
  %1565 = vmatpush1.bf16.msra.mxu0 0
  %1566 = vmatprep.subr.bf16.mxu0 0
  %1567 = vmatpush1.bf16.msra.mxu0 0
  %1568 = vmatprep.subr.bf16.mxu0 0
  %1569 = vmatpush1.bf16.msra.mxu0 0
  %1570 = vmatprep.subr.bf16.mxu0 0
  %1571 = vmatpush1.bf16.msra.mxu0 0
  %1572 = vmatprep.subr.bf16.mxu0 0
  %1573 = vmatpush1.bf16.msra.mxu0 0
  %1574 = vmatprep.subr.bf16.mxu0 0
  %1575 = vmatpush1.bf16.msra.mxu0 0
  %1576 = vmatprep.mubr.bf16.mxu0 0
  %1577 = vmatmul.mubr.bf16.gmra.mrb[0].mxu0 %v1542
  %v1578 = vpop.f32.mrb[0].mxu0
  %v1579 = vadd.f32 0.0, %v1578
  %v1580 = vpop.f32.mrb[0].mxu0
  %v1581 = vadd.f32 0.0, %v1580
  %v1582 = vpop.f32.mrb[0].mxu0
  %v1583 = vpop.f32.mrb[0].mxu0
  %1584 = vdwg.mxu0
  %s1585 = scalar_lea.vmem [#allocation2], 12
  %v1586 = vld [vmem:[%s1585] sm:$0x3]
  %v1587 = vadd.f32 %v1586, %v1579
  %v1588 = vld [vmem:[#allocation5] sm:$0x3]
  %v1589 = vtanh.pop %v1587
  %v1590 = vxor.u32 %v1587, 2147483648
  %v1591 = vmul.f32 %v1590, 1.442695
  %v1592 = vpow.pop %v1591
  %v1593 = vadd.f32 %v1592, 1.0
  %v1594 = vrcp.pop %v1593
  %v1595 = vmul.f32 1.0, %v1594
  %v1596 = vsel %vm549, %v1589, %v1595
  %1598 = vrot.lane.b32.xlu0 %v1588, 32
  %v1599 = vpop.permute.xlu0 %1598
  %v1601 = vmul.f32 %v1596, %v1599
  %1603 = vrot.lane.b32.xlu0 %v1596, 64
  %v1604 = vpop.permute.xlu0 %1603
  %v1606 = vmul.f32 %v1596, %v1604
  %1608 = vrot.lane.b32.xlu0 %v1606, 32
  %v1609 = vpop.permute.xlu0 %1608
  %v1611 = vadd.f32 %v1601, %v1609
  %v1612 = vtanh.pop %v1611
  %1614 = vrot.lane.b32.xlu0 %v1612, 64
  %v1615 = vpop.permute.xlu0 %1614
  %v1617 = vmul.f32 %v1596, %v1615
  %s1618 = scalar_lea.vmem [#allocation3], 2
  %v1619 = vld [vmem:[%s1618] sm:$0x3]
  %v1620 = vadd.f32 %v1619, %v1581
  %v1621 = vld [vmem:[#allocation6] sm:$0x3]
  %v1622 = vtanh.pop %v1620
  %v1623 = vxor.u32 %v1620, 2147483648
  %v1624 = vmul.f32 %v1623, 1.442695
  %v1625 = vpow.pop %v1624
  %v1626 = vadd.f32 %v1625, 1.0
  %v1627 = vrcp.pop %v1626
  %v1628 = vmul.f32 1.0, %v1627
  %v1629 = vsel %vm549, %v1622, %v1628
  %1631 = vrot.lane.b32.xlu0 %v1621, 32
  %v1632 = vpop.permute.xlu0 %1631
  %v1634 = vmul.f32 %v1629, %v1632
  %1636 = vrot.lane.b32.xlu0 %v1629, 64
  %v1637 = vpop.permute.xlu0 %1636
  %v1639 = vmul.f32 %v1629, %v1637
  %1641 = vrot.lane.b32.xlu0 %v1639, 32
  %v1642 = vpop.permute.xlu0 %1641
  %v1644 = vadd.f32 %v1634, %v1642
  %v1645 = vtanh.pop %v1644
  %1647 = vrot.lane.b32.xlu0 %v1645, 64
  %v1648 = vpop.permute.xlu0 %1647
  %v1650 = vmul.f32 %v1629, %v1648
  %1652 = vrot.lane.b32.xlu0 %v1611, 96
  %v1653 = vpop.permute.xlu0 %1652
  %1655 = vst.msk [vmem:[#allocation5] sm:$0x3] %vm609, %v1653
  %1657 = vrot.lane.b32.xlu0 %v1644, 96
  %v1658 = vpop.permute.xlu0 %1657
  %1660 = vst.msk [vmem:[#allocation6] sm:$0x3] %vm609, %v1658
  %1662 = vrot.lane.b32.xlu0 %v1617, 32
  %v1663 = vpop.permute.xlu0 %1662
  %1666 = vrot.lane.b32.xlu0 %v1650, 64
  %v1667 = vpop.permute.xlu0 %1666
  %v1669 = vsel %vm165, %v1663, %v1667
  %1670 = vst.msk [vmem:[#allocation4] sm:$0x3] %vm625, %v1669
  %v1671 = vpack.c.bf16 %v1617, %v1617
  %v1674 = vunpack.c.l.s4 1966171168
  %v1675 = vunpack.c.0.s8 %v1674
  %v1676 = vlaneseq
  %v1677 = vshrl.u32 %v1676, 7
  %v1678 = vsub.s32 %v1675, %v1677
  %v1679 = vrot.slane %v1671, %v1678
  %v1681 = vunpack.c.l.s4 1966171168
  %v1682 = vunpack.c.0.s8 %v1681
  %v1683 = vlaneseq
  %v1684 = vshrl.u32 %v1683, 7
  %v1685 = vsub.s32 %v1682, %v1684
  %v1686 = vrot.slane %v1679, %v1685
  %1687 = vrot.lane.b32.xlu0 %v1686, 32
  %v1688 = vpop.permute.xlu0 %1687
  %s1690 = scalar_lea.vmem %s7, 6
  %1691 = vst.msk [vmem:[%s1690] sm:$0x1] %vm646, %v1688
  %v1692 = vpack.c.bf16 %v1650, %v1650
  %v1695 = vunpack.c.l.s4 1966171168
  %v1696 = vunpack.c.0.s8 %v1695
  %v1697 = vlaneseq
  %v1698 = vshrl.u32 %v1697, 7
  %v1699 = vsub.s32 %v1696, %v1698
  %v1700 = vrot.slane %v1692, %v1699
  %v1702 = vunpack.c.l.s4 1966171168
  %v1703 = vunpack.c.0.s8 %v1702
  %v1704 = vlaneseq
  %v1705 = vshrl.u32 %v1704, 7
  %v1706 = vsub.s32 %v1703, %v1705
  %v1707 = vrot.slane %v1700, %v1706
  %1708 = vrot.lane.b32.xlu0 %v1707, 32
  %v1709 = vpop.permute.xlu0 %1708
  %s1711 = scalar_lea.vmem %s56, 1
  %1712 = vst.msk [vmem:[%s1711] sm:$0x1] %vm646, %v1709
  %v1713 = vld [vmem:[#allocation4] sm:$0x3]
  %v1714 = vpack.c.bf16 %v1713, %v1713
  %v1716 = vsel %vm493, %v1714, 0
  %1718 = vmatprep.subr.bf16.mxu0 %v478
  %1719 = vmatpush1.bf16.msra.mxu0 %v477
  %1720 = vmatprep.subr.bf16.mxu0 %v480
  %1721 = vmatpush1.bf16.msra.mxu0 %v479
  %1722 = vmatprep.subr.bf16.mxu0 %v482
  %1723 = vmatpush1.bf16.msra.mxu0 %v481
  %1724 = vmatprep.subr.bf16.mxu0 %v484
  %1725 = vmatpush1.bf16.msra.mxu0 %v483
  %1726 = vmatprep.subr.bf16.mxu0 0
  %1727 = vmatpush1.bf16.msra.mxu0 0
  %1728 = vmatprep.subr.bf16.mxu0 0
  %1729 = vmatpush1.bf16.msra.mxu0 0
  %1730 = vmatprep.subr.bf16.mxu0 0
  %1731 = vmatpush1.bf16.msra.mxu0 0
  %1732 = vmatprep.subr.bf16.mxu0 0
  %1733 = vmatpush1.bf16.msra.mxu0 0
  %1734 = vmatprep.subr.bf16.mxu0 0
  %1735 = vmatpush1.bf16.msra.mxu0 0
  %1736 = vmatprep.subr.bf16.mxu0 0
  %1737 = vmatpush1.bf16.msra.mxu0 0
  %1738 = vmatprep.subr.bf16.mxu0 0
  %1739 = vmatpush1.bf16.msra.mxu0 0
  %1740 = vmatprep.subr.bf16.mxu0 0
  %1741 = vmatpush1.bf16.msra.mxu0 0
  %1742 = vmatprep.subr.bf16.mxu0 0
  %1743 = vmatpush1.bf16.msra.mxu0 0
  %1744 = vmatprep.subr.bf16.mxu0 0
  %1745 = vmatpush1.bf16.msra.mxu0 0
  %1746 = vmatprep.subr.bf16.mxu0 0
  %1747 = vmatpush1.bf16.msra.mxu0 0
  %1748 = vmatprep.subr.bf16.mxu0 0
  %1749 = vmatpush1.bf16.msra.mxu0 0
  %1750 = vmatprep.mubr.bf16.mxu0 0
  %1751 = vmatmul.mubr.bf16.gmra.mrb[0].mxu0 %v1716
  %v1752 = vpop.f32.mrb[0].mxu0
  %v1753 = vadd.f32 0.0, %v1752
  %v1754 = vpop.f32.mrb[0].mxu0
  %v1755 = vadd.f32 0.0, %v1754
  %v1756 = vpop.f32.mrb[0].mxu0
  %v1757 = vpop.f32.mrb[0].mxu0
  %1758 = vdwg.mxu0
  %s1759 = scalar_lea.vmem [#allocation2], 14
  %v1760 = vld [vmem:[%s1759] sm:$0x3]
  %v1761 = vadd.f32 %v1760, %v1753
  %v1762 = vld [vmem:[#allocation5] sm:$0x3]
  %v1763 = vtanh.pop %v1761
  %v1764 = vxor.u32 %v1761, 2147483648
  %v1765 = vmul.f32 %v1764, 1.442695
  %v1766 = vpow.pop %v1765
  %v1767 = vadd.f32 %v1766, 1.0
  %v1768 = vrcp.pop %v1767
  %v1769 = vmul.f32 1.0, %v1768
  %v1770 = vsel %vm549, %v1763, %v1769
  %1772 = vrot.lane.b32.xlu0 %v1762, 32
  %v1773 = vpop.permute.xlu0 %1772
  %v1775 = vmul.f32 %v1770, %v1773
  %1777 = vrot.lane.b32.xlu0 %v1770, 64
  %v1778 = vpop.permute.xlu0 %1777
  %v1780 = vmul.f32 %v1770, %v1778
  %1782 = vrot.lane.b32.xlu0 %v1780, 32
  %v1783 = vpop.permute.xlu0 %1782
  %v1785 = vadd.f32 %v1775, %v1783
  %v1786 = vtanh.pop %v1785
  %1788 = vrot.lane.b32.xlu0 %v1786, 64
  %v1789 = vpop.permute.xlu0 %1788
  %v1791 = vmul.f32 %v1770, %v1789
  %v1792 = vld [vmem:[#allocation3] sm:$0x3]
  %v1793 = vadd.f32 %v1792, %v1755
  %v1794 = vld [vmem:[#allocation6] sm:$0x3]
  %v1795 = vtanh.pop %v1793
  %v1796 = vxor.u32 %v1793, 2147483648
  %v1797 = vmul.f32 %v1796, 1.442695
  %v1798 = vpow.pop %v1797
  %v1799 = vadd.f32 %v1798, 1.0
  %v1800 = vrcp.pop %v1799
  %v1801 = vmul.f32 1.0, %v1800
  %v1802 = vsel %vm549, %v1795, %v1801
  %1804 = vrot.lane.b32.xlu0 %v1794, 32
  %v1805 = vpop.permute.xlu0 %1804
  %v1807 = vmul.f32 %v1802, %v1805
  %1809 = vrot.lane.b32.xlu0 %v1802, 64
  %v1810 = vpop.permute.xlu0 %1809
  %v1812 = vmul.f32 %v1802, %v1810
  %1814 = vrot.lane.b32.xlu0 %v1812, 32
  %v1815 = vpop.permute.xlu0 %1814
  %v1817 = vadd.f32 %v1807, %v1815
  %v1818 = vtanh.pop %v1817
  %1820 = vrot.lane.b32.xlu0 %v1818, 64
  %v1821 = vpop.permute.xlu0 %1820
  %v1823 = vmul.f32 %v1802, %v1821
  %1825 = vrot.lane.b32.xlu0 %v1785, 96
  %v1826 = vpop.permute.xlu0 %1825
  %1828 = vst.msk [vmem:[#allocation5] sm:$0x3] %vm609, %v1826
  %1830 = vrot.lane.b32.xlu0 %v1817, 96
  %v1831 = vpop.permute.xlu0 %1830
  %1833 = vst.msk [vmem:[#allocation6] sm:$0x3] %vm609, %v1831
  %1835 = vrot.lane.b32.xlu0 %v1791, 32
  %v1836 = vpop.permute.xlu0 %1835
  %1839 = vrot.lane.b32.xlu0 %v1823, 64
  %v1840 = vpop.permute.xlu0 %1839
  %v1842 = vsel %vm165, %v1836, %v1840
  %1843 = vst.msk [vmem:[#allocation4] sm:$0x3] %vm625, %v1842
  %v1844 = vpack.c.bf16 %v1791, %v1791
  %v1847 = vunpack.c.l.s4 1966171168
  %v1848 = vunpack.c.0.s8 %v1847
  %v1849 = vlaneseq
  %v1850 = vshrl.u32 %v1849, 7
  %v1851 = vsub.s32 %v1848, %v1850
  %v1852 = vrot.slane %v1844, %v1851
  %v1854 = vunpack.c.l.s4 1966171168
  %v1855 = vunpack.c.0.s8 %v1854
  %v1856 = vlaneseq
  %v1857 = vshrl.u32 %v1856, 7
  %v1858 = vsub.s32 %v1855, %v1857
  %v1859 = vrot.slane %v1852, %v1858
  %1860 = vrot.lane.b32.xlu0 %v1859, 32
  %v1861 = vpop.permute.xlu0 %1860
  %s1863 = scalar_lea.vmem %s7, 7
  %1864 = vst.msk [vmem:[%s1863] sm:$0x1] %vm646, %v1861
  %v1865 = vpack.c.bf16 %v1823, %v1823
  %v1868 = vunpack.c.l.s4 1966171168
  %v1869 = vunpack.c.0.s8 %v1868
  %v1870 = vlaneseq
  %v1871 = vshrl.u32 %v1870, 7
  %v1872 = vsub.s32 %v1869, %v1871
  %v1873 = vrot.slane %v1865, %v1872
  %v1875 = vunpack.c.l.s4 1966171168
  %v1876 = vunpack.c.0.s8 %v1875
  %v1877 = vlaneseq
  %v1878 = vshrl.u32 %v1877, 7
  %v1879 = vsub.s32 %v1876, %v1878
  %v1880 = vrot.slane %v1873, %v1879
  %1881 = vrot.lane.b32.xlu0 %v1880, 32
  %v1882 = vpop.permute.xlu0 %1881
  %1884 = vst.msk [vmem:[%s56] sm:$0x1] %vm646, %v1882
  %s1885 = ssub.s32 0, 0
  %s1886 = smul.u32 8, %s1885
  %p1887 = scmp.lt.s32.totalorder %s1886, 7
  %s1888 = scalar_select %p1887, %s1886, 7
  %s1889 = scalar_lea.vmem %s8, %s1888
  // Predicated region
  $region34: #{lstm_model_forward.2} parent=0 // pred_check
    _
  $region35: #{lstm_model_forward.2} parent=0 // pred_check_branch
    %1891 = sbr.rel (0) target = $region37
  $region36: #{lstm_model_forward.2} parent=0 // pred_region
    _
  $region37: #{lstm_model_forward.2} parent=0 // pred_fallthru
    _
  // Predicated region
  $region38: #{lstm_model_forward.2} parent=0 // pred_check
    _
  $region39: #{lstm_model_forward.2} parent=0 // pred_check_branch
    %1893 = sbr.rel (0) target = $region41
  $region40: #{lstm_model_forward.2} parent=0 // pred_region
    %s1894 = ssub.s32 0, 0
    %s1895 = smul.u32 8, %s1894
  $region41: #{lstm_model_forward.2} parent=0 // pred_fallthru
    _
  // Predicated region
  $region42: #{lstm_model_forward.2} parent=0 // pred_check
    _
  $region43: #{lstm_model_forward.2} parent=0 // pred_check_branch
    %1897 = sbr.rel (0) target = $region45
  $region44: #{lstm_model_forward.2} parent=0 // pred_region
    _
  $region45: #{lstm_model_forward.2} parent=0 // pred_fallthru
    _
  // Predicated region
  $region46: #{lstm_model_forward.2} parent=0 // pred_check
    _
  $region47: #{lstm_model_forward.2} parent=0 // pred_check_branch
    %1899 = sbr.rel (0) target = $region49
  $region48: #{lstm_model_forward.2} parent=0 // pred_region
    %s1900 = ssub.s32 0, 0
    %s1901 = smul.u32 8, %s1900
    %p1902 = scmp.lt.s32.totalorder %s1901, 7
    %s1903 = scalar_select %p1902, %s1901, 7
    %s1904 = scalar_lea.vmem %s8, %s1903
  $region49: #{lstm_model_forward.2} parent=0 // pred_fallthru
    _

</llo_original>
